<compile_context>
chip_gen: v7x
topology: tpu7x:2x2x1
jax: 0.10.0
libtpu: 0.0.40
codegen_flags: <defaults>
</compile_context>

<pallas_src>
import math

import jax
import jax.numpy as jnp
from jax.experimental import pallas as pl
from jax.experimental.pallas import tpu as pltpu

# ---- small, self-consistent config (config.hidden_size etc.) ----------------
B, S, H = 2, 8, 32          # batch, seq_len, hidden_size
NH = 4                      # num_attention_heads
DH = H // NH                # head dim
INTER = 64                  # intermediate_size
VOCAB = 100                 # vocab_size
NUM_LAYERS = 3              # need encoded_layers[2]
LN_EPS = 1e-12
BS = B * S
NB = NH * B                 # head-batched attention batch (n = h*B + b)
OUT_PAD = 128               # lane-dense classifier output width


# ---------------------------- in-kernel helpers ------------------------------
def _layer_norm(x, gamma, beta):
    mean = jnp.mean(x, axis=-1, keepdims=True)
    var = jnp.mean((x - mean) ** 2, axis=-1, keepdims=True)
    return (x - mean) * jax.lax.rsqrt(var + LN_EPS) * gamma + beta


def _gelu(x):
    # TODO(synk): exact BERT GELU uses erf; tanh approximation used here since
    # lax.erf has no guaranteed Mosaic lowering.
    c = math.sqrt(2.0 / math.pi)
    return 0.5 * x * (1.0 + jnp.tanh(c * (x + 0.044715 * x * x * x)))


def _softmax_last(x):
    m = jnp.max(x, axis=-1, keepdims=True)
    e = jnp.exp(x - m)
    # divide goes to the (otherwise idle) EUP slot
    return e * pl.reciprocal(jnp.sum(e, axis=-1, keepdims=True), approx=True)


def _bf16(x):
    return x.astype(jnp.bfloat16)


# ------------------------------- fused kernel --------------------------------
def fused_bert_kernel(emb_ref, mask_ref, eg_ref, eb_ref,
                      wqkv_ref, bqkv_ref, wo_ref, bo_ref, g1_ref, be1_ref,
                      wi_ref, bi_ref, w2_ref, b2_ref, g2_ref, be2_ref,
                      fw_ref, fb_ref, o_ref):
    scale = 1.0 / math.sqrt(DH)
    # mask already broadcast by the wrapper to the full (NB, S, S) score shape:
    # no per-layer / per-head broadcast_in_dim inside the loop.
    mask = mask_ref[...]

    # embedding LayerNorm (f32)
    x2 = _layer_norm(emb_ref[...], eg_ref[...], eb_ref[...])      # (BS, H)

    # Static unroll over layers: all weight slabs stay resident in VMEM.
    # TODO(synk): at real BERT sizes on v7x (64 MiB VMEM) switch to
    # grid=(NUM_LAYERS,) with (1,...) weight blocks so Pallas streams / double-
    # buffers per-layer weights, and add a "parallel" grid axis over row tiles
    # to use both TensorCores.
    for l in range(NUM_LAYERS):
        # ---- fused QKV projection: ONE (BS,H)@(H,3H) MXU pass (bf16 in, f32 acc)
        qkv = jnp.dot(_bf16(x2), wqkv_ref[l],
                      preferred_element_type=jnp.float32) + bqkv_ref[pl.ds(l, 1)]  # (BS,3H)

        # ---- head-major (NB, S, DH) Q/K/V (leading-axis concat, n = h*B + b)
        def to_heads(base):
            return jnp.concatenate(
                [qkv[:, base + hh * DH: base + (hh + 1) * DH].reshape(B, S, DH)
                 for hh in range(NH)], axis=0)                    # (NB, S, DH)
        qh = to_heads(0)
        kh = to_heads(H)
        vh = to_heads(2 * H)

        # ---- ONE head-batched score einsum + ONE context einsum per layer
        sc = jnp.einsum('nqd,nkd->nqk', _bf16(qh), _bf16(kh),
                        preferred_element_type=jnp.float32) * scale + mask  # (NB,S,S)
        p = _softmax_last(sc)                                      # f32
        ctx = jnp.einsum('nqk,nkd->nqd', _bf16(p), _bf16(vh),
                         preferred_element_type=jnp.float32)       # (NB,S,DH)

        # ---- reassemble heads into one (BS,H) slab; ONE output-projection matmul
        ctx_flat = jnp.concatenate(
            [ctx[hh * B:(hh + 1) * B].reshape(BS, DH) for hh in range(NH)],
            axis=-1)                                               # (BS, H)
        attn = jnp.dot(_bf16(ctx_flat), wo_ref[l],
                       preferred_element_type=jnp.float32) + bo_ref[pl.ds(l, 1)]
        h1 = _layer_norm(x2 + attn, g1_ref[pl.ds(l, 1)], be1_ref[pl.ds(l, 1)])

        # ---- FFN (bf16 matmul operands, f32 elementwise math)
        inter = _gelu(jnp.dot(_bf16(h1), wi_ref[l],
                              preferred_element_type=jnp.float32) + bi_ref[pl.ds(l, 1)])
        ffn = jnp.dot(_bf16(inter), w2_ref[l],
                      preferred_element_type=jnp.float32) + b2_ref[pl.ds(l, 1)]
        x2 = _layer_norm(h1 + ffn, g2_ref[pl.ds(l, 1)], be2_ref[pl.ds(l, 1)])

    # Classifier on the VPU: elementwise mul + lane reduce (no MXU pass).
    # Computed for every token row (trivially cheap); wrapper keeps first-token rows.
    logits = jnp.sum(x2 * fw_ref[...], axis=-1, keepdims=True) + fb_ref[...]  # (BS,1)
    pred = jax.nn.sigmoid(logits)
    # lane-dense output (unmasked stores): broadcast across 128 lanes
    o_ref[...] = jnp.broadcast_to(pred, (BS, OUT_PAD))


# --------------------------- pallas_call wrapper ------------------------------
def _vmem():
    return pl.BlockSpec(memory_space=pltpu.MemorySpace.VMEM)


@jax.jit
def bert_sentiment_forward(params, text_input, positional_enc):
    # embeddings gather (plain-JAX glue) + positional encoding, flattened to a
    # lane/sublane-friendly (B*S, H) 2-D slab.
    emb = params['word_embeddings'][text_input] + positional_enc          # (B,S,H)
    emb2 = emb.reshape(BS, H)

    # attention mask: padding token id 0 -> additive -10000 key bias, hoisted &
    # pre-broadcast once to the full head-batched (NB, S, S) score shape
    # (n = h*B + b) so the kernel never re-broadcasts it.
    keep = (text_input > 0).astype(jnp.float32)                           # (B,S)
    bias = ((1.0 - keep) * -10000.0)[:, None, :]                          # (B,1,S)
    mask_full = jnp.broadcast_to(bias[None, :, :, :], (NH, B, S, S)).reshape(NB, S, S)

    args = (emb2, mask_full,
            params['emb_ln_gamma'], params['emb_ln_beta'],
            params['wqkv'], params['bqkv'], params['wo'], params['bo'],
            params['ln1_g'], params['ln1_b'],
            params['wi'], params['bi'], params['w2'], params['b2'],
            params['ln2_g'], params['ln2_b'],
            params['final_w'], params['final_b'])

    out_padded = pl.pallas_call(
        fused_bert_kernel,
        out_shape=jax.ShapeDtypeStruct((BS, OUT_PAD), jnp.float32),
        in_specs=[_vmem()] * len(args),
        out_specs=_vmem(),
    )(*args)

    # sequence_output[:, 0] -> rows b*S of the flat layout; prediction in col 0
    return out_padded[::S, :1]                                            # (B,1)


# ------------------------------ model params ----------------------------------
def init_params(key):
    ks = iter(jax.random.split(key, 2 + NUM_LAYERS * 6))

    def dense(k, fan_in, fan_out):
        return jax.random.normal(k, (fan_in, fan_out), jnp.float32) * 0.02

    word_emb = jax.random.normal(next(ks), (VOCAB, H), jnp.float32) * 0.02
    word_emb = word_emb.at[0].set(0.0)          # nn.Embedding padding_idx=0

    # per-layer weights stacked along a leading layer axis (one slab per kind)
    wqkv = jnp.stack([jnp.concatenate([dense(next(ks), H, H),
                                       dense(next(ks), H, H),
                                       dense(next(ks), H, H)], axis=-1)
                      for _ in range(NUM_LAYERS)])                        # (L,H,3H)
    wo = jnp.stack([dense(next(ks), H, H) for _ in range(NUM_LAYERS)])    # (L,H,H)
    wi = jnp.stack([dense(next(ks), H, INTER) for _ in range(NUM_LAYERS)])
    w2 = jnp.stack([dense(next(ks), INTER, H) for _ in range(NUM_LAYERS)])

    bf16 = jnp.bfloat16
    params = {
        'word_embeddings': word_emb,
        'emb_ln_gamma': jnp.ones((1, H), jnp.float32),
        'emb_ln_beta': jnp.zeros((1, H), jnp.float32),
        # Matmul weight slabs stored in bf16 (MXU-native on v6e/v7x); the kernel
        # requests f32 accumulation via preferred_element_type.
        'wqkv': wqkv.astype(bf16),
        'bqkv': jnp.zeros((NUM_LAYERS, 3 * H), jnp.float32),
        'wo': wo.astype(bf16),
        'bo': jnp.zeros((NUM_LAYERS, H), jnp.float32),
        'ln1_g': jnp.ones((NUM_LAYERS, H), jnp.float32),
        'ln1_b': jnp.zeros((NUM_LAYERS, H), jnp.float32),
        'wi': wi.astype(bf16),
        'bi': jnp.zeros((NUM_LAYERS, INTER), jnp.float32),
        'w2': w2.astype(bf16),
        'b2': jnp.zeros((NUM_LAYERS, H), jnp.float32),
        'ln2_g': jnp.ones((NUM_LAYERS, H), jnp.float32),
        'ln2_b': jnp.zeros((NUM_LAYERS, H), jnp.float32),
        # final_dense: Linear(H, 1); stored as a (1,H) row vector for VPU reduce
        'final_w': dense(next(ks), H, 1).reshape(1, H),
        'final_b': jnp.zeros((1, 1), jnp.float32),
    }
    return params


def sinusoid_pos_enc(seq_len, dim):
    pos = jnp.arange(seq_len, dtype=jnp.float32)[:, None]
    div = jnp.exp(jnp.arange(0, dim, 2, dtype=jnp.float32) *
                  (-math.log(10000.0) / dim))
    pe = jnp.zeros((seq_len, dim), jnp.float32)
    pe = pe.at[:, 0::2].set(jnp.sin(pos * div))
    pe = pe.at[:, 1::2].set(jnp.cos(pos * div))
    return pe


# ----------------------------------- main -------------------------------------
if __name__ == "__main__":
    key = jax.random.PRNGKey(0)
    pkey, dkey = jax.random.split(key)

    params = init_params(pkey)

    text_input = jax.random.randint(dkey, (B, S), 1, VOCAB, dtype=jnp.int32)
    text_input = text_input.at[:, -1].set(0)       # a padding token per sequence
    positional_enc = jnp.broadcast_to(sinusoid_pos_enc(S, H), (B, S, H))

    preds = bert_sentiment_forward(params, text_input, positional_enc)
    preds = jax.block_until_ready(preds)

    assert preds.shape == (B, 1)
    assert bool(jnp.all((preds > 0.0) & (preds < 1.0)))
    print("KERNEL_OK")
</pallas_src>

<mosaic_0001>
module attributes {stable_mosaic.version = 11 : i64} {
  func.func @fused_bert_kernel(%arg0: memref<16x32xf32, #tpu.memory_space<vmem>>, %arg1: memref<8x8x8xf32, #tpu.memory_space<vmem>>, %arg2: memref<1x32xf32, #tpu.memory_space<vmem>>, %arg3: memref<1x32xf32, #tpu.memory_space<vmem>>, %arg4: memref<3x32x96xbf16, #tpu.memory_space<vmem>>, %arg5: memref<3x96xf32, #tpu.memory_space<vmem>>, %arg6: memref<3x32x32xbf16, #tpu.memory_space<vmem>>, %arg7: memref<3x32xf32, #tpu.memory_space<vmem>>, %arg8: memref<3x32xf32, #tpu.memory_space<vmem>>, %arg9: memref<3x32xf32, #tpu.memory_space<vmem>>, %arg10: memref<3x32x64xbf16, #tpu.memory_space<vmem>>, %arg11: memref<3x64xf32, #tpu.memory_space<vmem>>, %arg12: memref<3x64x32xbf16, #tpu.memory_space<vmem>>, %arg13: memref<3x32xf32, #tpu.memory_space<vmem>>, %arg14: memref<3x32xf32, #tpu.memory_space<vmem>>, %arg15: memref<3x32xf32, #tpu.memory_space<vmem>>, %arg16: memref<1x32xf32, #tpu.memory_space<vmem>>, %arg17: memref<1x1xf32, #tpu.memory_space<vmem>>, %arg18: memref<16x128xf32, #tpu.memory_space<vmem>>) attributes {dimension_semantics = [], scalar_prefetch = 0 : i64, scratch_operands = 0 : i64, tpu.core_type = #tpu.core_type<tc>} {
    %c0 = arith.constant 0 : index
    %c0_0 = arith.constant 0 : index
    %c0_1 = arith.constant 0 : index
    %0 = vector.load %arg1[%c0, %c0_0, %c0_1] : memref<8x8x8xf32, #tpu.memory_space<vmem>>, vector<8x8x8xf32>
    %c0_2 = arith.constant 0 : index
    %c0_3 = arith.constant 0 : index
    %1 = vector.load %arg0[%c0_2, %c0_3] : memref<16x32xf32, #tpu.memory_space<vmem>>, vector<16x32xf32>
    %c0_4 = arith.constant 0 : index
    %c0_5 = arith.constant 0 : index
    %2 = vector.load %arg2[%c0_4, %c0_5] : memref<1x32xf32, #tpu.memory_space<vmem>>, vector<1x32xf32>
    %c0_6 = arith.constant 0 : index
    %c0_7 = arith.constant 0 : index
    %3 = vector.load %arg3[%c0_6, %c0_7] : memref<1x32xf32, #tpu.memory_space<vmem>>, vector<1x32xf32>
    %cst = arith.constant dense<0.000000e+00> : vector<16xf32>
    %4 = vector.multi_reduction <add>, %1, %cst [1] : vector<16x32xf32> to vector<16xf32>
    %5 = vector.shape_cast %4 : vector<16xf32> to vector<16x1xf32>
    %cst_8 = arith.constant 3.200000e+01 : f32
    %6 = vector.broadcast %cst_8 : f32 to vector<16x1xf32>
    %7 = arith.divf %5, %6 : vector<16x1xf32>
    %8 = vector.broadcast %7 : vector<16x1xf32> to vector<16x32xf32>
    %9 = arith.subf %1, %8 : vector<16x32xf32>
    %10 = arith.mulf %9, %9 : vector<16x32xf32>
    %cst_9 = arith.constant dense<0.000000e+00> : vector<16xf32>
    %11 = vector.multi_reduction <add>, %10, %cst_9 [1] : vector<16x32xf32> to vector<16xf32>
    %12 = vector.shape_cast %11 : vector<16xf32> to vector<16x1xf32>
    %cst_10 = arith.constant 3.200000e+01 : f32
    %13 = vector.broadcast %cst_10 : f32 to vector<16x1xf32>
    %14 = arith.divf %12, %13 : vector<16x1xf32>
    %15 = vector.broadcast %7 : vector<16x1xf32> to vector<16x32xf32>
    %16 = arith.subf %1, %15 : vector<16x32xf32>
    %cst_11 = arith.constant 9.99999996E-13 : f32
    %17 = vector.broadcast %cst_11 : f32 to vector<16x1xf32>
    %18 = arith.addf %14, %17 : vector<16x1xf32>
    %19 = math.rsqrt %18 : vector<16x1xf32>
    %20 = vector.broadcast %19 : vector<16x1xf32> to vector<16x32xf32>
    %21 = arith.mulf %16, %20 : vector<16x32xf32>
    %22 = vector.broadcast %2 : vector<1x32xf32> to vector<16x32xf32>
    %23 = arith.mulf %21, %22 : vector<16x32xf32>
    %24 = vector.broadcast %3 : vector<1x32xf32> to vector<16x32xf32>
    %25 = arith.addf %23, %24 : vector<16x32xf32>
    %26 = arith.truncf %25 : vector<16x32xf32> to vector<16x32xbf16>
    %c0_12 = arith.constant 0 : index
    %c0_13 = arith.constant 0 : index
    %c0_14 = arith.constant 0 : index
    %27 = vector.load %arg4[%c0_12, %c0_13, %c0_14] : memref<3x32x96xbf16, #tpu.memory_space<vmem>>, vector<1x32x96xbf16>
    %28 = vector.shape_cast %27 : vector<1x32x96xbf16> to vector<32x96xbf16>
    %cst_15 = arith.constant dense<0.000000e+00> : vector<16x96xf32>
    %29 = tpu.matmul %26, %28, %cst_15 {dimension_numbers = #tpu.dot_dimension_numbers<[1], [0], [0], [1], [0, 0, 1, 1], [], []>} : vector<16x32xbf16>, vector<32x96xbf16>, vector<16x96xf32> -> vector<16x96xf32>
    %c0_16 = arith.constant 0 : index
    %c0_17 = arith.constant 0 : index
    %30 = vector.load %arg5[%c0_16, %c0_17] : memref<3x96xf32, #tpu.memory_space<vmem>>, vector<1x96xf32>
    %31 = vector.broadcast %30 : vector<1x96xf32> to vector<16x96xf32>
    %32 = arith.addf %29, %31 : vector<16x96xf32>
    %33 = vector.extract_strided_slice %32 {offsets = [0, 0], sizes = [16, 8], strides = [1, 1]} : vector<16x96xf32> to vector<16x8xf32>
    %34 = vector.shape_cast %33 : vector<16x8xf32> to vector<2x8x8xf32>
    %35 = vector.extract_strided_slice %32 {offsets = [0, 8], sizes = [16, 8], strides = [1, 1]} : vector<16x96xf32> to vector<16x8xf32>
    %36 = vector.shape_cast %35 : vector<16x8xf32> to vector<2x8x8xf32>
    %37 = vector.extract_strided_slice %32 {offsets = [0, 16], sizes = [16, 8], strides = [1, 1]} : vector<16x96xf32> to vector<16x8xf32>
    %38 = vector.shape_cast %37 : vector<16x8xf32> to vector<2x8x8xf32>
    %39 = vector.extract_strided_slice %32 {offsets = [0, 24], sizes = [16, 8], strides = [1, 1]} : vector<16x96xf32> to vector<16x8xf32>
    %40 = vector.shape_cast %39 : vector<16x8xf32> to vector<2x8x8xf32>
    %41 = tpu.concatenate %34, %36, %38, %40 in 0 : vector<2x8x8xf32>, vector<2x8x8xf32>, vector<2x8x8xf32>, vector<2x8x8xf32> -> vector<8x8x8xf32>
    %42 = vector.extract_strided_slice %32 {offsets = [0, 32], sizes = [16, 8], strides = [1, 1]} : vector<16x96xf32> to vector<16x8xf32>
    %43 = vector.shape_cast %42 : vector<16x8xf32> to vector<2x8x8xf32>
    %44 = vector.extract_strided_slice %32 {offsets = [0, 40], sizes = [16, 8], strides = [1, 1]} : vector<16x96xf32> to vector<16x8xf32>
    %45 = vector.shape_cast %44 : vector<16x8xf32> to vector<2x8x8xf32>
    %46 = vector.extract_strided_slice %32 {offsets = [0, 48], sizes = [16, 8], strides = [1, 1]} : vector<16x96xf32> to vector<16x8xf32>
    %47 = vector.shape_cast %46 : vector<16x8xf32> to vector<2x8x8xf32>
    %48 = vector.extract_strided_slice %32 {offsets = [0, 56], sizes = [16, 8], strides = [1, 1]} : vector<16x96xf32> to vector<16x8xf32>
    %49 = vector.shape_cast %48 : vector<16x8xf32> to vector<2x8x8xf32>
    %50 = tpu.concatenate %43, %45, %47, %49 in 0 : vector<2x8x8xf32>, vector<2x8x8xf32>, vector<2x8x8xf32>, vector<2x8x8xf32> -> vector<8x8x8xf32>
    %51 = vector.extract_strided_slice %32 {offsets = [0, 64], sizes = [16, 8], strides = [1, 1]} : vector<16x96xf32> to vector<16x8xf32>
    %52 = vector.shape_cast %51 : vector<16x8xf32> to vector<2x8x8xf32>
    %53 = vector.extract_strided_slice %32 {offsets = [0, 72], sizes = [16, 8], strides = [1, 1]} : vector<16x96xf32> to vector<16x8xf32>
    %54 = vector.shape_cast %53 : vector<16x8xf32> to vector<2x8x8xf32>
    %55 = vector.extract_strided_slice %32 {offsets = [0, 80], sizes = [16, 8], strides = [1, 1]} : vector<16x96xf32> to vector<16x8xf32>
    %56 = vector.shape_cast %55 : vector<16x8xf32> to vector<2x8x8xf32>
    %57 = vector.extract_strided_slice %32 {offsets = [0, 88], sizes = [16, 8], strides = [1, 1]} : vector<16x96xf32> to vector<16x8xf32>
    %58 = vector.shape_cast %57 : vector<16x8xf32> to vector<2x8x8xf32>
    %59 = tpu.concatenate %52, %54, %56, %58 in 0 : vector<2x8x8xf32>, vector<2x8x8xf32>, vector<2x8x8xf32>, vector<2x8x8xf32> -> vector<8x8x8xf32>
    %60 = arith.truncf %41 : vector<8x8x8xf32> to vector<8x8x8xbf16>
    %61 = arith.truncf %50 : vector<8x8x8xf32> to vector<8x8x8xbf16>
    "tpu.trace_start"() <{level = 10 : i32, message = "nqd,nkd->nqk"}> : () -> ()
    %cst_18 = arith.constant dense<0.000000e+00> : vector<8x8x8xf32>
    %62 = tpu.matmul %60, %61, %cst_18 {dimension_numbers = #tpu.dot_dimension_numbers<[2], [2], [1], [1], [0, 0, 0, 1, 1, 1], [0], [0]>} : vector<8x8x8xbf16>, vector<8x8x8xbf16>, vector<8x8x8xf32> -> vector<8x8x8xf32>
    "tpu.trace_stop"() : () -> ()
    %cst_19 = arith.constant 0.353553385 : f32
    %63 = vector.broadcast %cst_19 : f32 to vector<8x8x8xf32>
    %64 = arith.mulf %62, %63 : vector<8x8x8xf32>
    %65 = arith.addf %64, %0 : vector<8x8x8xf32>
    %cst_20 = arith.constant dense<0xFF800000> : vector<8x8xf32>
    %66 = vector.multi_reduction <maximumf>, %65, %cst_20 [2] : vector<8x8x8xf32> to vector<8x8xf32>
    %67 = vector.shape_cast %66 : vector<8x8xf32> to vector<8x8x1xf32>
    %68 = vector.broadcast %67 : vector<8x8x1xf32> to vector<8x8x8xf32>
    %69 = arith.subf %65, %68 : vector<8x8x8xf32>
    %70 = math.exp %69 : vector<8x8x8xf32>
    %cst_21 = arith.constant dense<0.000000e+00> : vector<8x8xf32>
    %71 = vector.multi_reduction <add>, %70, %cst_21 [2] : vector<8x8x8xf32> to vector<8x8xf32>
    %72 = vector.shape_cast %71 : vector<8x8xf32> to vector<8x8x1xf32>
    %73 = tpu.reciprocal %72 {approx = true} : vector<8x8x1xf32> -> vector<8x8x1xf32>
    %74 = vector.broadcast %73 : vector<8x8x1xf32> to vector<8x8x8xf32>
    %75 = arith.mulf %70, %74 : vector<8x8x8xf32>
    %76 = arith.truncf %75 : vector<8x8x8xf32> to vector<8x8x8xbf16>
    %77 = arith.truncf %59 : vector<8x8x8xf32> to vector<8x8x8xbf16>
    "tpu.trace_start"() <{level = 10 : i32, message = "nqk,nkd->nqd"}> : () -> ()
    %cst_22 = arith.constant dense<0.000000e+00> : vector<8x8x8xf32>
    %78 = tpu.matmul %76, %77, %cst_22 {dimension_numbers = #tpu.dot_dimension_numbers<[2], [1], [1], [2], [0, 0, 0, 1, 1, 2], [0], [0]>} : vector<8x8x8xbf16>, vector<8x8x8xbf16>, vector<8x8x8xf32> -> vector<8x8x8xf32>
    "tpu.trace_stop"() : () -> ()
    %79 = vector.extract_strided_slice %78 {offsets = [0, 0, 0], sizes = [2, 8, 8], strides = [1, 1, 1]} : vector<8x8x8xf32> to vector<2x8x8xf32>
    %80 = vector.shape_cast %79 : vector<2x8x8xf32> to vector<16x8xf32>
    %81 = vector.extract_strided_slice %78 {offsets = [2, 0, 0], sizes = [2, 8, 8], strides = [1, 1, 1]} : vector<8x8x8xf32> to vector<2x8x8xf32>
    %82 = vector.shape_cast %81 : vector<2x8x8xf32> to vector<16x8xf32>
    %83 = vector.extract_strided_slice %78 {offsets = [4, 0, 0], sizes = [2, 8, 8], strides = [1, 1, 1]} : vector<8x8x8xf32> to vector<2x8x8xf32>
    %84 = vector.shape_cast %83 : vector<2x8x8xf32> to vector<16x8xf32>
    %85 = vector.extract_strided_slice %78 {offsets = [6, 0, 0], sizes = [2, 8, 8], strides = [1, 1, 1]} : vector<8x8x8xf32> to vector<2x8x8xf32>
    %86 = vector.shape_cast %85 : vector<2x8x8xf32> to vector<16x8xf32>
    %87 = tpu.concatenate %80, %82, %84, %86 in 1 : vector<16x8xf32>, vector<16x8xf32>, vector<16x8xf32>, vector<16x8xf32> -> vector<16x32xf32>
    %88 = arith.truncf %87 : vector<16x32xf32> to vector<16x32xbf16>
    %c0_23 = arith.constant 0 : index
    %c0_24 = arith.constant 0 : index
    %c0_25 = arith.constant 0 : index
    %89 = vector.load %arg6[%c0_23, %c0_24, %c0_25] : memref<3x32x32xbf16, #tpu.memory_space<vmem>>, vector<1x32x32xbf16>
    %90 = vector.shape_cast %89 : vector<1x32x32xbf16> to vector<32x32xbf16>
    %cst_26 = arith.constant dense<0.000000e+00> : vector<16x32xf32>
    %91 = tpu.matmul %88, %90, %cst_26 {dimension_numbers = #tpu.dot_dimension_numbers<[1], [0], [0], [1], [0, 0, 1, 1], [], []>} : vector<16x32xbf16>, vector<32x32xbf16>, vector<16x32xf32> -> vector<16x32xf32>
    %c0_27 = arith.constant 0 : index
    %c0_28 = arith.constant 0 : index
    %92 = vector.load %arg7[%c0_27, %c0_28] : memref<3x32xf32, #tpu.memory_space<vmem>>, vector<1x32xf32>
    %93 = vector.broadcast %92 : vector<1x32xf32> to vector<16x32xf32>
    %94 = arith.addf %91, %93 : vector<16x32xf32>
    %95 = arith.addf %25, %94 : vector<16x32xf32>
    %c0_29 = arith.constant 0 : index
    %c0_30 = arith.constant 0 : index
    %96 = vector.load %arg8[%c0_29, %c0_30] : memref<3x32xf32, #tpu.memory_space<vmem>>, vector<1x32xf32>
    %c0_31 = arith.constant 0 : index
    %c0_32 = arith.constant 0 : index
    %97 = vector.load %arg9[%c0_31, %c0_32] : memref<3x32xf32, #tpu.memory_space<vmem>>, vector<1x32xf32>
    %cst_33 = arith.constant dense<0.000000e+00> : vector<16xf32>
    %98 = vector.multi_reduction <add>, %95, %cst_33 [1] : vector<16x32xf32> to vector<16xf32>
    %99 = vector.shape_cast %98 : vector<16xf32> to vector<16x1xf32>
    %cst_34 = arith.constant 3.200000e+01 : f32
    %100 = vector.broadcast %cst_34 : f32 to vector<16x1xf32>
    %101 = arith.divf %99, %100 : vector<16x1xf32>
    %102 = vector.broadcast %101 : vector<16x1xf32> to vector<16x32xf32>
    %103 = arith.subf %95, %102 : vector<16x32xf32>
    %104 = arith.mulf %103, %103 : vector<16x32xf32>
    %cst_35 = arith.constant dense<0.000000e+00> : vector<16xf32>
    %105 = vector.multi_reduction <add>, %104, %cst_35 [1] : vector<16x32xf32> to vector<16xf32>
    %106 = vector.shape_cast %105 : vector<16xf32> to vector<16x1xf32>
    %cst_36 = arith.constant 3.200000e+01 : f32
    %107 = vector.broadcast %cst_36 : f32 to vector<16x1xf32>
    %108 = arith.divf %106, %107 : vector<16x1xf32>
    %109 = vector.broadcast %101 : vector<16x1xf32> to vector<16x32xf32>
    %110 = arith.subf %95, %109 : vector<16x32xf32>
    %cst_37 = arith.constant 9.99999996E-13 : f32
    %111 = vector.broadcast %cst_37 : f32 to vector<16x1xf32>
    %112 = arith.addf %108, %111 : vector<16x1xf32>
    %113 = math.rsqrt %112 : vector<16x1xf32>
    %114 = vector.broadcast %113 : vector<16x1xf32> to vector<16x32xf32>
    %115 = arith.mulf %110, %114 : vector<16x32xf32>
    %116 = vector.broadcast %96 : vector<1x32xf32> to vector<16x32xf32>
    %117 = arith.mulf %115, %116 : vector<16x32xf32>
    %118 = vector.broadcast %97 : vector<1x32xf32> to vector<16x32xf32>
    %119 = arith.addf %117, %118 : vector<16x32xf32>
    %120 = arith.truncf %119 : vector<16x32xf32> to vector<16x32xbf16>
    %c0_38 = arith.constant 0 : index
    %c0_39 = arith.constant 0 : index
    %c0_40 = arith.constant 0 : index
    %121 = vector.load %arg10[%c0_38, %c0_39, %c0_40] : memref<3x32x64xbf16, #tpu.memory_space<vmem>>, vector<1x32x64xbf16>
    %122 = vector.shape_cast %121 : vector<1x32x64xbf16> to vector<32x64xbf16>
    %cst_41 = arith.constant dense<0.000000e+00> : vector<16x64xf32>
    %123 = tpu.matmul %120, %122, %cst_41 {dimension_numbers = #tpu.dot_dimension_numbers<[1], [0], [0], [1], [0, 0, 1, 1], [], []>} : vector<16x32xbf16>, vector<32x64xbf16>, vector<16x64xf32> -> vector<16x64xf32>
    %c0_42 = arith.constant 0 : index
    %c0_43 = arith.constant 0 : index
    %124 = vector.load %arg11[%c0_42, %c0_43] : memref<3x64xf32, #tpu.memory_space<vmem>>, vector<1x64xf32>
    %125 = vector.broadcast %124 : vector<1x64xf32> to vector<16x64xf32>
    %126 = arith.addf %123, %125 : vector<16x64xf32>
    %cst_44 = arith.constant 5.000000e-01 : f32
    %127 = vector.broadcast %cst_44 : f32 to vector<16x64xf32>
    %128 = arith.mulf %127, %126 : vector<16x64xf32>
    %cst_45 = arith.constant 4.471500e-02 : f32
    %129 = vector.broadcast %cst_45 : f32 to vector<16x64xf32>
    %130 = arith.mulf %129, %126 : vector<16x64xf32>
    %131 = arith.mulf %130, %126 : vector<16x64xf32>
    %132 = arith.mulf %131, %126 : vector<16x64xf32>
    %133 = arith.addf %126, %132 : vector<16x64xf32>
    %cst_46 = arith.constant 0.797884583 : f32
    %134 = vector.broadcast %cst_46 : f32 to vector<16x64xf32>
    %135 = arith.mulf %134, %133 : vector<16x64xf32>
    %136 = math.tanh %135 : vector<16x64xf32>
    %cst_47 = arith.constant 1.000000e+00 : f32
    %137 = vector.broadcast %cst_47 : f32 to vector<16x64xf32>
    %138 = arith.addf %137, %136 : vector<16x64xf32>
    %139 = arith.mulf %128, %138 : vector<16x64xf32>
    %140 = arith.truncf %139 : vector<16x64xf32> to vector<16x64xbf16>
    %c0_48 = arith.constant 0 : index
    %c0_49 = arith.constant 0 : index
    %c0_50 = arith.constant 0 : index
    %141 = vector.load %arg12[%c0_48, %c0_49, %c0_50] : memref<3x64x32xbf16, #tpu.memory_space<vmem>>, vector<1x64x32xbf16>
    %142 = vector.shape_cast %141 : vector<1x64x32xbf16> to vector<64x32xbf16>
    %cst_51 = arith.constant dense<0.000000e+00> : vector<16x32xf32>
    %143 = tpu.matmul %140, %142, %cst_51 {dimension_numbers = #tpu.dot_dimension_numbers<[1], [0], [0], [1], [0, 0, 1, 1], [], []>} : vector<16x64xbf16>, vector<64x32xbf16>, vector<16x32xf32> -> vector<16x32xf32>
    %c0_52 = arith.constant 0 : index
    %c0_53 = arith.constant 0 : index
    %144 = vector.load %arg13[%c0_52, %c0_53] : memref<3x32xf32, #tpu.memory_space<vmem>>, vector<1x32xf32>
    %145 = vector.broadcast %144 : vector<1x32xf32> to vector<16x32xf32>
    %146 = arith.addf %143, %145 : vector<16x32xf32>
    %147 = arith.addf %119, %146 : vector<16x32xf32>
    %c0_54 = arith.constant 0 : index
    %c0_55 = arith.constant 0 : index
    %148 = vector.load %arg14[%c0_54, %c0_55] : memref<3x32xf32, #tpu.memory_space<vmem>>, vector<1x32xf32>
    %c0_56 = arith.constant 0 : index
    %c0_57 = arith.constant 0 : index
    %149 = vector.load %arg15[%c0_56, %c0_57] : memref<3x32xf32, #tpu.memory_space<vmem>>, vector<1x32xf32>
    %cst_58 = arith.constant dense<0.000000e+00> : vector<16xf32>
    %150 = vector.multi_reduction <add>, %147, %cst_58 [1] : vector<16x32xf32> to vector<16xf32>
    %151 = vector.shape_cast %150 : vector<16xf32> to vector<16x1xf32>
    %cst_59 = arith.constant 3.200000e+01 : f32
    %152 = vector.broadcast %cst_59 : f32 to vector<16x1xf32>
    %153 = arith.divf %151, %152 : vector<16x1xf32>
    %154 = vector.broadcast %153 : vector<16x1xf32> to vector<16x32xf32>
    %155 = arith.subf %147, %154 : vector<16x32xf32>
    %156 = arith.mulf %155, %155 : vector<16x32xf32>
    %cst_60 = arith.constant dense<0.000000e+00> : vector<16xf32>
    %157 = vector.multi_reduction <add>, %156, %cst_60 [1] : vector<16x32xf32> to vector<16xf32>
    %158 = vector.shape_cast %157 : vector<16xf32> to vector<16x1xf32>
    %cst_61 = arith.constant 3.200000e+01 : f32
    %159 = vector.broadcast %cst_61 : f32 to vector<16x1xf32>
    %160 = arith.divf %158, %159 : vector<16x1xf32>
    %161 = vector.broadcast %153 : vector<16x1xf32> to vector<16x32xf32>
    %162 = arith.subf %147, %161 : vector<16x32xf32>
    %cst_62 = arith.constant 9.99999996E-13 : f32
    %163 = vector.broadcast %cst_62 : f32 to vector<16x1xf32>
    %164 = arith.addf %160, %163 : vector<16x1xf32>
    %165 = math.rsqrt %164 : vector<16x1xf32>
    %166 = vector.broadcast %165 : vector<16x1xf32> to vector<16x32xf32>
    %167 = arith.mulf %162, %166 : vector<16x32xf32>
    %168 = vector.broadcast %148 : vector<1x32xf32> to vector<16x32xf32>
    %169 = arith.mulf %167, %168 : vector<16x32xf32>
    %170 = vector.broadcast %149 : vector<1x32xf32> to vector<16x32xf32>
    %171 = arith.addf %169, %170 : vector<16x32xf32>
    %172 = arith.truncf %171 : vector<16x32xf32> to vector<16x32xbf16>
    %c1 = arith.constant 1 : index
    %c0_63 = arith.constant 0 : index
    %c0_64 = arith.constant 0 : index
    %173 = vector.load %arg4[%c1, %c0_63, %c0_64] : memref<3x32x96xbf16, #tpu.memory_space<vmem>>, vector<1x32x96xbf16>
    %174 = vector.shape_cast %173 : vector<1x32x96xbf16> to vector<32x96xbf16>
    %cst_65 = arith.constant dense<0.000000e+00> : vector<16x96xf32>
    %175 = tpu.matmul %172, %174, %cst_65 {dimension_numbers = #tpu.dot_dimension_numbers<[1], [0], [0], [1], [0, 0, 1, 1], [], []>} : vector<16x32xbf16>, vector<32x96xbf16>, vector<16x96xf32> -> vector<16x96xf32>
    %c1_66 = arith.constant 1 : index
    %c0_67 = arith.constant 0 : index
    %176 = vector.load %arg5[%c1_66, %c0_67] : memref<3x96xf32, #tpu.memory_space<vmem>>, vector<1x96xf32>
    %177 = vector.broadcast %176 : vector<1x96xf32> to vector<16x96xf32>
    %178 = arith.addf %175, %177 : vector<16x96xf32>
    %179 = vector.extract_strided_slice %178 {offsets = [0, 0], sizes = [16, 8], strides = [1, 1]} : vector<16x96xf32> to vector<16x8xf32>
    %180 = vector.shape_cast %179 : vector<16x8xf32> to vector<2x8x8xf32>
    %181 = vector.extract_strided_slice %178 {offsets = [0, 8], sizes = [16, 8], strides = [1, 1]} : vector<16x96xf32> to vector<16x8xf32>
    %182 = vector.shape_cast %181 : vector<16x8xf32> to vector<2x8x8xf32>
    %183 = vector.extract_strided_slice %178 {offsets = [0, 16], sizes = [16, 8], strides = [1, 1]} : vector<16x96xf32> to vector<16x8xf32>
    %184 = vector.shape_cast %183 : vector<16x8xf32> to vector<2x8x8xf32>
    %185 = vector.extract_strided_slice %178 {offsets = [0, 24], sizes = [16, 8], strides = [1, 1]} : vector<16x96xf32> to vector<16x8xf32>
    %186 = vector.shape_cast %185 : vector<16x8xf32> to vector<2x8x8xf32>
    %187 = tpu.concatenate %180, %182, %184, %186 in 0 : vector<2x8x8xf32>, vector<2x8x8xf32>, vector<2x8x8xf32>, vector<2x8x8xf32> -> vector<8x8x8xf32>
    %188 = vector.extract_strided_slice %178 {offsets = [0, 32], sizes = [16, 8], strides = [1, 1]} : vector<16x96xf32> to vector<16x8xf32>
    %189 = vector.shape_cast %188 : vector<16x8xf32> to vector<2x8x8xf32>
    %190 = vector.extract_strided_slice %178 {offsets = [0, 40], sizes = [16, 8], strides = [1, 1]} : vector<16x96xf32> to vector<16x8xf32>
    %191 = vector.shape_cast %190 : vector<16x8xf32> to vector<2x8x8xf32>
    %192 = vector.extract_strided_slice %178 {offsets = [0, 48], sizes = [16, 8], strides = [1, 1]} : vector<16x96xf32> to vector<16x8xf32>
    %193 = vector.shape_cast %192 : vector<16x8xf32> to vector<2x8x8xf32>
    %194 = vector.extract_strided_slice %178 {offsets = [0, 56], sizes = [16, 8], strides = [1, 1]} : vector<16x96xf32> to vector<16x8xf32>
    %195 = vector.shape_cast %194 : vector<16x8xf32> to vector<2x8x8xf32>
    %196 = tpu.concatenate %189, %191, %193, %195 in 0 : vector<2x8x8xf32>, vector<2x8x8xf32>, vector<2x8x8xf32>, vector<2x8x8xf32> -> vector<8x8x8xf32>
    %197 = vector.extract_strided_slice %178 {offsets = [0, 64], sizes = [16, 8], strides = [1, 1]} : vector<16x96xf32> to vector<16x8xf32>
    %198 = vector.shape_cast %197 : vector<16x8xf32> to vector<2x8x8xf32>
    %199 = vector.extract_strided_slice %178 {offsets = [0, 72], sizes = [16, 8], strides = [1, 1]} : vector<16x96xf32> to vector<16x8xf32>
    %200 = vector.shape_cast %199 : vector<16x8xf32> to vector<2x8x8xf32>
    %201 = vector.extract_strided_slice %178 {offsets = [0, 80], sizes = [16, 8], strides = [1, 1]} : vector<16x96xf32> to vector<16x8xf32>
    %202 = vector.shape_cast %201 : vector<16x8xf32> to vector<2x8x8xf32>
    %203 = vector.extract_strided_slice %178 {offsets = [0, 88], sizes = [16, 8], strides = [1, 1]} : vector<16x96xf32> to vector<16x8xf32>
    %204 = vector.shape_cast %203 : vector<16x8xf32> to vector<2x8x8xf32>
    %205 = tpu.concatenate %198, %200, %202, %204 in 0 : vector<2x8x8xf32>, vector<2x8x8xf32>, vector<2x8x8xf32>, vector<2x8x8xf32> -> vector<8x8x8xf32>
    %206 = arith.truncf %187 : vector<8x8x8xf32> to vector<8x8x8xbf16>
    %207 = arith.truncf %196 : vector<8x8x8xf32> to vector<8x8x8xbf16>
    "tpu.trace_start"() <{level = 10 : i32, message = "nqd,nkd->nqk"}> : () -> ()
    %cst_68 = arith.constant dense<0.000000e+00> : vector<8x8x8xf32>
    %208 = tpu.matmul %206, %207, %cst_68 {dimension_numbers = #tpu.dot_dimension_numbers<[2], [2], [1], [1], [0, 0, 0, 1, 1, 1], [0], [0]>} : vector<8x8x8xbf16>, vector<8x8x8xbf16>, vector<8x8x8xf32> -> vector<8x8x8xf32>
    "tpu.trace_stop"() : () -> ()
    %cst_69 = arith.constant 0.353553385 : f32
    %209 = vector.broadcast %cst_69 : f32 to vector<8x8x8xf32>
    %210 = arith.mulf %208, %209 : vector<8x8x8xf32>
    %211 = arith.addf %210, %0 : vector<8x8x8xf32>
    %cst_70 = arith.constant dense<0xFF800000> : vector<8x8xf32>
    %212 = vector.multi_reduction <maximumf>, %211, %cst_70 [2] : vector<8x8x8xf32> to vector<8x8xf32>
    %213 = vector.shape_cast %212 : vector<8x8xf32> to vector<8x8x1xf32>
    %214 = vector.broadcast %213 : vector<8x8x1xf32> to vector<8x8x8xf32>
    %215 = arith.subf %211, %214 : vector<8x8x8xf32>
    %216 = math.exp %215 : vector<8x8x8xf32>
    %cst_71 = arith.constant dense<0.000000e+00> : vector<8x8xf32>
    %217 = vector.multi_reduction <add>, %216, %cst_71 [2] : vector<8x8x8xf32> to vector<8x8xf32>
    %218 = vector.shape_cast %217 : vector<8x8xf32> to vector<8x8x1xf32>
    %219 = tpu.reciprocal %218 {approx = true} : vector<8x8x1xf32> -> vector<8x8x1xf32>
    %220 = vector.broadcast %219 : vector<8x8x1xf32> to vector<8x8x8xf32>
    %221 = arith.mulf %216, %220 : vector<8x8x8xf32>
    %222 = arith.truncf %221 : vector<8x8x8xf32> to vector<8x8x8xbf16>
    %223 = arith.truncf %205 : vector<8x8x8xf32> to vector<8x8x8xbf16>
    "tpu.trace_start"() <{level = 10 : i32, message = "nqk,nkd->nqd"}> : () -> ()
    %cst_72 = arith.constant dense<0.000000e+00> : vector<8x8x8xf32>
    %224 = tpu.matmul %222, %223, %cst_72 {dimension_numbers = #tpu.dot_dimension_numbers<[2], [1], [1], [2], [0, 0, 0, 1, 1, 2], [0], [0]>} : vector<8x8x8xbf16>, vector<8x8x8xbf16>, vector<8x8x8xf32> -> vector<8x8x8xf32>
    "tpu.trace_stop"() : () -> ()
    %225 = vector.extract_strided_slice %224 {offsets = [0, 0, 0], sizes = [2, 8, 8], strides = [1, 1, 1]} : vector<8x8x8xf32> to vector<2x8x8xf32>
    %226 = vector.shape_cast %225 : vector<2x8x8xf32> to vector<16x8xf32>
    %227 = vector.extract_strided_slice %224 {offsets = [2, 0, 0], sizes = [2, 8, 8], strides = [1, 1, 1]} : vector<8x8x8xf32> to vector<2x8x8xf32>
    %228 = vector.shape_cast %227 : vector<2x8x8xf32> to vector<16x8xf32>
    %229 = vector.extract_strided_slice %224 {offsets = [4, 0, 0], sizes = [2, 8, 8], strides = [1, 1, 1]} : vector<8x8x8xf32> to vector<2x8x8xf32>
    %230 = vector.shape_cast %229 : vector<2x8x8xf32> to vector<16x8xf32>
    %231 = vector.extract_strided_slice %224 {offsets = [6, 0, 0], sizes = [2, 8, 8], strides = [1, 1, 1]} : vector<8x8x8xf32> to vector<2x8x8xf32>
    %232 = vector.shape_cast %231 : vector<2x8x8xf32> to vector<16x8xf32>
    %233 = tpu.concatenate %226, %228, %230, %232 in 1 : vector<16x8xf32>, vector<16x8xf32>, vector<16x8xf32>, vector<16x8xf32> -> vector<16x32xf32>
    %234 = arith.truncf %233 : vector<16x32xf32> to vector<16x32xbf16>
    %c1_73 = arith.constant 1 : index
    %c0_74 = arith.constant 0 : index
    %c0_75 = arith.constant 0 : index
    %235 = vector.load %arg6[%c1_73, %c0_74, %c0_75] : memref<3x32x32xbf16, #tpu.memory_space<vmem>>, vector<1x32x32xbf16>
    %236 = vector.shape_cast %235 : vector<1x32x32xbf16> to vector<32x32xbf16>
    %cst_76 = arith.constant dense<0.000000e+00> : vector<16x32xf32>
    %237 = tpu.matmul %234, %236, %cst_76 {dimension_numbers = #tpu.dot_dimension_numbers<[1], [0], [0], [1], [0, 0, 1, 1], [], []>} : vector<16x32xbf16>, vector<32x32xbf16>, vector<16x32xf32> -> vector<16x32xf32>
    %c1_77 = arith.constant 1 : index
    %c0_78 = arith.constant 0 : index
    %238 = vector.load %arg7[%c1_77, %c0_78] : memref<3x32xf32, #tpu.memory_space<vmem>>, vector<1x32xf32>
    %239 = vector.broadcast %238 : vector<1x32xf32> to vector<16x32xf32>
    %240 = arith.addf %237, %239 : vector<16x32xf32>
    %241 = arith.addf %171, %240 : vector<16x32xf32>
    %c1_79 = arith.constant 1 : index
    %c0_80 = arith.constant 0 : index
    %242 = vector.load %arg8[%c1_79, %c0_80] : memref<3x32xf32, #tpu.memory_space<vmem>>, vector<1x32xf32>
    %c1_81 = arith.constant 1 : index
    %c0_82 = arith.constant 0 : index
    %243 = vector.load %arg9[%c1_81, %c0_82] : memref<3x32xf32, #tpu.memory_space<vmem>>, vector<1x32xf32>
    %cst_83 = arith.constant dense<0.000000e+00> : vector<16xf32>
    %244 = vector.multi_reduction <add>, %241, %cst_83 [1] : vector<16x32xf32> to vector<16xf32>
    %245 = vector.shape_cast %244 : vector<16xf32> to vector<16x1xf32>
    %cst_84 = arith.constant 3.200000e+01 : f32
    %246 = vector.broadcast %cst_84 : f32 to vector<16x1xf32>
    %247 = arith.divf %245, %246 : vector<16x1xf32>
    %248 = vector.broadcast %247 : vector<16x1xf32> to vector<16x32xf32>
    %249 = arith.subf %241, %248 : vector<16x32xf32>
    %250 = arith.mulf %249, %249 : vector<16x32xf32>
    %cst_85 = arith.constant dense<0.000000e+00> : vector<16xf32>
    %251 = vector.multi_reduction <add>, %250, %cst_85 [1] : vector<16x32xf32> to vector<16xf32>
    %252 = vector.shape_cast %251 : vector<16xf32> to vector<16x1xf32>
    %cst_86 = arith.constant 3.200000e+01 : f32
    %253 = vector.broadcast %cst_86 : f32 to vector<16x1xf32>
    %254 = arith.divf %252, %253 : vector<16x1xf32>
    %255 = vector.broadcast %247 : vector<16x1xf32> to vector<16x32xf32>
    %256 = arith.subf %241, %255 : vector<16x32xf32>
    %cst_87 = arith.constant 9.99999996E-13 : f32
    %257 = vector.broadcast %cst_87 : f32 to vector<16x1xf32>
    %258 = arith.addf %254, %257 : vector<16x1xf32>
    %259 = math.rsqrt %258 : vector<16x1xf32>
    %260 = vector.broadcast %259 : vector<16x1xf32> to vector<16x32xf32>
    %261 = arith.mulf %256, %260 : vector<16x32xf32>
    %262 = vector.broadcast %242 : vector<1x32xf32> to vector<16x32xf32>
    %263 = arith.mulf %261, %262 : vector<16x32xf32>
    %264 = vector.broadcast %243 : vector<1x32xf32> to vector<16x32xf32>
    %265 = arith.addf %263, %264 : vector<16x32xf32>
    %266 = arith.truncf %265 : vector<16x32xf32> to vector<16x32xbf16>
    %c1_88 = arith.constant 1 : index
    %c0_89 = arith.constant 0 : index
    %c0_90 = arith.constant 0 : index
    %267 = vector.load %arg10[%c1_88, %c0_89, %c0_90] : memref<3x32x64xbf16, #tpu.memory_space<vmem>>, vector<1x32x64xbf16>
    %268 = vector.shape_cast %267 : vector<1x32x64xbf16> to vector<32x64xbf16>
    %cst_91 = arith.constant dense<0.000000e+00> : vector<16x64xf32>
    %269 = tpu.matmul %266, %268, %cst_91 {dimension_numbers = #tpu.dot_dimension_numbers<[1], [0], [0], [1], [0, 0, 1, 1], [], []>} : vector<16x32xbf16>, vector<32x64xbf16>, vector<16x64xf32> -> vector<16x64xf32>
    %c1_92 = arith.constant 1 : index
    %c0_93 = arith.constant 0 : index
    %270 = vector.load %arg11[%c1_92, %c0_93] : memref<3x64xf32, #tpu.memory_space<vmem>>, vector<1x64xf32>
    %271 = vector.broadcast %270 : vector<1x64xf32> to vector<16x64xf32>
    %272 = arith.addf %269, %271 : vector<16x64xf32>
    %cst_94 = arith.constant 5.000000e-01 : f32
    %273 = vector.broadcast %cst_94 : f32 to vector<16x64xf32>
    %274 = arith.mulf %273, %272 : vector<16x64xf32>
    %cst_95 = arith.constant 4.471500e-02 : f32
    %275 = vector.broadcast %cst_95 : f32 to vector<16x64xf32>
    %276 = arith.mulf %275, %272 : vector<16x64xf32>
    %277 = arith.mulf %276, %272 : vector<16x64xf32>
    %278 = arith.mulf %277, %272 : vector<16x64xf32>
    %279 = arith.addf %272, %278 : vector<16x64xf32>
    %cst_96 = arith.constant 0.797884583 : f32
    %280 = vector.broadcast %cst_96 : f32 to vector<16x64xf32>
    %281 = arith.mulf %280, %279 : vector<16x64xf32>
    %282 = math.tanh %281 : vector<16x64xf32>
    %cst_97 = arith.constant 1.000000e+00 : f32
    %283 = vector.broadcast %cst_97 : f32 to vector<16x64xf32>
    %284 = arith.addf %283, %282 : vector<16x64xf32>
    %285 = arith.mulf %274, %284 : vector<16x64xf32>
    %286 = arith.truncf %285 : vector<16x64xf32> to vector<16x64xbf16>
    %c1_98 = arith.constant 1 : index
    %c0_99 = arith.constant 0 : index
    %c0_100 = arith.constant 0 : index
    %287 = vector.load %arg12[%c1_98, %c0_99, %c0_100] : memref<3x64x32xbf16, #tpu.memory_space<vmem>>, vector<1x64x32xbf16>
    %288 = vector.shape_cast %287 : vector<1x64x32xbf16> to vector<64x32xbf16>
    %cst_101 = arith.constant dense<0.000000e+00> : vector<16x32xf32>
    %289 = tpu.matmul %286, %288, %cst_101 {dimension_numbers = #tpu.dot_dimension_numbers<[1], [0], [0], [1], [0, 0, 1, 1], [], []>} : vector<16x64xbf16>, vector<64x32xbf16>, vector<16x32xf32> -> vector<16x32xf32>
    %c1_102 = arith.constant 1 : index
    %c0_103 = arith.constant 0 : index
    %290 = vector.load %arg13[%c1_102, %c0_103] : memref<3x32xf32, #tpu.memory_space<vmem>>, vector<1x32xf32>
    %291 = vector.broadcast %290 : vector<1x32xf32> to vector<16x32xf32>
    %292 = arith.addf %289, %291 : vector<16x32xf32>
    %293 = arith.addf %265, %292 : vector<16x32xf32>
    %c1_104 = arith.constant 1 : index
    %c0_105 = arith.constant 0 : index
    %294 = vector.load %arg14[%c1_104, %c0_105] : memref<3x32xf32, #tpu.memory_space<vmem>>, vector<1x32xf32>
    %c1_106 = arith.constant 1 : index
    %c0_107 = arith.constant 0 : index
    %295 = vector.load %arg15[%c1_106, %c0_107] : memref<3x32xf32, #tpu.memory_space<vmem>>, vector<1x32xf32>
    %cst_108 = arith.constant dense<0.000000e+00> : vector<16xf32>
    %296 = vector.multi_reduction <add>, %293, %cst_108 [1] : vector<16x32xf32> to vector<16xf32>
    %297 = vector.shape_cast %296 : vector<16xf32> to vector<16x1xf32>
    %cst_109 = arith.constant 3.200000e+01 : f32
    %298 = vector.broadcast %cst_109 : f32 to vector<16x1xf32>
    %299 = arith.divf %297, %298 : vector<16x1xf32>
    %300 = vector.broadcast %299 : vector<16x1xf32> to vector<16x32xf32>
    %301 = arith.subf %293, %300 : vector<16x32xf32>
    %302 = arith.mulf %301, %301 : vector<16x32xf32>
    %cst_110 = arith.constant dense<0.000000e+00> : vector<16xf32>
    %303 = vector.multi_reduction <add>, %302, %cst_110 [1] : vector<16x32xf32> to vector<16xf32>
    %304 = vector.shape_cast %303 : vector<16xf32> to vector<16x1xf32>
    %cst_111 = arith.constant 3.200000e+01 : f32
    %305 = vector.broadcast %cst_111 : f32 to vector<16x1xf32>
    %306 = arith.divf %304, %305 : vector<16x1xf32>
    %307 = vector.broadcast %299 : vector<16x1xf32> to vector<16x32xf32>
    %308 = arith.subf %293, %307 : vector<16x32xf32>
    %cst_112 = arith.constant 9.99999996E-13 : f32
    %309 = vector.broadcast %cst_112 : f32 to vector<16x1xf32>
    %310 = arith.addf %306, %309 : vector<16x1xf32>
    %311 = math.rsqrt %310 : vector<16x1xf32>
    %312 = vector.broadcast %311 : vector<16x1xf32> to vector<16x32xf32>
    %313 = arith.mulf %308, %312 : vector<16x32xf32>
    %314 = vector.broadcast %294 : vector<1x32xf32> to vector<16x32xf32>
    %315 = arith.mulf %313, %314 : vector<16x32xf32>
    %316 = vector.broadcast %295 : vector<1x32xf32> to vector<16x32xf32>
    %317 = arith.addf %315, %316 : vector<16x32xf32>
    %318 = arith.truncf %317 : vector<16x32xf32> to vector<16x32xbf16>
    %c2 = arith.constant 2 : index
    %c0_113 = arith.constant 0 : index
    %c0_114 = arith.constant 0 : index
    %319 = vector.load %arg4[%c2, %c0_113, %c0_114] : memref<3x32x96xbf16, #tpu.memory_space<vmem>>, vector<1x32x96xbf16>
    %320 = vector.shape_cast %319 : vector<1x32x96xbf16> to vector<32x96xbf16>
    %cst_115 = arith.constant dense<0.000000e+00> : vector<16x96xf32>
    %321 = tpu.matmul %318, %320, %cst_115 {dimension_numbers = #tpu.dot_dimension_numbers<[1], [0], [0], [1], [0, 0, 1, 1], [], []>} : vector<16x32xbf16>, vector<32x96xbf16>, vector<16x96xf32> -> vector<16x96xf32>
    %c2_116 = arith.constant 2 : index
    %c0_117 = arith.constant 0 : index
    %322 = vector.load %arg5[%c2_116, %c0_117] : memref<3x96xf32, #tpu.memory_space<vmem>>, vector<1x96xf32>
    %323 = vector.broadcast %322 : vector<1x96xf32> to vector<16x96xf32>
    %324 = arith.addf %321, %323 : vector<16x96xf32>
    %325 = vector.extract_strided_slice %324 {offsets = [0, 0], sizes = [16, 8], strides = [1, 1]} : vector<16x96xf32> to vector<16x8xf32>
    %326 = vector.shape_cast %325 : vector<16x8xf32> to vector<2x8x8xf32>
    %327 = vector.extract_strided_slice %324 {offsets = [0, 8], sizes = [16, 8], strides = [1, 1]} : vector<16x96xf32> to vector<16x8xf32>
    %328 = vector.shape_cast %327 : vector<16x8xf32> to vector<2x8x8xf32>
    %329 = vector.extract_strided_slice %324 {offsets = [0, 16], sizes = [16, 8], strides = [1, 1]} : vector<16x96xf32> to vector<16x8xf32>
    %330 = vector.shape_cast %329 : vector<16x8xf32> to vector<2x8x8xf32>
    %331 = vector.extract_strided_slice %324 {offsets = [0, 24], sizes = [16, 8], strides = [1, 1]} : vector<16x96xf32> to vector<16x8xf32>
    %332 = vector.shape_cast %331 : vector<16x8xf32> to vector<2x8x8xf32>
    %333 = tpu.concatenate %326, %328, %330, %332 in 0 : vector<2x8x8xf32>, vector<2x8x8xf32>, vector<2x8x8xf32>, vector<2x8x8xf32> -> vector<8x8x8xf32>
    %334 = vector.extract_strided_slice %324 {offsets = [0, 32], sizes = [16, 8], strides = [1, 1]} : vector<16x96xf32> to vector<16x8xf32>
    %335 = vector.shape_cast %334 : vector<16x8xf32> to vector<2x8x8xf32>
    %336 = vector.extract_strided_slice %324 {offsets = [0, 40], sizes = [16, 8], strides = [1, 1]} : vector<16x96xf32> to vector<16x8xf32>
    %337 = vector.shape_cast %336 : vector<16x8xf32> to vector<2x8x8xf32>
    %338 = vector.extract_strided_slice %324 {offsets = [0, 48], sizes = [16, 8], strides = [1, 1]} : vector<16x96xf32> to vector<16x8xf32>
    %339 = vector.shape_cast %338 : vector<16x8xf32> to vector<2x8x8xf32>
    %340 = vector.extract_strided_slice %324 {offsets = [0, 56], sizes = [16, 8], strides = [1, 1]} : vector<16x96xf32> to vector<16x8xf32>
    %341 = vector.shape_cast %340 : vector<16x8xf32> to vector<2x8x8xf32>
    %342 = tpu.concatenate %335, %337, %339, %341 in 0 : vector<2x8x8xf32>, vector<2x8x8xf32>, vector<2x8x8xf32>, vector<2x8x8xf32> -> vector<8x8x8xf32>
    %343 = vector.extract_strided_slice %324 {offsets = [0, 64], sizes = [16, 8], strides = [1, 1]} : vector<16x96xf32> to vector<16x8xf32>
    %344 = vector.shape_cast %343 : vector<16x8xf32> to vector<2x8x8xf32>
    %345 = vector.extract_strided_slice %324 {offsets = [0, 72], sizes = [16, 8], strides = [1, 1]} : vector<16x96xf32> to vector<16x8xf32>
    %346 = vector.shape_cast %345 : vector<16x8xf32> to vector<2x8x8xf32>
    %347 = vector.extract_strided_slice %324 {offsets = [0, 80], sizes = [16, 8], strides = [1, 1]} : vector<16x96xf32> to vector<16x8xf32>
    %348 = vector.shape_cast %347 : vector<16x8xf32> to vector<2x8x8xf32>
    %349 = vector.extract_strided_slice %324 {offsets = [0, 88], sizes = [16, 8], strides = [1, 1]} : vector<16x96xf32> to vector<16x8xf32>
    %350 = vector.shape_cast %349 : vector<16x8xf32> to vector<2x8x8xf32>
    %351 = tpu.concatenate %344, %346, %348, %350 in 0 : vector<2x8x8xf32>, vector<2x8x8xf32>, vector<2x8x8xf32>, vector<2x8x8xf32> -> vector<8x8x8xf32>
    %352 = arith.truncf %333 : vector<8x8x8xf32> to vector<8x8x8xbf16>
    %353 = arith.truncf %342 : vector<8x8x8xf32> to vector<8x8x8xbf16>
    "tpu.trace_start"() <{level = 10 : i32, message = "nqd,nkd->nqk"}> : () -> ()
    %cst_118 = arith.constant dense<0.000000e+00> : vector<8x8x8xf32>
    %354 = tpu.matmul %352, %353, %cst_118 {dimension_numbers = #tpu.dot_dimension_numbers<[2], [2], [1], [1], [0, 0, 0, 1, 1, 1], [0], [0]>} : vector<8x8x8xbf16>, vector<8x8x8xbf16>, vector<8x8x8xf32> -> vector<8x8x8xf32>
    "tpu.trace_stop"() : () -> ()
    %cst_119 = arith.constant 0.353553385 : f32
    %355 = vector.broadcast %cst_119 : f32 to vector<8x8x8xf32>
    %356 = arith.mulf %354, %355 : vector<8x8x8xf32>
    %357 = arith.addf %356, %0 : vector<8x8x8xf32>
    %cst_120 = arith.constant dense<0xFF800000> : vector<8x8xf32>
    %358 = vector.multi_reduction <maximumf>, %357, %cst_120 [2] : vector<8x8x8xf32> to vector<8x8xf32>
    %359 = vector.shape_cast %358 : vector<8x8xf32> to vector<8x8x1xf32>
    %360 = vector.broadcast %359 : vector<8x8x1xf32> to vector<8x8x8xf32>
    %361 = arith.subf %357, %360 : vector<8x8x8xf32>
    %362 = math.exp %361 : vector<8x8x8xf32>
    %cst_121 = arith.constant dense<0.000000e+00> : vector<8x8xf32>
    %363 = vector.multi_reduction <add>, %362, %cst_121 [2] : vector<8x8x8xf32> to vector<8x8xf32>
    %364 = vector.shape_cast %363 : vector<8x8xf32> to vector<8x8x1xf32>
    %365 = tpu.reciprocal %364 {approx = true} : vector<8x8x1xf32> -> vector<8x8x1xf32>
    %366 = vector.broadcast %365 : vector<8x8x1xf32> to vector<8x8x8xf32>
    %367 = arith.mulf %362, %366 : vector<8x8x8xf32>
    %368 = arith.truncf %367 : vector<8x8x8xf32> to vector<8x8x8xbf16>
    %369 = arith.truncf %351 : vector<8x8x8xf32> to vector<8x8x8xbf16>
    "tpu.trace_start"() <{level = 10 : i32, message = "nqk,nkd->nqd"}> : () -> ()
    %cst_122 = arith.constant dense<0.000000e+00> : vector<8x8x8xf32>
    %370 = tpu.matmul %368, %369, %cst_122 {dimension_numbers = #tpu.dot_dimension_numbers<[2], [1], [1], [2], [0, 0, 0, 1, 1, 2], [0], [0]>} : vector<8x8x8xbf16>, vector<8x8x8xbf16>, vector<8x8x8xf32> -> vector<8x8x8xf32>
    "tpu.trace_stop"() : () -> ()
    %371 = vector.extract_strided_slice %370 {offsets = [0, 0, 0], sizes = [2, 8, 8], strides = [1, 1, 1]} : vector<8x8x8xf32> to vector<2x8x8xf32>
    %372 = vector.shape_cast %371 : vector<2x8x8xf32> to vector<16x8xf32>
    %373 = vector.extract_strided_slice %370 {offsets = [2, 0, 0], sizes = [2, 8, 8], strides = [1, 1, 1]} : vector<8x8x8xf32> to vector<2x8x8xf32>
    %374 = vector.shape_cast %373 : vector<2x8x8xf32> to vector<16x8xf32>
    %375 = vector.extract_strided_slice %370 {offsets = [4, 0, 0], sizes = [2, 8, 8], strides = [1, 1, 1]} : vector<8x8x8xf32> to vector<2x8x8xf32>
    %376 = vector.shape_cast %375 : vector<2x8x8xf32> to vector<16x8xf32>
    %377 = vector.extract_strided_slice %370 {offsets = [6, 0, 0], sizes = [2, 8, 8], strides = [1, 1, 1]} : vector<8x8x8xf32> to vector<2x8x8xf32>
    %378 = vector.shape_cast %377 : vector<2x8x8xf32> to vector<16x8xf32>
    %379 = tpu.concatenate %372, %374, %376, %378 in 1 : vector<16x8xf32>, vector<16x8xf32>, vector<16x8xf32>, vector<16x8xf32> -> vector<16x32xf32>
    %380 = arith.truncf %379 : vector<16x32xf32> to vector<16x32xbf16>
    %c2_123 = arith.constant 2 : index
    %c0_124 = arith.constant 0 : index
    %c0_125 = arith.constant 0 : index
    %381 = vector.load %arg6[%c2_123, %c0_124, %c0_125] : memref<3x32x32xbf16, #tpu.memory_space<vmem>>, vector<1x32x32xbf16>
    %382 = vector.shape_cast %381 : vector<1x32x32xbf16> to vector<32x32xbf16>
    %cst_126 = arith.constant dense<0.000000e+00> : vector<16x32xf32>
    %383 = tpu.matmul %380, %382, %cst_126 {dimension_numbers = #tpu.dot_dimension_numbers<[1], [0], [0], [1], [0, 0, 1, 1], [], []>} : vector<16x32xbf16>, vector<32x32xbf16>, vector<16x32xf32> -> vector<16x32xf32>
    %c2_127 = arith.constant 2 : index
    %c0_128 = arith.constant 0 : index
    %384 = vector.load %arg7[%c2_127, %c0_128] : memref<3x32xf32, #tpu.memory_space<vmem>>, vector<1x32xf32>
    %385 = vector.broadcast %384 : vector<1x32xf32> to vector<16x32xf32>
    %386 = arith.addf %383, %385 : vector<16x32xf32>
    %387 = arith.addf %317, %386 : vector<16x32xf32>
    %c2_129 = arith.constant 2 : index
    %c0_130 = arith.constant 0 : index
    %388 = vector.load %arg8[%c2_129, %c0_130] : memref<3x32xf32, #tpu.memory_space<vmem>>, vector<1x32xf32>
    %c2_131 = arith.constant 2 : index
    %c0_132 = arith.constant 0 : index
    %389 = vector.load %arg9[%c2_131, %c0_132] : memref<3x32xf32, #tpu.memory_space<vmem>>, vector<1x32xf32>
    %cst_133 = arith.constant dense<0.000000e+00> : vector<16xf32>
    %390 = vector.multi_reduction <add>, %387, %cst_133 [1] : vector<16x32xf32> to vector<16xf32>
    %391 = vector.shape_cast %390 : vector<16xf32> to vector<16x1xf32>
    %cst_134 = arith.constant 3.200000e+01 : f32
    %392 = vector.broadcast %cst_134 : f32 to vector<16x1xf32>
    %393 = arith.divf %391, %392 : vector<16x1xf32>
    %394 = vector.broadcast %393 : vector<16x1xf32> to vector<16x32xf32>
    %395 = arith.subf %387, %394 : vector<16x32xf32>
    %396 = arith.mulf %395, %395 : vector<16x32xf32>
    %cst_135 = arith.constant dense<0.000000e+00> : vector<16xf32>
    %397 = vector.multi_reduction <add>, %396, %cst_135 [1] : vector<16x32xf32> to vector<16xf32>
    %398 = vector.shape_cast %397 : vector<16xf32> to vector<16x1xf32>
    %cst_136 = arith.constant 3.200000e+01 : f32
    %399 = vector.broadcast %cst_136 : f32 to vector<16x1xf32>
    %400 = arith.divf %398, %399 : vector<16x1xf32>
    %401 = vector.broadcast %393 : vector<16x1xf32> to vector<16x32xf32>
    %402 = arith.subf %387, %401 : vector<16x32xf32>
    %cst_137 = arith.constant 9.99999996E-13 : f32
    %403 = vector.broadcast %cst_137 : f32 to vector<16x1xf32>
    %404 = arith.addf %400, %403 : vector<16x1xf32>
    %405 = math.rsqrt %404 : vector<16x1xf32>
    %406 = vector.broadcast %405 : vector<16x1xf32> to vector<16x32xf32>
    %407 = arith.mulf %402, %406 : vector<16x32xf32>
    %408 = vector.broadcast %388 : vector<1x32xf32> to vector<16x32xf32>
    %409 = arith.mulf %407, %408 : vector<16x32xf32>
    %410 = vector.broadcast %389 : vector<1x32xf32> to vector<16x32xf32>
    %411 = arith.addf %409, %410 : vector<16x32xf32>
    %412 = arith.truncf %411 : vector<16x32xf32> to vector<16x32xbf16>
    %c2_138 = arith.constant 2 : index
    %c0_139 = arith.constant 0 : index
    %c0_140 = arith.constant 0 : index
    %413 = vector.load %arg10[%c2_138, %c0_139, %c0_140] : memref<3x32x64xbf16, #tpu.memory_space<vmem>>, vector<1x32x64xbf16>
    %414 = vector.shape_cast %413 : vector<1x32x64xbf16> to vector<32x64xbf16>
    %cst_141 = arith.constant dense<0.000000e+00> : vector<16x64xf32>
    %415 = tpu.matmul %412, %414, %cst_141 {dimension_numbers = #tpu.dot_dimension_numbers<[1], [0], [0], [1], [0, 0, 1, 1], [], []>} : vector<16x32xbf16>, vector<32x64xbf16>, vector<16x64xf32> -> vector<16x64xf32>
    %c2_142 = arith.constant 2 : index
    %c0_143 = arith.constant 0 : index
    %416 = vector.load %arg11[%c2_142, %c0_143] : memref<3x64xf32, #tpu.memory_space<vmem>>, vector<1x64xf32>
    %417 = vector.broadcast %416 : vector<1x64xf32> to vector<16x64xf32>
    %418 = arith.addf %415, %417 : vector<16x64xf32>
    %cst_144 = arith.constant 5.000000e-01 : f32
    %419 = vector.broadcast %cst_144 : f32 to vector<16x64xf32>
    %420 = arith.mulf %419, %418 : vector<16x64xf32>
    %cst_145 = arith.constant 4.471500e-02 : f32
    %421 = vector.broadcast %cst_145 : f32 to vector<16x64xf32>
    %422 = arith.mulf %421, %418 : vector<16x64xf32>
    %423 = arith.mulf %422, %418 : vector<16x64xf32>
    %424 = arith.mulf %423, %418 : vector<16x64xf32>
    %425 = arith.addf %418, %424 : vector<16x64xf32>
    %cst_146 = arith.constant 0.797884583 : f32
    %426 = vector.broadcast %cst_146 : f32 to vector<16x64xf32>
    %427 = arith.mulf %426, %425 : vector<16x64xf32>
    %428 = math.tanh %427 : vector<16x64xf32>
    %cst_147 = arith.constant 1.000000e+00 : f32
    %429 = vector.broadcast %cst_147 : f32 to vector<16x64xf32>
    %430 = arith.addf %429, %428 : vector<16x64xf32>
    %431 = arith.mulf %420, %430 : vector<16x64xf32>
    %432 = arith.truncf %431 : vector<16x64xf32> to vector<16x64xbf16>
    %c2_148 = arith.constant 2 : index
    %c0_149 = arith.constant 0 : index
    %c0_150 = arith.constant 0 : index
    %433 = vector.load %arg12[%c2_148, %c0_149, %c0_150] : memref<3x64x32xbf16, #tpu.memory_space<vmem>>, vector<1x64x32xbf16>
    %434 = vector.shape_cast %433 : vector<1x64x32xbf16> to vector<64x32xbf16>
    %cst_151 = arith.constant dense<0.000000e+00> : vector<16x32xf32>
    %435 = tpu.matmul %432, %434, %cst_151 {dimension_numbers = #tpu.dot_dimension_numbers<[1], [0], [0], [1], [0, 0, 1, 1], [], []>} : vector<16x64xbf16>, vector<64x32xbf16>, vector<16x32xf32> -> vector<16x32xf32>
    %c2_152 = arith.constant 2 : index
    %c0_153 = arith.constant 0 : index
    %436 = vector.load %arg13[%c2_152, %c0_153] : memref<3x32xf32, #tpu.memory_space<vmem>>, vector<1x32xf32>
    %437 = vector.broadcast %436 : vector<1x32xf32> to vector<16x32xf32>
    %438 = arith.addf %435, %437 : vector<16x32xf32>
    %439 = arith.addf %411, %438 : vector<16x32xf32>
    %c2_154 = arith.constant 2 : index
    %c0_155 = arith.constant 0 : index
    %440 = vector.load %arg14[%c2_154, %c0_155] : memref<3x32xf32, #tpu.memory_space<vmem>>, vector<1x32xf32>
    %c2_156 = arith.constant 2 : index
    %c0_157 = arith.constant 0 : index
    %441 = vector.load %arg15[%c2_156, %c0_157] : memref<3x32xf32, #tpu.memory_space<vmem>>, vector<1x32xf32>
    %cst_158 = arith.constant dense<0.000000e+00> : vector<16xf32>
    %442 = vector.multi_reduction <add>, %439, %cst_158 [1] : vector<16x32xf32> to vector<16xf32>
    %443 = vector.shape_cast %442 : vector<16xf32> to vector<16x1xf32>
    %cst_159 = arith.constant 3.200000e+01 : f32
    %444 = vector.broadcast %cst_159 : f32 to vector<16x1xf32>
    %445 = arith.divf %443, %444 : vector<16x1xf32>
    %446 = vector.broadcast %445 : vector<16x1xf32> to vector<16x32xf32>
    %447 = arith.subf %439, %446 : vector<16x32xf32>
    %448 = arith.mulf %447, %447 : vector<16x32xf32>
    %cst_160 = arith.constant dense<0.000000e+00> : vector<16xf32>
    %449 = vector.multi_reduction <add>, %448, %cst_160 [1] : vector<16x32xf32> to vector<16xf32>
    %450 = vector.shape_cast %449 : vector<16xf32> to vector<16x1xf32>
    %cst_161 = arith.constant 3.200000e+01 : f32
    %451 = vector.broadcast %cst_161 : f32 to vector<16x1xf32>
    %452 = arith.divf %450, %451 : vector<16x1xf32>
    %453 = vector.broadcast %445 : vector<16x1xf32> to vector<16x32xf32>
    %454 = arith.subf %439, %453 : vector<16x32xf32>
    %cst_162 = arith.constant 9.99999996E-13 : f32
    %455 = vector.broadcast %cst_162 : f32 to vector<16x1xf32>
    %456 = arith.addf %452, %455 : vector<16x1xf32>
    %457 = math.rsqrt %456 : vector<16x1xf32>
    %458 = vector.broadcast %457 : vector<16x1xf32> to vector<16x32xf32>
    %459 = arith.mulf %454, %458 : vector<16x32xf32>
    %460 = vector.broadcast %440 : vector<1x32xf32> to vector<16x32xf32>
    %461 = arith.mulf %459, %460 : vector<16x32xf32>
    %462 = vector.broadcast %441 : vector<1x32xf32> to vector<16x32xf32>
    %463 = arith.addf %461, %462 : vector<16x32xf32>
    %c0_163 = arith.constant 0 : index
    %c0_164 = arith.constant 0 : index
    %464 = vector.load %arg16[%c0_163, %c0_164] : memref<1x32xf32, #tpu.memory_space<vmem>>, vector<1x32xf32>
    %465 = vector.broadcast %464 : vector<1x32xf32> to vector<16x32xf32>
    %466 = arith.mulf %463, %465 : vector<16x32xf32>
    %cst_165 = arith.constant dense<0.000000e+00> : vector<16xf32>
    %467 = vector.multi_reduction <add>, %466, %cst_165 [1] : vector<16x32xf32> to vector<16xf32>
    %468 = vector.shape_cast %467 : vector<16xf32> to vector<16x1xf32>
    %c0_166 = arith.constant 0 : index
    %c0_167 = arith.constant 0 : index
    %469 = vector.load %arg17[%c0_166, %c0_167] : memref<1x1xf32, #tpu.memory_space<vmem>>, vector<1x1xf32>
    %470 = vector.broadcast %469 : vector<1x1xf32> to vector<16x1xf32>
    %471 = arith.addf %468, %470 : vector<16x1xf32>
    %472 = arith.negf %471 : vector<16x1xf32>
    %473 = math.exp %472 : vector<16x1xf32>
    %cst_168 = arith.constant 1.000000e+00 : f32
    %474 = vector.broadcast %cst_168 : f32 to vector<16x1xf32>
    %475 = arith.addf %474, %473 : vector<16x1xf32>
    %476 = arith.divf %474, %475 : vector<16x1xf32>
    %477 = vector.shape_cast %476 : vector<16x1xf32> to vector<16x1xf32>
    %478 = vector.broadcast %477 : vector<16x1xf32> to vector<16x128xf32>
    %c0_169 = arith.constant 0 : index
    %c0_170 = arith.constant 0 : index
    %479 = vector.load %arg18[%c0_169, %c0_170] : memref<16x128xf32, #tpu.memory_space<vmem>>, vector<16x128xf32>
    tpu.vector_store %arg18[%c0_169, %c0_170], %478 {strides = array<i32>} : memref<16x128xf32, #tpu.memory_space<vmem>>, vector<16x128xf32>,
    return
  }
}

</mosaic_0001>

<llo_original>
// kernel: bert_sentiment_forward.1
$region0: #{bert_sentiment_forward.1}
  #allocation0 [shape = 'u32[]', space=smem, size = 0x4, offset = 0x4, fixed_abs, tag = 'smem constant byte address 0x4 - core index']
  #allocation1 [shape = 'u32[144,128]{1,0:T(1,128)}', space=vmem, size = 0x12000, scoped, tag = 'internal scratch']
  #allocation2 [shape = 'f32[1,1]{1,0:T(1,128)S(1)}', space=vmem, size = 0x200, scoped, tag = 'scoped memory for bert_sentiment_forward.1']
  %s0 = inlined_call_operand.vmem [shape: f32[16,32], index: 0, kind: input, shape index: {}]
  %s1 = inlined_call_operand.vmem [shape: f32[8,8,8], index: 1, kind: input, shape index: {}]
  %s2 = inlined_call_operand.vmem [shape: f32[1,32], index: 2, kind: input, shape index: {}]
  %s3 = inlined_call_operand.vmem [shape: f32[1,32], index: 3, kind: input, shape index: {}]
  %s4 = inlined_call_operand.vmem [shape: bf16[3,32,96], index: 4, kind: input, shape index: {}]
  %s5 = inlined_call_operand.vmem [shape: f32[3,96], index: 5, kind: input, shape index: {}]
  %s6 = inlined_call_operand.vmem [shape: bf16[3,32,32], index: 6, kind: input, shape index: {}]
  %s7 = inlined_call_operand.vmem [shape: f32[3,32], index: 7, kind: input, shape index: {}]
  %s8 = inlined_call_operand.vmem [shape: f32[3,32], index: 8, kind: input, shape index: {}]
  %s9 = inlined_call_operand.vmem [shape: f32[3,32], index: 9, kind: input, shape index: {}]
  %s10 = inlined_call_operand.vmem [shape: bf16[3,32,64], index: 10, kind: input, shape index: {}]
  %s11 = inlined_call_operand.vmem [shape: f32[3,64], index: 11, kind: input, shape index: {}]
  %s12 = inlined_call_operand.vmem [shape: bf16[3,64,32], index: 12, kind: input, shape index: {}]
  %s13 = inlined_call_operand.vmem [shape: f32[3,32], index: 13, kind: input, shape index: {}]
  %s14 = inlined_call_operand.vmem [shape: f32[3,32], index: 14, kind: input, shape index: {}]
  %s15 = inlined_call_operand.vmem [shape: f32[3,32], index: 15, kind: input, shape index: {}]
  %s16 = inlined_call_operand.vmem [shape: f32[1,32], index: 16, kind: input, shape index: {}]
  %s17 = inlined_call_operand.<no memory space> [shape: f32[1,1], index: 17, kind: input, shape index: {}]
  %s18 = inlined_call_operand.vmem [shape: f32[16,128], index: 18, kind: output, shape index: {}]
  %s19 = sld [smem:[#allocation0]]
  $region82: #{bert_sentiment_forward.1} parent=0
    _
  %s21 = ssub.s32 1, %s19
  %s22 = scalar_select 0, %s21, %s19
  %v23 = vstv %s17
  %24 = vst [vmem:[#allocation2] sm:$0x1] %v23
  // Predicated region
  $region2: #{bert_sentiment_forward.1} parent=0 // pred_check
    _
  $region3: #{bert_sentiment_forward.1} parent=0 // pred_check_branch
    %26 = sbr.rel (0) target = $region5
  $region4: #{bert_sentiment_forward.1} parent=0 // pred_region
    _
  $region5: #{bert_sentiment_forward.1} parent=0 // pred_fallthru
    _
  // Predicated region
  $region6: #{bert_sentiment_forward.1} parent=0 // pred_check
    _
  $region7: #{bert_sentiment_forward.1} parent=0 // pred_check_branch
    %28 = sbr.rel (0) target = $region9
  $region8: #{bert_sentiment_forward.1} parent=0 // pred_region
    _
  $region9: #{bert_sentiment_forward.1} parent=0 // pred_fallthru
    _
  // Predicated region
  $region10: #{bert_sentiment_forward.1} parent=0 // pred_check
    _
  $region11: #{bert_sentiment_forward.1} parent=0 // pred_check_branch
    %30 = sbr.rel (0) target = $region13
  $region12: #{bert_sentiment_forward.1} parent=0 // pred_region
    _
  $region13: #{bert_sentiment_forward.1} parent=0 // pred_fallthru
    _
  // Predicated region
  $region14: #{bert_sentiment_forward.1} parent=0 // pred_check
    _
  $region15: #{bert_sentiment_forward.1} parent=0 // pred_check_branch
    %32 = sbr.rel (0) target = $region17
  $region16: #{bert_sentiment_forward.1} parent=0 // pred_region
    _
  $region17: #{bert_sentiment_forward.1} parent=0 // pred_fallthru
    _
  // Predicated region
  $region18: #{bert_sentiment_forward.1} parent=0 // pred_check
    _
  $region19: #{bert_sentiment_forward.1} parent=0 // pred_check_branch
    %34 = sbr.rel (0) target = $region21
  $region20: #{bert_sentiment_forward.1} parent=0 // pred_region
    _
  $region21: #{bert_sentiment_forward.1} parent=0 // pred_fallthru
    _
  // Predicated region
  $region22: #{bert_sentiment_forward.1} parent=0 // pred_check
    _
  $region23: #{bert_sentiment_forward.1} parent=0 // pred_check_branch
    %36 = sbr.rel (0) target = $region25
  $region24: #{bert_sentiment_forward.1} parent=0 // pred_region
    _
  $region25: #{bert_sentiment_forward.1} parent=0 // pred_fallthru
    _
  // Predicated region
  $region26: #{bert_sentiment_forward.1} parent=0 // pred_check
    _
  $region27: #{bert_sentiment_forward.1} parent=0 // pred_check_branch
    %38 = sbr.rel (0) target = $region29
  $region28: #{bert_sentiment_forward.1} parent=0 // pred_region
    _
  $region29: #{bert_sentiment_forward.1} parent=0 // pred_fallthru
    _
  // Predicated region
  $region30: #{bert_sentiment_forward.1} parent=0 // pred_check
    _
  $region31: #{bert_sentiment_forward.1} parent=0 // pred_check_branch
    %40 = sbr.rel (0) target = $region33
  $region32: #{bert_sentiment_forward.1} parent=0 // pred_region
    _
  $region33: #{bert_sentiment_forward.1} parent=0 // pred_fallthru
    _
  // Predicated region
  $region34: #{bert_sentiment_forward.1} parent=0 // pred_check
    _
  $region35: #{bert_sentiment_forward.1} parent=0 // pred_check_branch
    %42 = sbr.rel (0) target = $region37
  $region36: #{bert_sentiment_forward.1} parent=0 // pred_region
    _
  $region37: #{bert_sentiment_forward.1} parent=0 // pred_fallthru
    _
  // Predicated region
  $region38: #{bert_sentiment_forward.1} parent=0 // pred_check
    _
  $region39: #{bert_sentiment_forward.1} parent=0 // pred_check_branch
    %44 = sbr.rel (0) target = $region41
  $region40: #{bert_sentiment_forward.1} parent=0 // pred_region
    _
  $region41: #{bert_sentiment_forward.1} parent=0 // pred_fallthru
    _
  // Predicated region
  $region42: #{bert_sentiment_forward.1} parent=0 // pred_check
    _
  $region43: #{bert_sentiment_forward.1} parent=0 // pred_check_branch
    %46 = sbr.rel (0) target = $region45
  $region44: #{bert_sentiment_forward.1} parent=0 // pred_region
    _
  $region45: #{bert_sentiment_forward.1} parent=0 // pred_fallthru
    _
  // Predicated region
  $region46: #{bert_sentiment_forward.1} parent=0 // pred_check
    _
  $region47: #{bert_sentiment_forward.1} parent=0 // pred_check_branch
    %48 = sbr.rel (0) target = $region49
  $region48: #{bert_sentiment_forward.1} parent=0 // pred_region
    _
  $region49: #{bert_sentiment_forward.1} parent=0 // pred_fallthru
    _
  // Predicated region
  $region50: #{bert_sentiment_forward.1} parent=0 // pred_check
    _
  $region51: #{bert_sentiment_forward.1} parent=0 // pred_check_branch
    %50 = sbr.rel (0) target = $region53
  $region52: #{bert_sentiment_forward.1} parent=0 // pred_region
    _
  $region53: #{bert_sentiment_forward.1} parent=0 // pred_fallthru
    _
  // Predicated region
  $region54: #{bert_sentiment_forward.1} parent=0 // pred_check
    _
  $region55: #{bert_sentiment_forward.1} parent=0 // pred_check_branch
    %52 = sbr.rel (0) target = $region57
  $region56: #{bert_sentiment_forward.1} parent=0 // pred_region
    _
  $region57: #{bert_sentiment_forward.1} parent=0 // pred_fallthru
    _
  // Predicated region
  $region58: #{bert_sentiment_forward.1} parent=0 // pred_check
    _
  $region59: #{bert_sentiment_forward.1} parent=0 // pred_check_branch
    %54 = sbr.rel (0) target = $region61
  $region60: #{bert_sentiment_forward.1} parent=0 // pred_region
    _
  $region61: #{bert_sentiment_forward.1} parent=0 // pred_fallthru
    _
  // Predicated region
  $region62: #{bert_sentiment_forward.1} parent=0 // pred_check
    _
  $region63: #{bert_sentiment_forward.1} parent=0 // pred_check_branch
    %56 = sbr.rel (0) target = $region65
  $region64: #{bert_sentiment_forward.1} parent=0 // pred_region
    _
  $region65: #{bert_sentiment_forward.1} parent=0 // pred_fallthru
    _
  // Predicated region
  $region66: #{bert_sentiment_forward.1} parent=0 // pred_check
    _
  $region67: #{bert_sentiment_forward.1} parent=0 // pred_check_branch
    %58 = sbr.rel (0) target = $region69
  $region68: #{bert_sentiment_forward.1} parent=0 // pred_region
    _
  $region69: #{bert_sentiment_forward.1} parent=0 // pred_fallthru
    _
  // Predicated region
  $region70: #{bert_sentiment_forward.1} parent=0 // pred_check
    _
  $region71: #{bert_sentiment_forward.1} parent=0 // pred_check_branch
    %60 = sbr.rel (0) target = $region73
  $region72: #{bert_sentiment_forward.1} parent=0 // pred_region
    _
  $region73: #{bert_sentiment_forward.1} parent=0 // pred_fallthru
    _
  %v62 = vld [vmem:[%s1] sm:$0xff]
  %v63 = vld [vmem:[%s1 + $0x8] sm:$0xff]
  %v64 = vld [vmem:[%s1 + $0x10] sm:$0xff]
  %v65 = vld [vmem:[%s1 + $0x18] sm:$0xff]
  %v66 = vld [vmem:[%s1 + $0x20] sm:$0xff]
  %v67 = vld [vmem:[%s1 + $0x28] sm:$0xff]
  %v68 = vld [vmem:[%s1 + $0x30] sm:$0xff]
  %v69 = vld [vmem:[%s1 + $0x38] sm:$0xff]
  %v70 = vld [vmem:[%s0] sm:$0xff]
  %v71 = vld [vmem:[%s0 + $0x8] sm:$0xff]
  %v72 = vld [vmem:[%s2] sm:$0x1]
  %v73 = vld [vmem:[%s3] sm:$0x1]
  %vm74 = vcmask 261120
  %v75 = vsel %vm74, %v70, 0.0
  %76 = vadd.xlane.f32.xlu0 %v75
  %v77 = vpop.xlane.xlu0 %76
  %v78 = vsel %vm74, %v71, 0.0
  %79 = vadd.xlane.f32.xlu0 %v78
  %v80 = vpop.xlane.xlu0 %79
  %v81 = vrcp.pop 32.0
  %v82 = vmul.f32 %v77, %v81
  %v83 = vmul.f32 %v80, %v81
  %v84 = vsub.f32 %v70, %v82
  %v85 = vsub.f32 %v71, %v83
  %v86 = vmul.f32 %v84, %v84
  %v87 = vmul.f32 %v85, %v85
  %v88 = vsel %vm74, %v86, 0.0
  %89 = vadd.xlane.f32.xlu0 %v88
  %v90 = vpop.xlane.xlu0 %89
  %v91 = vsel %vm74, %v87, 0.0
  %92 = vadd.xlane.f32.xlu0 %v91
  %v93 = vpop.xlane.xlu0 %92
  %v94 = vmul.f32 %v90, %v81
  %v95 = vmul.f32 %v93, %v81
  %v96 = vadd.f32 %v94, 1e-12
  %v97 = vadd.f32 %v95, 1e-12
  %v98 = vrsqrt.pop %v96
  %v99 = vrsqrt.pop %v97
  %v100 = vmul.f32 %v84, %v98
  %v101 = vmul.f32 %v85, %v99
  %v103 = vlaneseq
  %v104 = vshrl.u32 %v103, 7
  %v105 = vsub.s32 0, %v104
  %v106 = vrot.slane %v72, %v105
  %v108 = vmul.f32 %v100, %v106
  %v109 = vmul.f32 %v101, %v106
  %v111 = vlaneseq
  %v112 = vshrl.u32 %v111, 7
  %v113 = vsub.s32 0, %v112
  %v114 = vrot.slane %v73, %v113
  %v116 = vadd.f32 %v108, %v114
  %v117 = vadd.f32 %v109, %v114
  %v118 = vpack.c.bf16 %v117, %v116
  %v119 = vld [vmem:[%s4] sm:$0xf]
  %v120 = vld [vmem:[%s4 + $0x4] sm:$0xf]
  %v121 = vld [vmem:[%s4 + $0x8] sm:$0xf]
  %v122 = vld [vmem:[%s4 + $0xc] sm:$0xf]
  %v123 = vld [vmem:[%s5] sm:$0x1]
  %v124 = vlaneseq
  %v125 = vshrl.u32 %v124, 7
  %v126 = vsub.s32 0, %v125
  %v127 = vrot.slane %v123, %v126
  %v132 = vunpack.c.l.b16 %v119
  %v133 = vunpack.c.l.b16 %v120
  %v134 = vunpack.c.l.b16 %v121
  %v135 = vunpack.c.l.b16 %v122
  %v136 = vpack.c.b16 %v133, %v132
  %v137 = vpack.c.b16 %v135, %v134
  %v141 = vsel %vm74, %v118, 0
  %143 = vmatprep.subr.bf16.mxu0 0
  %144 = vmatpush1.bf16.msra.mxu0 %v136
  %145 = vmatprep.subr.bf16.mxu0 0
  %146 = vmatpush1.bf16.msra.mxu0 %v137
  %147 = vmatprep.subr.bf16.mxu0 0
  %148 = vmatpush1.bf16.msra.mxu0 0
  %149 = vmatprep.subr.bf16.mxu0 0
  %150 = vmatpush1.bf16.msra.mxu0 0
  %151 = vmatprep.subr.bf16.mxu0 0
  %152 = vmatpush1.bf16.msra.mxu0 0
  %153 = vmatprep.subr.bf16.mxu0 0
  %154 = vmatpush1.bf16.msra.mxu0 0
  %155 = vmatprep.subr.bf16.mxu0 0
  %156 = vmatpush1.bf16.msra.mxu0 0
  %157 = vmatprep.subr.bf16.mxu0 0
  %158 = vmatpush1.bf16.msra.mxu0 0
  %159 = vmatprep.subr.bf16.mxu0 0
  %160 = vmatpush1.bf16.msra.mxu0 0
  %161 = vmatprep.subr.bf16.mxu0 0
  %162 = vmatpush1.bf16.msra.mxu0 0
  %163 = vmatprep.subr.bf16.mxu0 0
  %164 = vmatpush1.bf16.msra.mxu0 0
  %165 = vmatprep.subr.bf16.mxu0 0
  %166 = vmatpush1.bf16.msra.mxu0 0
  %167 = vmatprep.subr.bf16.mxu0 0
  %168 = vmatpush1.bf16.msra.mxu0 0
  %169 = vmatprep.subr.bf16.mxu0 0
  %170 = vmatpush1.bf16.msra.mxu0 0
  %171 = vmatprep.subr.bf16.mxu0 0
  %172 = vmatpush1.bf16.msra.mxu0 0
  %173 = vmatprep.subr.bf16.mxu0 0
  %174 = vmatpush1.bf16.msra.mxu0 0
  %175 = vmatprep.mubr.bf16.mxu0 0
  %176 = vmatmul.mubr.bf16.gmra.mrb[0].mxu0 %v141
  %v177 = vpop.f32.mrb[0].mxu0
  %v178 = vadd.f32 %v127, %v177
  %v179 = vpop.f32.mrb[0].mxu0
  %v180 = vpop.f32.mrb[0].mxu0
  %v181 = vadd.f32 %v127, %v180
  %v182 = vpop.f32.mrb[0].mxu0
  %183 = vdwg.mxu0
  %186 = vrot.lane.b32.xlu0 %v178, 120
  %v187 = vpop.permute.xlu0 %186
  %188 = vrot.lane.b32.xlu0 %v181, 120
  %v189 = vpop.permute.xlu0 %188
  %192 = vrot.lane.b32.xlu0 %v178, 112
  %v193 = vpop.permute.xlu0 %192
  %194 = vrot.lane.b32.xlu0 %v181, 112
  %v195 = vpop.permute.xlu0 %194
  %198 = vrot.lane.b32.xlu0 %v178, 104
  %v199 = vpop.permute.xlu0 %198
  %200 = vrot.lane.b32.xlu0 %v181, 104
  %v201 = vpop.permute.xlu0 %200
  %v204 = vpack.c.bf16 %v178, %v178
  %v205 = vpack.c.bf16 %v181, %v181
  %v206 = vpack.c.bf16 %v187, %v187
  %v207 = vpack.c.bf16 %v189, %v189
  %v208 = vpack.c.bf16 %v193, %v193
  %v209 = vpack.c.bf16 %v195, %v195
  %v210 = vpack.c.bf16 %v199, %v199
  %v211 = vpack.c.bf16 %v201, %v201
  %213 = vrot.lane.b32.xlu0 %v204, 96
  %v214 = vpop.permute.xlu0 %213
  %vm215 = vcmask 64512
  %v217 = vsel %vm215, %v204, 0
  %v220 = vsel %vm215, %v214, 0
  %222 = vmatprep.subr.bf16.mxu0 0
  %223 = vmatpush1.bf16.xpose.msra.mxu0 %v220
  %224 = vmatprep.subr.bf16.mxu0 0
  %225 = vmatpush1.bf16.xpose.msra.mxu0 0
  %226 = vmatprep.subr.bf16.mxu0 0
  %227 = vmatpush1.bf16.xpose.msra.mxu0 0
  %228 = vmatprep.subr.bf16.mxu0 0
  %229 = vmatpush1.bf16.xpose.msra.mxu0 0
  %230 = vmatprep.subr.bf16.mxu0 0
  %231 = vmatpush1.bf16.xpose.msra.mxu0 0
  %232 = vmatprep.subr.bf16.mxu0 0
  %233 = vmatpush1.bf16.xpose.msra.mxu0 0
  %234 = vmatprep.subr.bf16.mxu0 0
  %235 = vmatpush1.bf16.xpose.msra.mxu0 0
  %236 = vmatprep.subr.bf16.mxu0 0
  %237 = vmatpush1.bf16.xpose.msra.mxu0 0
  %238 = vmatprep.subr.bf16.mxu0 0
  %239 = vmatpush1.bf16.xpose.msra.mxu0 0
  %240 = vmatprep.subr.bf16.mxu0 0
  %241 = vmatpush1.bf16.xpose.msra.mxu0 0
  %242 = vmatprep.subr.bf16.mxu0 0
  %243 = vmatpush1.bf16.xpose.msra.mxu0 0
  %244 = vmatprep.subr.bf16.mxu0 0
  %245 = vmatpush1.bf16.xpose.msra.mxu0 0
  %246 = vmatprep.subr.bf16.mxu0 0
  %247 = vmatpush1.bf16.xpose.msra.mxu0 0
  %248 = vmatprep.subr.bf16.mxu0 0
  %249 = vmatpush1.bf16.xpose.msra.mxu0 0
  %250 = vmatprep.subr.bf16.mxu0 0
  %251 = vmatpush1.bf16.xpose.msra.mxu0 0
  %252 = vmatprep.subr.bf16.mxu0 0
  %253 = vmatpush1.bf16.xpose.msra.mxu0 0
  %254 = vmatprep.mubr.bf16.mxu0 0
  %255 = vmatmul.mubr.bf16.gmra.mrb[0].mxu0 %v217
  %v256 = vpop.f32.mrb[0].mxu0
  %v257 = vadd.f32 0.0, %v256
  %v258 = vpop.f32.mrb[0].mxu0
  %v259 = vpop.f32.mrb[0].mxu0
  %v260 = vpop.f32.mrb[0].mxu0
  %261 = vdwg.mxu0
  %263 = vrot.lane.b32.xlu0 %v205, 96
  %v264 = vpop.permute.xlu0 %263
  %v266 = vsel %vm215, %v205, 0
  %v269 = vsel %vm215, %v264, 0
  %271 = vmatprep.subr.bf16.mxu0 0
  %272 = vmatpush1.bf16.xpose.msra.mxu0 %v269
  %273 = vmatprep.subr.bf16.mxu0 0
  %274 = vmatpush1.bf16.xpose.msra.mxu0 0
  %275 = vmatprep.subr.bf16.mxu0 0
  %276 = vmatpush1.bf16.xpose.msra.mxu0 0
  %277 = vmatprep.subr.bf16.mxu0 0
  %278 = vmatpush1.bf16.xpose.msra.mxu0 0
  %279 = vmatprep.subr.bf16.mxu0 0
  %280 = vmatpush1.bf16.xpose.msra.mxu0 0
  %281 = vmatprep.subr.bf16.mxu0 0
  %282 = vmatpush1.bf16.xpose.msra.mxu0 0
  %283 = vmatprep.subr.bf16.mxu0 0
  %284 = vmatpush1.bf16.xpose.msra.mxu0 0
  %285 = vmatprep.subr.bf16.mxu0 0
  %286 = vmatpush1.bf16.xpose.msra.mxu0 0
  %287 = vmatprep.subr.bf16.mxu0 0
  %288 = vmatpush1.bf16.xpose.msra.mxu0 0
  %289 = vmatprep.subr.bf16.mxu0 0
  %290 = vmatpush1.bf16.xpose.msra.mxu0 0
  %291 = vmatprep.subr.bf16.mxu0 0
  %292 = vmatpush1.bf16.xpose.msra.mxu0 0
  %293 = vmatprep.subr.bf16.mxu0 0
  %294 = vmatpush1.bf16.xpose.msra.mxu0 0
  %295 = vmatprep.subr.bf16.mxu0 0
  %296 = vmatpush1.bf16.xpose.msra.mxu0 0
  %297 = vmatprep.subr.bf16.mxu0 0
  %298 = vmatpush1.bf16.xpose.msra.mxu0 0
  %299 = vmatprep.subr.bf16.mxu0 0
  %300 = vmatpush1.bf16.xpose.msra.mxu0 0
  %301 = vmatprep.subr.bf16.mxu0 0
  %302 = vmatpush1.bf16.xpose.msra.mxu0 0
  %303 = vmatprep.mubr.bf16.mxu0 0
  %304 = vmatmul.mubr.bf16.gmra.mrb[0].mxu0 %v266
  %v305 = vpop.f32.mrb[0].mxu0
  %v306 = vadd.f32 0.0, %v305
  %v307 = vpop.f32.mrb[0].mxu0
  %v308 = vpop.f32.mrb[0].mxu0
  %v309 = vpop.f32.mrb[0].mxu0
  %310 = vdwg.mxu0
  %312 = vrot.lane.b32.xlu0 %v206, 96
  %v313 = vpop.permute.xlu0 %312
  %v315 = vsel %vm215, %v206, 0
  %v318 = vsel %vm215, %v313, 0
  %320 = vmatprep.subr.bf16.mxu0 0
  %321 = vmatpush1.bf16.xpose.msra.mxu0 %v318
  %322 = vmatprep.subr.bf16.mxu0 0
  %323 = vmatpush1.bf16.xpose.msra.mxu0 0
  %324 = vmatprep.subr.bf16.mxu0 0
  %325 = vmatpush1.bf16.xpose.msra.mxu0 0
  %326 = vmatprep.subr.bf16.mxu0 0
  %327 = vmatpush1.bf16.xpose.msra.mxu0 0
  %328 = vmatprep.subr.bf16.mxu0 0
  %329 = vmatpush1.bf16.xpose.msra.mxu0 0
  %330 = vmatprep.subr.bf16.mxu0 0
  %331 = vmatpush1.bf16.xpose.msra.mxu0 0
  %332 = vmatprep.subr.bf16.mxu0 0
  %333 = vmatpush1.bf16.xpose.msra.mxu0 0
  %334 = vmatprep.subr.bf16.mxu0 0
  %335 = vmatpush1.bf16.xpose.msra.mxu0 0
  %336 = vmatprep.subr.bf16.mxu0 0
  %337 = vmatpush1.bf16.xpose.msra.mxu0 0
  %338 = vmatprep.subr.bf16.mxu0 0
  %339 = vmatpush1.bf16.xpose.msra.mxu0 0
  %340 = vmatprep.subr.bf16.mxu0 0
  %341 = vmatpush1.bf16.xpose.msra.mxu0 0
  %342 = vmatprep.subr.bf16.mxu0 0
  %343 = vmatpush1.bf16.xpose.msra.mxu0 0
  %344 = vmatprep.subr.bf16.mxu0 0
  %345 = vmatpush1.bf16.xpose.msra.mxu0 0
  %346 = vmatprep.subr.bf16.mxu0 0
  %347 = vmatpush1.bf16.xpose.msra.mxu0 0
  %348 = vmatprep.subr.bf16.mxu0 0
  %349 = vmatpush1.bf16.xpose.msra.mxu0 0
  %350 = vmatprep.subr.bf16.mxu0 0
  %351 = vmatpush1.bf16.xpose.msra.mxu0 0
  %352 = vmatprep.mubr.bf16.mxu0 0
  %353 = vmatmul.mubr.bf16.gmra.mrb[0].mxu0 %v315
  %v354 = vpop.f32.mrb[0].mxu0
  %v355 = vadd.f32 0.0, %v354
  %v356 = vpop.f32.mrb[0].mxu0
  %v357 = vpop.f32.mrb[0].mxu0
  %v358 = vpop.f32.mrb[0].mxu0
  %359 = vdwg.mxu0
  %361 = vrot.lane.b32.xlu0 %v207, 96
  %v362 = vpop.permute.xlu0 %361
  %v364 = vsel %vm215, %v207, 0
  %v367 = vsel %vm215, %v362, 0
  %369 = vmatprep.subr.bf16.mxu0 0
  %370 = vmatpush1.bf16.xpose.msra.mxu0 %v367
  %371 = vmatprep.subr.bf16.mxu0 0
  %372 = vmatpush1.bf16.xpose.msra.mxu0 0
  %373 = vmatprep.subr.bf16.mxu0 0
  %374 = vmatpush1.bf16.xpose.msra.mxu0 0
  %375 = vmatprep.subr.bf16.mxu0 0
  %376 = vmatpush1.bf16.xpose.msra.mxu0 0
  %377 = vmatprep.subr.bf16.mxu0 0
  %378 = vmatpush1.bf16.xpose.msra.mxu0 0
  %379 = vmatprep.subr.bf16.mxu0 0
  %380 = vmatpush1.bf16.xpose.msra.mxu0 0
  %381 = vmatprep.subr.bf16.mxu0 0
  %382 = vmatpush1.bf16.xpose.msra.mxu0 0
  %383 = vmatprep.subr.bf16.mxu0 0
  %384 = vmatpush1.bf16.xpose.msra.mxu0 0
  %385 = vmatprep.subr.bf16.mxu0 0
  %386 = vmatpush1.bf16.xpose.msra.mxu0 0
  %387 = vmatprep.subr.bf16.mxu0 0
  %388 = vmatpush1.bf16.xpose.msra.mxu0 0
  %389 = vmatprep.subr.bf16.mxu0 0
  %390 = vmatpush1.bf16.xpose.msra.mxu0 0
  %391 = vmatprep.subr.bf16.mxu0 0
  %392 = vmatpush1.bf16.xpose.msra.mxu0 0
  %393 = vmatprep.subr.bf16.mxu0 0
  %394 = vmatpush1.bf16.xpose.msra.mxu0 0
  %395 = vmatprep.subr.bf16.mxu0 0
  %396 = vmatpush1.bf16.xpose.msra.mxu0 0
  %397 = vmatprep.subr.bf16.mxu0 0
  %398 = vmatpush1.bf16.xpose.msra.mxu0 0
  %399 = vmatprep.subr.bf16.mxu0 0
  %400 = vmatpush1.bf16.xpose.msra.mxu0 0
  %401 = vmatprep.mubr.bf16.mxu0 0
  %402 = vmatmul.mubr.bf16.gmra.mrb[0].mxu0 %v364
  %v403 = vpop.f32.mrb[0].mxu0
  %v404 = vadd.f32 0.0, %v403
  %v405 = vpop.f32.mrb[0].mxu0
  %v406 = vpop.f32.mrb[0].mxu0
  %v407 = vpop.f32.mrb[0].mxu0
  %408 = vdwg.mxu0
  %410 = vrot.lane.b32.xlu0 %v208, 96
  %v411 = vpop.permute.xlu0 %410
  %v413 = vsel %vm215, %v208, 0
  %v416 = vsel %vm215, %v411, 0
  %418 = vmatprep.subr.bf16.mxu0 0
  %419 = vmatpush1.bf16.xpose.msra.mxu0 %v416
  %420 = vmatprep.subr.bf16.mxu0 0
  %421 = vmatpush1.bf16.xpose.msra.mxu0 0
  %422 = vmatprep.subr.bf16.mxu0 0
  %423 = vmatpush1.bf16.xpose.msra.mxu0 0
  %424 = vmatprep.subr.bf16.mxu0 0
  %425 = vmatpush1.bf16.xpose.msra.mxu0 0
  %426 = vmatprep.subr.bf16.mxu0 0
  %427 = vmatpush1.bf16.xpose.msra.mxu0 0
  %428 = vmatprep.subr.bf16.mxu0 0
  %429 = vmatpush1.bf16.xpose.msra.mxu0 0
  %430 = vmatprep.subr.bf16.mxu0 0
  %431 = vmatpush1.bf16.xpose.msra.mxu0 0
  %432 = vmatprep.subr.bf16.mxu0 0
  %433 = vmatpush1.bf16.xpose.msra.mxu0 0
  %434 = vmatprep.subr.bf16.mxu0 0
  %435 = vmatpush1.bf16.xpose.msra.mxu0 0
  %436 = vmatprep.subr.bf16.mxu0 0
  %437 = vmatpush1.bf16.xpose.msra.mxu0 0
  %438 = vmatprep.subr.bf16.mxu0 0
  %439 = vmatpush1.bf16.xpose.msra.mxu0 0
  %440 = vmatprep.subr.bf16.mxu0 0
  %441 = vmatpush1.bf16.xpose.msra.mxu0 0
  %442 = vmatprep.subr.bf16.mxu0 0
  %443 = vmatpush1.bf16.xpose.msra.mxu0 0
  %444 = vmatprep.subr.bf16.mxu0 0
  %445 = vmatpush1.bf16.xpose.msra.mxu0 0
  %446 = vmatprep.subr.bf16.mxu0 0
  %447 = vmatpush1.bf16.xpose.msra.mxu0 0
  %448 = vmatprep.subr.bf16.mxu0 0
  %449 = vmatpush1.bf16.xpose.msra.mxu0 0
  %450 = vmatprep.mubr.bf16.mxu0 0
  %451 = vmatmul.mubr.bf16.gmra.mrb[0].mxu0 %v413
  %v452 = vpop.f32.mrb[0].mxu0
  %v453 = vadd.f32 0.0, %v452
  %v454 = vpop.f32.mrb[0].mxu0
  %v455 = vpop.f32.mrb[0].mxu0
  %v456 = vpop.f32.mrb[0].mxu0
  %457 = vdwg.mxu0
  %459 = vrot.lane.b32.xlu0 %v209, 96
  %v460 = vpop.permute.xlu0 %459
  %v462 = vsel %vm215, %v209, 0
  %v465 = vsel %vm215, %v460, 0
  %467 = vmatprep.subr.bf16.mxu0 0
  %468 = vmatpush1.bf16.xpose.msra.mxu0 %v465
  %469 = vmatprep.subr.bf16.mxu0 0
  %470 = vmatpush1.bf16.xpose.msra.mxu0 0
  %471 = vmatprep.subr.bf16.mxu0 0
  %472 = vmatpush1.bf16.xpose.msra.mxu0 0
  %473 = vmatprep.subr.bf16.mxu0 0
  %474 = vmatpush1.bf16.xpose.msra.mxu0 0
  %475 = vmatprep.subr.bf16.mxu0 0
  %476 = vmatpush1.bf16.xpose.msra.mxu0 0
  %477 = vmatprep.subr.bf16.mxu0 0
  %478 = vmatpush1.bf16.xpose.msra.mxu0 0
  %479 = vmatprep.subr.bf16.mxu0 0
  %480 = vmatpush1.bf16.xpose.msra.mxu0 0
  %481 = vmatprep.subr.bf16.mxu0 0
  %482 = vmatpush1.bf16.xpose.msra.mxu0 0
  %483 = vmatprep.subr.bf16.mxu0 0
  %484 = vmatpush1.bf16.xpose.msra.mxu0 0
  %485 = vmatprep.subr.bf16.mxu0 0
  %486 = vmatpush1.bf16.xpose.msra.mxu0 0
  %487 = vmatprep.subr.bf16.mxu0 0
  %488 = vmatpush1.bf16.xpose.msra.mxu0 0
  %489 = vmatprep.subr.bf16.mxu0 0
  %490 = vmatpush1.bf16.xpose.msra.mxu0 0
  %491 = vmatprep.subr.bf16.mxu0 0
  %492 = vmatpush1.bf16.xpose.msra.mxu0 0
  %493 = vmatprep.subr.bf16.mxu0 0
  %494 = vmatpush1.bf16.xpose.msra.mxu0 0
  %495 = vmatprep.subr.bf16.mxu0 0
  %496 = vmatpush1.bf16.xpose.msra.mxu0 0
  %497 = vmatprep.subr.bf16.mxu0 0
  %498 = vmatpush1.bf16.xpose.msra.mxu0 0
  %499 = vmatprep.mubr.bf16.mxu0 0
  %500 = vmatmul.mubr.bf16.gmra.mrb[0].mxu0 %v462
  %v501 = vpop.f32.mrb[0].mxu0
  %v502 = vadd.f32 0.0, %v501
  %v503 = vpop.f32.mrb[0].mxu0
  %v504 = vpop.f32.mrb[0].mxu0
  %v505 = vpop.f32.mrb[0].mxu0
  %506 = vdwg.mxu0
  %508 = vrot.lane.b32.xlu0 %v210, 96
  %v509 = vpop.permute.xlu0 %508
  %v511 = vsel %vm215, %v210, 0
  %v514 = vsel %vm215, %v509, 0
  %516 = vmatprep.subr.bf16.mxu0 0
  %517 = vmatpush1.bf16.xpose.msra.mxu0 %v514
  %518 = vmatprep.subr.bf16.mxu0 0
  %519 = vmatpush1.bf16.xpose.msra.mxu0 0
  %520 = vmatprep.subr.bf16.mxu0 0
  %521 = vmatpush1.bf16.xpose.msra.mxu0 0
  %522 = vmatprep.subr.bf16.mxu0 0
  %523 = vmatpush1.bf16.xpose.msra.mxu0 0
  %524 = vmatprep.subr.bf16.mxu0 0
  %525 = vmatpush1.bf16.xpose.msra.mxu0 0
  %526 = vmatprep.subr.bf16.mxu0 0
  %527 = vmatpush1.bf16.xpose.msra.mxu0 0
  %528 = vmatprep.subr.bf16.mxu0 0
  %529 = vmatpush1.bf16.xpose.msra.mxu0 0
  %530 = vmatprep.subr.bf16.mxu0 0
  %531 = vmatpush1.bf16.xpose.msra.mxu0 0
  %532 = vmatprep.subr.bf16.mxu0 0
  %533 = vmatpush1.bf16.xpose.msra.mxu0 0
  %534 = vmatprep.subr.bf16.mxu0 0
  %535 = vmatpush1.bf16.xpose.msra.mxu0 0
  %536 = vmatprep.subr.bf16.mxu0 0
  %537 = vmatpush1.bf16.xpose.msra.mxu0 0
  %538 = vmatprep.subr.bf16.mxu0 0
  %539 = vmatpush1.bf16.xpose.msra.mxu0 0
  %540 = vmatprep.subr.bf16.mxu0 0
  %541 = vmatpush1.bf16.xpose.msra.mxu0 0
  %542 = vmatprep.subr.bf16.mxu0 0
  %543 = vmatpush1.bf16.xpose.msra.mxu0 0
  %544 = vmatprep.subr.bf16.mxu0 0
  %545 = vmatpush1.bf16.xpose.msra.mxu0 0
  %546 = vmatprep.subr.bf16.mxu0 0
  %547 = vmatpush1.bf16.xpose.msra.mxu0 0
  %548 = vmatprep.mubr.bf16.mxu0 0
  %549 = vmatmul.mubr.bf16.gmra.mrb[0].mxu0 %v511
  %v550 = vpop.f32.mrb[0].mxu0
  %v551 = vadd.f32 0.0, %v550
  %v552 = vpop.f32.mrb[0].mxu0
  %v553 = vpop.f32.mrb[0].mxu0
  %v554 = vpop.f32.mrb[0].mxu0
  %555 = vdwg.mxu0
  %557 = vrot.lane.b32.xlu0 %v211, 96
  %v558 = vpop.permute.xlu0 %557
  %v560 = vsel %vm215, %v211, 0
  %v563 = vsel %vm215, %v558, 0
  %565 = vmatprep.subr.bf16.mxu0 0
  %566 = vmatpush1.bf16.xpose.msra.mxu0 %v563
  %567 = vmatprep.subr.bf16.mxu0 0
  %568 = vmatpush1.bf16.xpose.msra.mxu0 0
  %569 = vmatprep.subr.bf16.mxu0 0
  %570 = vmatpush1.bf16.xpose.msra.mxu0 0
  %571 = vmatprep.subr.bf16.mxu0 0
  %572 = vmatpush1.bf16.xpose.msra.mxu0 0
  %573 = vmatprep.subr.bf16.mxu0 0
  %574 = vmatpush1.bf16.xpose.msra.mxu0 0
  %575 = vmatprep.subr.bf16.mxu0 0
  %576 = vmatpush1.bf16.xpose.msra.mxu0 0
  %577 = vmatprep.subr.bf16.mxu0 0
  %578 = vmatpush1.bf16.xpose.msra.mxu0 0
  %579 = vmatprep.subr.bf16.mxu0 0
  %580 = vmatpush1.bf16.xpose.msra.mxu0 0
  %581 = vmatprep.subr.bf16.mxu0 0
  %582 = vmatpush1.bf16.xpose.msra.mxu0 0
  %583 = vmatprep.subr.bf16.mxu0 0
  %584 = vmatpush1.bf16.xpose.msra.mxu0 0
  %585 = vmatprep.subr.bf16.mxu0 0
  %586 = vmatpush1.bf16.xpose.msra.mxu0 0
  %587 = vmatprep.subr.bf16.mxu0 0
  %588 = vmatpush1.bf16.xpose.msra.mxu0 0
  %589 = vmatprep.subr.bf16.mxu0 0
  %590 = vmatpush1.bf16.xpose.msra.mxu0 0
  %591 = vmatprep.subr.bf16.mxu0 0
  %592 = vmatpush1.bf16.xpose.msra.mxu0 0
  %593 = vmatprep.subr.bf16.mxu0 0
  %594 = vmatpush1.bf16.xpose.msra.mxu0 0
  %595 = vmatprep.subr.bf16.mxu0 0
  %596 = vmatpush1.bf16.xpose.msra.mxu0 0
  %597 = vmatprep.mubr.bf16.mxu0 0
  %598 = vmatmul.mubr.bf16.gmra.mrb[0].mxu0 %v560
  %v599 = vpop.f32.mrb[0].mxu0
  %v600 = vadd.f32 0.0, %v599
  %v601 = vpop.f32.mrb[0].mxu0
  %v602 = vpop.f32.mrb[0].mxu0
  %v603 = vpop.f32.mrb[0].mxu0
  %604 = vdwg.mxu0
  %v605 = vmul.f32 %v257, 0.35355338
  %v606 = vmul.f32 %v306, 0.35355338
  %v607 = vmul.f32 %v355, 0.35355338
  %v608 = vmul.f32 %v404, 0.35355338
  %v609 = vmul.f32 %v453, 0.35355338
  %v610 = vmul.f32 %v502, 0.35355338
  %v611 = vmul.f32 %v551, 0.35355338
  %v612 = vmul.f32 %v600, 0.35355338
  %v613 = vadd.f32 %v605, %v62
  %v614 = vadd.f32 %v606, %v63
  %v615 = vadd.f32 %v607, %v64
  %v616 = vadd.f32 %v608, %v65
  %v617 = vadd.f32 %v609, %v66
  %v618 = vadd.f32 %v610, %v67
  %v619 = vadd.f32 %v611, %v68
  %v620 = vadd.f32 %v612, %v69
  %v621 = vsel %vm215, %v613, -inf
  %622 = vmax.xlane.f32.xlu0 %v621
  %v623 = vpop.xlane.xlu0 %622
  %v624 = vsel %vm215, %v614, -inf
  %625 = vmax.xlane.f32.xlu0 %v624
  %v626 = vpop.xlane.xlu0 %625
  %v627 = vsel %vm215, %v615, -inf
  %628 = vmax.xlane.f32.xlu0 %v627
  %v629 = vpop.xlane.xlu0 %628
  %v630 = vsel %vm215, %v616, -inf
  %631 = vmax.xlane.f32.xlu0 %v630
  %v632 = vpop.xlane.xlu0 %631
  %v633 = vsel %vm215, %v617, -inf
  %634 = vmax.xlane.f32.xlu0 %v633
  %v635 = vpop.xlane.xlu0 %634
  %v636 = vsel %vm215, %v618, -inf
  %637 = vmax.xlane.f32.xlu0 %v636
  %v638 = vpop.xlane.xlu0 %637
  %v639 = vsel %vm215, %v619, -inf
  %640 = vmax.xlane.f32.xlu0 %v639
  %v641 = vpop.xlane.xlu0 %640
  %v642 = vsel %vm215, %v620, -inf
  %643 = vmax.xlane.f32.xlu0 %v642
  %v644 = vpop.xlane.xlu0 %643
  %v645 = vsub.f32 %v613, %v623
  %v646 = vsub.f32 %v614, %v626
  %v647 = vsub.f32 %v615, %v629
  %v648 = vsub.f32 %v616, %v632
  %v649 = vsub.f32 %v617, %v635
  %v650 = vsub.f32 %v618, %v638
  %v651 = vsub.f32 %v619, %v641
  %v652 = vsub.f32 %v620, %v644
  %v653 = vmul.f32 %v645, 1.442695
  %v654 = vpow.pop %v653
  %v655 = vmul.f32 %v646, 1.442695
  %v656 = vpow.pop %v655
  %v657 = vmul.f32 %v647, 1.442695
  %v658 = vpow.pop %v657
  %v659 = vmul.f32 %v648, 1.442695
  %v660 = vpow.pop %v659
  %v661 = vmul.f32 %v649, 1.442695
  %v662 = vpow.pop %v661
  %v663 = vmul.f32 %v650, 1.442695
  %v664 = vpow.pop %v663
  %v665 = vmul.f32 %v651, 1.442695
  %v666 = vpow.pop %v665
  %v667 = vmul.f32 %v652, 1.442695
  %v668 = vpow.pop %v667
  %v669 = vsel %vm215, %v654, 0.0
  %670 = vadd.xlane.f32.xlu0 %v669
  %v671 = vpop.xlane.xlu0 %670
  %v672 = vsel %vm215, %v656, 0.0
  %673 = vadd.xlane.f32.xlu0 %v672
  %v674 = vpop.xlane.xlu0 %673
  %v675 = vsel %vm215, %v658, 0.0
  %676 = vadd.xlane.f32.xlu0 %v675
  %v677 = vpop.xlane.xlu0 %676
  %v678 = vsel %vm215, %v660, 0.0
  %679 = vadd.xlane.f32.xlu0 %v678
  %v680 = vpop.xlane.xlu0 %679
  %v681 = vsel %vm215, %v662, 0.0
  %682 = vadd.xlane.f32.xlu0 %v681
  %v683 = vpop.xlane.xlu0 %682
  %v684 = vsel %vm215, %v664, 0.0
  %685 = vadd.xlane.f32.xlu0 %v684
  %v686 = vpop.xlane.xlu0 %685
  %v687 = vsel %vm215, %v666, 0.0
  %688 = vadd.xlane.f32.xlu0 %v687
  %v689 = vpop.xlane.xlu0 %688
  %v690 = vsel %vm215, %v668, 0.0
  %691 = vadd.xlane.f32.xlu0 %v690
  %v692 = vpop.xlane.xlu0 %691
  %v693 = vrcp.pop %v671
  %v694 = vrcp.pop %v674
  %v695 = vrcp.pop %v677
  %v696 = vrcp.pop %v680
  %v697 = vrcp.pop %v683
  %v698 = vrcp.pop %v686
  %v699 = vrcp.pop %v689
  %v700 = vrcp.pop %v692
  %v701 = vmul.f32 %v654, %v693
  %v702 = vmul.f32 %v656, %v694
  %v703 = vmul.f32 %v658, %v695
  %v704 = vmul.f32 %v660, %v696
  %v705 = vmul.f32 %v662, %v697
  %v706 = vmul.f32 %v664, %v698
  %v707 = vmul.f32 %v666, %v699
  %v708 = vmul.f32 %v668, %v700
  %v709 = vpack.c.bf16 %v701, %v701
  %v710 = vpack.c.bf16 %v702, %v702
  %v711 = vpack.c.bf16 %v703, %v703
  %v712 = vpack.c.bf16 %v704, %v704
  %v713 = vpack.c.bf16 %v705, %v705
  %v714 = vpack.c.bf16 %v706, %v706
  %v715 = vpack.c.bf16 %v707, %v707
  %v716 = vpack.c.bf16 %v708, %v708
  %717 = vrot.lane.b32.xlu0 %v204, 64
  %v718 = vpop.permute.xlu0 %717
  %v720 = vsel %vm215, %v709, 0
  %vm722 = vcmask 1043456
  %v724 = vsel %vm722, %v718, 0
  %726 = vmatprep.subr.bf16.mxu0 0
  %727 = vmatpush1.bf16.msra.mxu0 %v724
  %728 = vmatprep.subr.bf16.mxu0 0
  %729 = vmatpush1.bf16.msra.mxu0 0
  %730 = vmatprep.subr.bf16.mxu0 0
  %731 = vmatpush1.bf16.msra.mxu0 0
  %732 = vmatprep.subr.bf16.mxu0 0
  %733 = vmatpush1.bf16.msra.mxu0 0
  %734 = vmatprep.subr.bf16.mxu0 0
  %735 = vmatpush1.bf16.msra.mxu0 0
  %736 = vmatprep.subr.bf16.mxu0 0
  %737 = vmatpush1.bf16.msra.mxu0 0
  %738 = vmatprep.subr.bf16.mxu0 0
  %739 = vmatpush1.bf16.msra.mxu0 0
  %740 = vmatprep.subr.bf16.mxu0 0
  %741 = vmatpush1.bf16.msra.mxu0 0
  %742 = vmatprep.subr.bf16.mxu0 0
  %743 = vmatpush1.bf16.msra.mxu0 0
  %744 = vmatprep.subr.bf16.mxu0 0
  %745 = vmatpush1.bf16.msra.mxu0 0
  %746 = vmatprep.subr.bf16.mxu0 0
  %747 = vmatpush1.bf16.msra.mxu0 0
  %748 = vmatprep.subr.bf16.mxu0 0
  %749 = vmatpush1.bf16.msra.mxu0 0
  %750 = vmatprep.subr.bf16.mxu0 0
  %751 = vmatpush1.bf16.msra.mxu0 0
  %752 = vmatprep.subr.bf16.mxu0 0
  %753 = vmatpush1.bf16.msra.mxu0 0
  %754 = vmatprep.subr.bf16.mxu0 0
  %755 = vmatpush1.bf16.msra.mxu0 0
  %756 = vmatprep.subr.bf16.mxu0 0
  %757 = vmatpush1.bf16.msra.mxu0 0
  %758 = vmatprep.mubr.bf16.mxu0 0
  %759 = vmatmul.mubr.bf16.gmra.mrb[0].mxu0 %v720
  %v760 = vpop.f32.mrb[0].mxu0
  %v761 = vadd.f32 0.0, %v760
  %v762 = vpop.f32.mrb[0].mxu0
  %v763 = vpop.f32.mrb[0].mxu0
  %v764 = vpop.f32.mrb[0].mxu0
  %765 = vdwg.mxu0
  %766 = vrot.lane.b32.xlu0 %v205, 64
  %v767 = vpop.permute.xlu0 %766
  %v769 = vsel %vm215, %v710, 0
  %v772 = vsel %vm722, %v767, 0
  %774 = vmatprep.subr.bf16.mxu0 0
  %775 = vmatpush1.bf16.msra.mxu0 %v772
  %776 = vmatprep.subr.bf16.mxu0 0
  %777 = vmatpush1.bf16.msra.mxu0 0
  %778 = vmatprep.subr.bf16.mxu0 0
  %779 = vmatpush1.bf16.msra.mxu0 0
  %780 = vmatprep.subr.bf16.mxu0 0
  %781 = vmatpush1.bf16.msra.mxu0 0
  %782 = vmatprep.subr.bf16.mxu0 0
  %783 = vmatpush1.bf16.msra.mxu0 0
  %784 = vmatprep.subr.bf16.mxu0 0
  %785 = vmatpush1.bf16.msra.mxu0 0
  %786 = vmatprep.subr.bf16.mxu0 0
  %787 = vmatpush1.bf16.msra.mxu0 0
  %788 = vmatprep.subr.bf16.mxu0 0
  %789 = vmatpush1.bf16.msra.mxu0 0
  %790 = vmatprep.subr.bf16.mxu0 0
  %791 = vmatpush1.bf16.msra.mxu0 0
  %792 = vmatprep.subr.bf16.mxu0 0
  %793 = vmatpush1.bf16.msra.mxu0 0
  %794 = vmatprep.subr.bf16.mxu0 0
  %795 = vmatpush1.bf16.msra.mxu0 0
  %796 = vmatprep.subr.bf16.mxu0 0
  %797 = vmatpush1.bf16.msra.mxu0 0
  %798 = vmatprep.subr.bf16.mxu0 0
  %799 = vmatpush1.bf16.msra.mxu0 0
  %800 = vmatprep.subr.bf16.mxu0 0
  %801 = vmatpush1.bf16.msra.mxu0 0
  %802 = vmatprep.subr.bf16.mxu0 0
  %803 = vmatpush1.bf16.msra.mxu0 0
  %804 = vmatprep.subr.bf16.mxu0 0
  %805 = vmatpush1.bf16.msra.mxu0 0
  %806 = vmatprep.mubr.bf16.mxu0 0
  %807 = vmatmul.mubr.bf16.gmra.mrb[0].mxu0 %v769
  %v808 = vpop.f32.mrb[0].mxu0
  %v809 = vadd.f32 0.0, %v808
  %v810 = vpop.f32.mrb[0].mxu0
  %v811 = vpop.f32.mrb[0].mxu0
  %v812 = vpop.f32.mrb[0].mxu0
  %813 = vdwg.mxu0
  %814 = vrot.lane.b32.xlu0 %v206, 64
  %v815 = vpop.permute.xlu0 %814
  %v817 = vsel %vm215, %v711, 0
  %v820 = vsel %vm722, %v815, 0
  %822 = vmatprep.subr.bf16.mxu0 0
  %823 = vmatpush1.bf16.msra.mxu0 %v820
  %824 = vmatprep.subr.bf16.mxu0 0
  %825 = vmatpush1.bf16.msra.mxu0 0
  %826 = vmatprep.subr.bf16.mxu0 0
  %827 = vmatpush1.bf16.msra.mxu0 0
  %828 = vmatprep.subr.bf16.mxu0 0
  %829 = vmatpush1.bf16.msra.mxu0 0
  %830 = vmatprep.subr.bf16.mxu0 0
  %831 = vmatpush1.bf16.msra.mxu0 0
  %832 = vmatprep.subr.bf16.mxu0 0
  %833 = vmatpush1.bf16.msra.mxu0 0
  %834 = vmatprep.subr.bf16.mxu0 0
  %835 = vmatpush1.bf16.msra.mxu0 0
  %836 = vmatprep.subr.bf16.mxu0 0
  %837 = vmatpush1.bf16.msra.mxu0 0
  %838 = vmatprep.subr.bf16.mxu0 0
  %839 = vmatpush1.bf16.msra.mxu0 0
  %840 = vmatprep.subr.bf16.mxu0 0
  %841 = vmatpush1.bf16.msra.mxu0 0
  %842 = vmatprep.subr.bf16.mxu0 0
  %843 = vmatpush1.bf16.msra.mxu0 0
  %844 = vmatprep.subr.bf16.mxu0 0
  %845 = vmatpush1.bf16.msra.mxu0 0
  %846 = vmatprep.subr.bf16.mxu0 0
  %847 = vmatpush1.bf16.msra.mxu0 0
  %848 = vmatprep.subr.bf16.mxu0 0
  %849 = vmatpush1.bf16.msra.mxu0 0
  %850 = vmatprep.subr.bf16.mxu0 0
  %851 = vmatpush1.bf16.msra.mxu0 0
  %852 = vmatprep.subr.bf16.mxu0 0
  %853 = vmatpush1.bf16.msra.mxu0 0
  %854 = vmatprep.mubr.bf16.mxu0 0
  %855 = vmatmul.mubr.bf16.gmra.mrb[0].mxu0 %v817
  %v856 = vpop.f32.mrb[0].mxu0
  %v857 = vadd.f32 0.0, %v856
  %v858 = vpop.f32.mrb[0].mxu0
  %v859 = vpop.f32.mrb[0].mxu0
  %v860 = vpop.f32.mrb[0].mxu0
  %861 = vdwg.mxu0
  %862 = vrot.lane.b32.xlu0 %v207, 64
  %v863 = vpop.permute.xlu0 %862
  %v865 = vsel %vm215, %v712, 0
  %v868 = vsel %vm722, %v863, 0
  %870 = vmatprep.subr.bf16.mxu0 0
  %871 = vmatpush1.bf16.msra.mxu0 %v868
  %872 = vmatprep.subr.bf16.mxu0 0
  %873 = vmatpush1.bf16.msra.mxu0 0
  %874 = vmatprep.subr.bf16.mxu0 0
  %875 = vmatpush1.bf16.msra.mxu0 0
  %876 = vmatprep.subr.bf16.mxu0 0
  %877 = vmatpush1.bf16.msra.mxu0 0
  %878 = vmatprep.subr.bf16.mxu0 0
  %879 = vmatpush1.bf16.msra.mxu0 0
  %880 = vmatprep.subr.bf16.mxu0 0
  %881 = vmatpush1.bf16.msra.mxu0 0
  %882 = vmatprep.subr.bf16.mxu0 0
  %883 = vmatpush1.bf16.msra.mxu0 0
  %884 = vmatprep.subr.bf16.mxu0 0
  %885 = vmatpush1.bf16.msra.mxu0 0
  %886 = vmatprep.subr.bf16.mxu0 0
  %887 = vmatpush1.bf16.msra.mxu0 0
  %888 = vmatprep.subr.bf16.mxu0 0
  %889 = vmatpush1.bf16.msra.mxu0 0
  %890 = vmatprep.subr.bf16.mxu0 0
  %891 = vmatpush1.bf16.msra.mxu0 0
  %892 = vmatprep.subr.bf16.mxu0 0
  %893 = vmatpush1.bf16.msra.mxu0 0
  %894 = vmatprep.subr.bf16.mxu0 0
  %895 = vmatpush1.bf16.msra.mxu0 0
  %896 = vmatprep.subr.bf16.mxu0 0
  %897 = vmatpush1.bf16.msra.mxu0 0
  %898 = vmatprep.subr.bf16.mxu0 0
  %899 = vmatpush1.bf16.msra.mxu0 0
  %900 = vmatprep.subr.bf16.mxu0 0
  %901 = vmatpush1.bf16.msra.mxu0 0
  %902 = vmatprep.mubr.bf16.mxu0 0
  %903 = vmatmul.mubr.bf16.gmra.mrb[0].mxu0 %v865
  %v904 = vpop.f32.mrb[0].mxu0
  %v905 = vadd.f32 0.0, %v904
  %v906 = vpop.f32.mrb[0].mxu0
  %v907 = vpop.f32.mrb[0].mxu0
  %v908 = vpop.f32.mrb[0].mxu0
  %909 = vdwg.mxu0
  %910 = vrot.lane.b32.xlu0 %v208, 64
  %v911 = vpop.permute.xlu0 %910
  %v913 = vsel %vm215, %v713, 0
  %v916 = vsel %vm722, %v911, 0
  %918 = vmatprep.subr.bf16.mxu0 0
  %919 = vmatpush1.bf16.msra.mxu0 %v916
  %920 = vmatprep.subr.bf16.mxu0 0
  %921 = vmatpush1.bf16.msra.mxu0 0
  %922 = vmatprep.subr.bf16.mxu0 0
  %923 = vmatpush1.bf16.msra.mxu0 0
  %924 = vmatprep.subr.bf16.mxu0 0
  %925 = vmatpush1.bf16.msra.mxu0 0
  %926 = vmatprep.subr.bf16.mxu0 0
  %927 = vmatpush1.bf16.msra.mxu0 0
  %928 = vmatprep.subr.bf16.mxu0 0
  %929 = vmatpush1.bf16.msra.mxu0 0
  %930 = vmatprep.subr.bf16.mxu0 0
  %931 = vmatpush1.bf16.msra.mxu0 0
  %932 = vmatprep.subr.bf16.mxu0 0
  %933 = vmatpush1.bf16.msra.mxu0 0
  %934 = vmatprep.subr.bf16.mxu0 0
  %935 = vmatpush1.bf16.msra.mxu0 0
  %936 = vmatprep.subr.bf16.mxu0 0
  %937 = vmatpush1.bf16.msra.mxu0 0
  %938 = vmatprep.subr.bf16.mxu0 0
  %939 = vmatpush1.bf16.msra.mxu0 0
  %940 = vmatprep.subr.bf16.mxu0 0
  %941 = vmatpush1.bf16.msra.mxu0 0
  %942 = vmatprep.subr.bf16.mxu0 0
  %943 = vmatpush1.bf16.msra.mxu0 0
  %944 = vmatprep.subr.bf16.mxu0 0
  %945 = vmatpush1.bf16.msra.mxu0 0
  %946 = vmatprep.subr.bf16.mxu0 0
  %947 = vmatpush1.bf16.msra.mxu0 0
  %948 = vmatprep.subr.bf16.mxu0 0
  %949 = vmatpush1.bf16.msra.mxu0 0
  %950 = vmatprep.mubr.bf16.mxu0 0
  %951 = vmatmul.mubr.bf16.gmra.mrb[0].mxu0 %v913
  %v952 = vpop.f32.mrb[0].mxu0
  %v953 = vadd.f32 0.0, %v952
  %v954 = vpop.f32.mrb[0].mxu0
  %v955 = vpop.f32.mrb[0].mxu0
  %v956 = vpop.f32.mrb[0].mxu0
  %957 = vdwg.mxu0
  %958 = vrot.lane.b32.xlu0 %v209, 64
  %v959 = vpop.permute.xlu0 %958
  %v961 = vsel %vm215, %v714, 0
  %v964 = vsel %vm722, %v959, 0
  %966 = vmatprep.subr.bf16.mxu0 0
  %967 = vmatpush1.bf16.msra.mxu0 %v964
  %968 = vmatprep.subr.bf16.mxu0 0
  %969 = vmatpush1.bf16.msra.mxu0 0
  %970 = vmatprep.subr.bf16.mxu0 0
  %971 = vmatpush1.bf16.msra.mxu0 0
  %972 = vmatprep.subr.bf16.mxu0 0
  %973 = vmatpush1.bf16.msra.mxu0 0
  %974 = vmatprep.subr.bf16.mxu0 0
  %975 = vmatpush1.bf16.msra.mxu0 0
  %976 = vmatprep.subr.bf16.mxu0 0
  %977 = vmatpush1.bf16.msra.mxu0 0
  %978 = vmatprep.subr.bf16.mxu0 0
  %979 = vmatpush1.bf16.msra.mxu0 0
  %980 = vmatprep.subr.bf16.mxu0 0
  %981 = vmatpush1.bf16.msra.mxu0 0
  %982 = vmatprep.subr.bf16.mxu0 0
  %983 = vmatpush1.bf16.msra.mxu0 0
  %984 = vmatprep.subr.bf16.mxu0 0
  %985 = vmatpush1.bf16.msra.mxu0 0
  %986 = vmatprep.subr.bf16.mxu0 0
  %987 = vmatpush1.bf16.msra.mxu0 0
  %988 = vmatprep.subr.bf16.mxu0 0
  %989 = vmatpush1.bf16.msra.mxu0 0
  %990 = vmatprep.subr.bf16.mxu0 0
  %991 = vmatpush1.bf16.msra.mxu0 0
  %992 = vmatprep.subr.bf16.mxu0 0
  %993 = vmatpush1.bf16.msra.mxu0 0
  %994 = vmatprep.subr.bf16.mxu0 0
  %995 = vmatpush1.bf16.msra.mxu0 0
  %996 = vmatprep.subr.bf16.mxu0 0
  %997 = vmatpush1.bf16.msra.mxu0 0
  %998 = vmatprep.mubr.bf16.mxu0 0
  %999 = vmatmul.mubr.bf16.gmra.mrb[0].mxu0 %v961
  %v1000 = vpop.f32.mrb[0].mxu0
  %v1001 = vadd.f32 0.0, %v1000
  %v1002 = vpop.f32.mrb[0].mxu0
  %v1003 = vpop.f32.mrb[0].mxu0
  %v1004 = vpop.f32.mrb[0].mxu0
  %1005 = vdwg.mxu0
  %1006 = vrot.lane.b32.xlu0 %v210, 64
  %v1007 = vpop.permute.xlu0 %1006
  %v1009 = vsel %vm215, %v715, 0
  %v1012 = vsel %vm722, %v1007, 0
  %1014 = vmatprep.subr.bf16.mxu0 0
  %1015 = vmatpush1.bf16.msra.mxu0 %v1012
  %1016 = vmatprep.subr.bf16.mxu0 0
  %1017 = vmatpush1.bf16.msra.mxu0 0
  %1018 = vmatprep.subr.bf16.mxu0 0
  %1019 = vmatpush1.bf16.msra.mxu0 0
  %1020 = vmatprep.subr.bf16.mxu0 0
  %1021 = vmatpush1.bf16.msra.mxu0 0
  %1022 = vmatprep.subr.bf16.mxu0 0
  %1023 = vmatpush1.bf16.msra.mxu0 0
  %1024 = vmatprep.subr.bf16.mxu0 0
  %1025 = vmatpush1.bf16.msra.mxu0 0
  %1026 = vmatprep.subr.bf16.mxu0 0
  %1027 = vmatpush1.bf16.msra.mxu0 0
  %1028 = vmatprep.subr.bf16.mxu0 0
  %1029 = vmatpush1.bf16.msra.mxu0 0
  %1030 = vmatprep.subr.bf16.mxu0 0
  %1031 = vmatpush1.bf16.msra.mxu0 0
  %1032 = vmatprep.subr.bf16.mxu0 0
  %1033 = vmatpush1.bf16.msra.mxu0 0
  %1034 = vmatprep.subr.bf16.mxu0 0
  %1035 = vmatpush1.bf16.msra.mxu0 0
  %1036 = vmatprep.subr.bf16.mxu0 0
  %1037 = vmatpush1.bf16.msra.mxu0 0
  %1038 = vmatprep.subr.bf16.mxu0 0
  %1039 = vmatpush1.bf16.msra.mxu0 0
  %1040 = vmatprep.subr.bf16.mxu0 0
  %1041 = vmatpush1.bf16.msra.mxu0 0
  %1042 = vmatprep.subr.bf16.mxu0 0
  %1043 = vmatpush1.bf16.msra.mxu0 0
  %1044 = vmatprep.subr.bf16.mxu0 0
  %1045 = vmatpush1.bf16.msra.mxu0 0
  %1046 = vmatprep.mubr.bf16.mxu0 0
  %1047 = vmatmul.mubr.bf16.gmra.mrb[0].mxu0 %v1009
  %v1048 = vpop.f32.mrb[0].mxu0
  %v1049 = vadd.f32 0.0, %v1048
  %v1050 = vpop.f32.mrb[0].mxu0
  %v1051 = vpop.f32.mrb[0].mxu0
  %v1052 = vpop.f32.mrb[0].mxu0
  %1053 = vdwg.mxu0
  %1054 = vrot.lane.b32.xlu0 %v211, 64
  %v1055 = vpop.permute.xlu0 %1054
  %v1057 = vsel %vm215, %v716, 0
  %v1060 = vsel %vm722, %v1055, 0
  %1062 = vmatprep.subr.bf16.mxu0 0
  %1063 = vmatpush1.bf16.msra.mxu0 %v1060
  %1064 = vmatprep.subr.bf16.mxu0 0
  %1065 = vmatpush1.bf16.msra.mxu0 0
  %1066 = vmatprep.subr.bf16.mxu0 0
  %1067 = vmatpush1.bf16.msra.mxu0 0
  %1068 = vmatprep.subr.bf16.mxu0 0
  %1069 = vmatpush1.bf16.msra.mxu0 0
  %1070 = vmatprep.subr.bf16.mxu0 0
  %1071 = vmatpush1.bf16.msra.mxu0 0
  %1072 = vmatprep.subr.bf16.mxu0 0
  %1073 = vmatpush1.bf16.msra.mxu0 0
  %1074 = vmatprep.subr.bf16.mxu0 0
  %1075 = vmatpush1.bf16.msra.mxu0 0
  %1076 = vmatprep.subr.bf16.mxu0 0
  %1077 = vmatpush1.bf16.msra.mxu0 0
  %1078 = vmatprep.subr.bf16.mxu0 0
  %1079 = vmatpush1.bf16.msra.mxu0 0
  %1080 = vmatprep.subr.bf16.mxu0 0
  %1081 = vmatpush1.bf16.msra.mxu0 0
  %1082 = vmatprep.subr.bf16.mxu0 0
  %1083 = vmatpush1.bf16.msra.mxu0 0
  %1084 = vmatprep.subr.bf16.mxu0 0
  %1085 = vmatpush1.bf16.msra.mxu0 0
  %1086 = vmatprep.subr.bf16.mxu0 0
  %1087 = vmatpush1.bf16.msra.mxu0 0
  %1088 = vmatprep.subr.bf16.mxu0 0
  %1089 = vmatpush1.bf16.msra.mxu0 0
  %1090 = vmatprep.subr.bf16.mxu0 0
  %1091 = vmatpush1.bf16.msra.mxu0 0
  %1092 = vmatprep.subr.bf16.mxu0 0
  %1093 = vmatpush1.bf16.msra.mxu0 0
  %1094 = vmatprep.mubr.bf16.mxu0 0
  %1095 = vmatmul.mubr.bf16.gmra.mrb[0].mxu0 %v1057
  %v1096 = vpop.f32.mrb[0].mxu0
  %v1097 = vadd.f32 0.0, %v1096
  %v1098 = vpop.f32.mrb[0].mxu0
  %v1099 = vpop.f32.mrb[0].mxu0
  %v1100 = vpop.f32.mrb[0].mxu0
  %1101 = vdwg.mxu0
  %1104 = vrot.lane.b32.xlu0 %v857, 8
  %v1105 = vpop.permute.xlu0 %1104
  %1106 = vrot.lane.b32.xlu0 %v905, 8
  %v1107 = vpop.permute.xlu0 %1106
  %1112 = vrot.lane.b32.xlu0 %v953, 16
  %v1113 = vpop.permute.xlu0 %1112
  %1114 = vrot.lane.b32.xlu0 %v1001, 16
  %v1115 = vpop.permute.xlu0 %1114
  %1120 = vrot.lane.b32.xlu0 %v1049, 24
  %v1121 = vpop.permute.xlu0 %1120
  %1122 = vrot.lane.b32.xlu0 %v1097, 24
  %v1123 = vpop.permute.xlu0 %1122
  %v1126 = vsel %vm215, %v761, %v1105
  %v1127 = vsel %vm215, %v809, %v1107
  %vm1128 = vcmask 130048
  %v1129 = vsel %vm1128, %v1126, %v1113
  %v1130 = vsel %vm1128, %v1127, %v1115
  %vm1131 = vcmask 195584
  %v1132 = vsel %vm1131, %v1129, %v1121
  %v1133 = vsel %vm1131, %v1130, %v1123
  %v1134 = vpack.c.bf16 %v1133, %v1132
  %v1135 = vld [vmem:[%s6] sm:$0xf]
  %v1136 = vld [vmem:[%s6 + $0x4] sm:$0xf]
  %v1137 = vld [vmem:[%s6 + $0x8] sm:$0xf]
  %v1138 = vld [vmem:[%s6 + $0xc] sm:$0xf]
  %v1139 = vld [vmem:[%s7] sm:$0x1]
  %v1140 = vlaneseq
  %v1141 = vshrl.u32 %v1140, 7
  %v1142 = vsub.s32 0, %v1141
  %v1143 = vrot.slane %v1139, %v1142
  %v1148 = vunpack.c.l.b16 %v1135
  %v1149 = vunpack.c.l.b16 %v1136
  %v1150 = vunpack.c.l.b16 %v1137
  %v1151 = vunpack.c.l.b16 %v1138
  %v1152 = vpack.c.b16 %v1149, %v1148
  %v1153 = vpack.c.b16 %v1151, %v1150
  %v1157 = vsel %vm74, %v1134, 0
  %1159 = vmatprep.subr.bf16.mxu0 0
  %1160 = vmatpush1.bf16.msra.mxu0 %v1152
  %1161 = vmatprep.subr.bf16.mxu0 0
  %1162 = vmatpush1.bf16.msra.mxu0 %v1153
  %1163 = vmatprep.subr.bf16.mxu0 0
  %1164 = vmatpush1.bf16.msra.mxu0 0
  %1165 = vmatprep.subr.bf16.mxu0 0
  %1166 = vmatpush1.bf16.msra.mxu0 0
  %1167 = vmatprep.subr.bf16.mxu0 0
  %1168 = vmatpush1.bf16.msra.mxu0 0
  %1169 = vmatprep.subr.bf16.mxu0 0
  %1170 = vmatpush1.bf16.msra.mxu0 0
  %1171 = vmatprep.subr.bf16.mxu0 0
  %1172 = vmatpush1.bf16.msra.mxu0 0
  %1173 = vmatprep.subr.bf16.mxu0 0
  %1174 = vmatpush1.bf16.msra.mxu0 0
  %1175 = vmatprep.subr.bf16.mxu0 0
  %1176 = vmatpush1.bf16.msra.mxu0 0
  %1177 = vmatprep.subr.bf16.mxu0 0
  %1178 = vmatpush1.bf16.msra.mxu0 0
  %1179 = vmatprep.subr.bf16.mxu0 0
  %1180 = vmatpush1.bf16.msra.mxu0 0
  %1181 = vmatprep.subr.bf16.mxu0 0
  %1182 = vmatpush1.bf16.msra.mxu0 0
  %1183 = vmatprep.subr.bf16.mxu0 0
  %1184 = vmatpush1.bf16.msra.mxu0 0
  %1185 = vmatprep.subr.bf16.mxu0 0
  %1186 = vmatpush1.bf16.msra.mxu0 0
  %1187 = vmatprep.subr.bf16.mxu0 0
  %1188 = vmatpush1.bf16.msra.mxu0 0
  %1189 = vmatprep.subr.bf16.mxu0 0
  %1190 = vmatpush1.bf16.msra.mxu0 0
  %1191 = vmatprep.mubr.bf16.mxu0 0
  %1192 = vmatmul.mubr.bf16.gmra.mrb[0].mxu0 %v1157
  %v1193 = vpop.f32.mrb[0].mxu0
  %v1194 = vadd.f32 %v1143, %v1193
  %v1195 = vpop.f32.mrb[0].mxu0
  %v1196 = vpop.f32.mrb[0].mxu0
  %v1197 = vadd.f32 %v1143, %v1196
  %v1198 = vpop.f32.mrb[0].mxu0
  %1199 = vdwg.mxu0
  %v1200 = vadd.f32 %v116, %v1194
  %v1201 = vadd.f32 %v117, %v1197
  %v1202 = vld [vmem:[%s8] sm:$0x1]
  %v1203 = vld [vmem:[%s9] sm:$0x1]
  %v1204 = vsel %vm74, %v1200, 0.0
  %1205 = vadd.xlane.f32.xlu0 %v1204
  %v1206 = vpop.xlane.xlu0 %1205
  %v1207 = vsel %vm74, %v1201, 0.0
  %1208 = vadd.xlane.f32.xlu0 %v1207
  %v1209 = vpop.xlane.xlu0 %1208
  %v1210 = vmul.f32 %v1206, %v81
  %v1211 = vmul.f32 %v1209, %v81
  %v1212 = vsub.f32 %v1200, %v1210
  %v1213 = vsub.f32 %v1201, %v1211
  %v1214 = vmul.f32 %v1212, %v1212
  %v1215 = vmul.f32 %v1213, %v1213
  %v1216 = vsel %vm74, %v1214, 0.0
  %1217 = vadd.xlane.f32.xlu0 %v1216
  %v1218 = vpop.xlane.xlu0 %1217
  %v1219 = vsel %vm74, %v1215, 0.0
  %1220 = vadd.xlane.f32.xlu0 %v1219
  %v1221 = vpop.xlane.xlu0 %1220
  %v1222 = vmul.f32 %v1218, %v81
  %v1223 = vmul.f32 %v1221, %v81
  %v1224 = vadd.f32 %v1222, 1e-12
  %v1225 = vadd.f32 %v1223, 1e-12
  %v1226 = vrsqrt.pop %v1224
  %v1227 = vrsqrt.pop %v1225
  %v1228 = vmul.f32 %v1212, %v1226
  %v1229 = vmul.f32 %v1213, %v1227
  %v1230 = vlaneseq
  %v1231 = vshrl.u32 %v1230, 7
  %v1232 = vsub.s32 0, %v1231
  %v1233 = vrot.slane %v1202, %v1232
  %v1234 = vmul.f32 %v1228, %v1233
  %v1235 = vmul.f32 %v1229, %v1233
  %v1236 = vlaneseq
  %v1237 = vshrl.u32 %v1236, 7
  %v1238 = vsub.s32 0, %v1237
  %v1239 = vrot.slane %v1203, %v1238
  %v1240 = vadd.f32 %v1234, %v1239
  %v1241 = vadd.f32 %v1235, %v1239
  %v1242 = vpack.c.bf16 %v1241, %v1240
  %v1243 = vld [vmem:[%s10] sm:$0xf]
  %v1244 = vld [vmem:[%s10 + $0x4] sm:$0xf]
  %v1245 = vld [vmem:[%s10 + $0x8] sm:$0xf]
  %v1246 = vld [vmem:[%s10 + $0xc] sm:$0xf]
  %v1247 = vld [vmem:[%s11] sm:$0x1]
  %v1248 = vlaneseq
  %v1249 = vshrl.u32 %v1248, 7
  %v1250 = vsub.s32 0, %v1249
  %v1251 = vrot.slane %v1247, %v1250
  %v1256 = vunpack.c.l.b16 %v1243
  %v1257 = vunpack.c.l.b16 %v1244
  %v1258 = vunpack.c.l.b16 %v1245
  %v1259 = vunpack.c.l.b16 %v1246
  %v1260 = vpack.c.b16 %v1257, %v1256
  %v1261 = vpack.c.b16 %v1259, %v1258
  %v1265 = vsel %vm74, %v1242, 0
  %1267 = vmatprep.subr.bf16.mxu0 0
  %1268 = vmatpush1.bf16.msra.mxu0 %v1260
  %1269 = vmatprep.subr.bf16.mxu0 0
  %1270 = vmatpush1.bf16.msra.mxu0 %v1261
  %1271 = vmatprep.subr.bf16.mxu0 0
  %1272 = vmatpush1.bf16.msra.mxu0 0
  %1273 = vmatprep.subr.bf16.mxu0 0
  %1274 = vmatpush1.bf16.msra.mxu0 0
  %1275 = vmatprep.subr.bf16.mxu0 0
  %1276 = vmatpush1.bf16.msra.mxu0 0
  %1277 = vmatprep.subr.bf16.mxu0 0
  %1278 = vmatpush1.bf16.msra.mxu0 0
  %1279 = vmatprep.subr.bf16.mxu0 0
  %1280 = vmatpush1.bf16.msra.mxu0 0
  %1281 = vmatprep.subr.bf16.mxu0 0
  %1282 = vmatpush1.bf16.msra.mxu0 0
  %1283 = vmatprep.subr.bf16.mxu0 0
  %1284 = vmatpush1.bf16.msra.mxu0 0
  %1285 = vmatprep.subr.bf16.mxu0 0
  %1286 = vmatpush1.bf16.msra.mxu0 0
  %1287 = vmatprep.subr.bf16.mxu0 0
  %1288 = vmatpush1.bf16.msra.mxu0 0
  %1289 = vmatprep.subr.bf16.mxu0 0
  %1290 = vmatpush1.bf16.msra.mxu0 0
  %1291 = vmatprep.subr.bf16.mxu0 0
  %1292 = vmatpush1.bf16.msra.mxu0 0
  %1293 = vmatprep.subr.bf16.mxu0 0
  %1294 = vmatpush1.bf16.msra.mxu0 0
  %1295 = vmatprep.subr.bf16.mxu0 0
  %1296 = vmatpush1.bf16.msra.mxu0 0
  %1297 = vmatprep.subr.bf16.mxu0 0
  %1298 = vmatpush1.bf16.msra.mxu0 0
  %1299 = vmatprep.mubr.bf16.mxu0 0
  %1300 = vmatmul.mubr.bf16.gmra.mrb[0].mxu0 %v1265
  %v1301 = vpop.f32.mrb[0].mxu0
  %v1302 = vadd.f32 %v1251, %v1301
  %v1303 = vpop.f32.mrb[0].mxu0
  %v1304 = vpop.f32.mrb[0].mxu0
  %v1305 = vadd.f32 %v1251, %v1304
  %v1306 = vpop.f32.mrb[0].mxu0
  %1307 = vdwg.mxu0
  %v1308 = vmul.f32 %v1302, 0.5
  %v1309 = vmul.f32 %v1305, 0.5
  %v1310 = vmul.f32 %v1302, 0.044715
  %v1311 = vmul.f32 %v1305, 0.044715
  %v1312 = vmul.f32 %v1310, %v1302
  %v1313 = vmul.f32 %v1311, %v1305
  %v1314 = vmul.f32 %v1312, %v1302
  %v1315 = vmul.f32 %v1313, %v1305
  %v1316 = vadd.f32 %v1302, %v1314
  %v1317 = vadd.f32 %v1305, %v1315
  %v1318 = vmul.f32 %v1316, 0.7978846
  %v1319 = vmul.f32 %v1317, 0.7978846
  %v1320 = vtanh.pop %v1318
  %v1321 = vtanh.pop %v1319
  %v1322 = vadd.f32 %v1320, 1.0
  %v1323 = vadd.f32 %v1321, 1.0
  %v1324 = vmul.f32 %v1308, %v1322
  %v1325 = vmul.f32 %v1309, %v1323
  %v1326 = vpack.c.bf16 %v1325, %v1324
  %v1327 = vld [vmem:[%s12] sm:$0xf]
  %v1328 = vld [vmem:[%s12 + $0x4] sm:$0xf]
  %v1329 = vld [vmem:[%s12 + $0x8] sm:$0xf]
  %v1330 = vld [vmem:[%s12 + $0xc] sm:$0xf]
  %v1331 = vld [vmem:[%s12 + $0x10] sm:$0xf]
  %v1332 = vld [vmem:[%s12 + $0x14] sm:$0xf]
  %v1333 = vld [vmem:[%s12 + $0x18] sm:$0xf]
  %v1334 = vld [vmem:[%s12 + $0x1c] sm:$0xf]
  %v1335 = vld [vmem:[%s13] sm:$0x1]
  %v1336 = vlaneseq
  %v1337 = vshrl.u32 %v1336, 7
  %v1338 = vsub.s32 0, %v1337
  %v1339 = vrot.slane %v1335, %v1338
  %v1348 = vunpack.c.l.b16 %v1327
  %v1349 = vunpack.c.l.b16 %v1328
  %v1350 = vunpack.c.l.b16 %v1329
  %v1351 = vunpack.c.l.b16 %v1330
  %v1352 = vunpack.c.l.b16 %v1331
  %v1353 = vunpack.c.l.b16 %v1332
  %v1354 = vunpack.c.l.b16 %v1333
  %v1355 = vunpack.c.l.b16 %v1334
  %v1356 = vpack.c.b16 %v1349, %v1348
  %v1357 = vpack.c.b16 %v1351, %v1350
  %v1358 = vpack.c.b16 %v1353, %v1352
  %v1359 = vpack.c.b16 %v1355, %v1354
  %vm1364 = vcmask 523264
  %v1366 = vsel %vm1364, %v1326, 0
  %1368 = vmatprep.subr.bf16.mxu0 0
  %1369 = vmatpush1.bf16.msra.mxu0 %v1356
  %1370 = vmatprep.subr.bf16.mxu0 0
  %1371 = vmatpush1.bf16.msra.mxu0 %v1357
  %1372 = vmatprep.subr.bf16.mxu0 0
  %1373 = vmatpush1.bf16.msra.mxu0 %v1358
  %1374 = vmatprep.subr.bf16.mxu0 0
  %1375 = vmatpush1.bf16.msra.mxu0 %v1359
  %1376 = vmatprep.subr.bf16.mxu0 0
  %1377 = vmatpush1.bf16.msra.mxu0 0
  %1378 = vmatprep.subr.bf16.mxu0 0
  %1379 = vmatpush1.bf16.msra.mxu0 0
  %1380 = vmatprep.subr.bf16.mxu0 0
  %1381 = vmatpush1.bf16.msra.mxu0 0
  %1382 = vmatprep.subr.bf16.mxu0 0
  %1383 = vmatpush1.bf16.msra.mxu0 0
  %1384 = vmatprep.subr.bf16.mxu0 0
  %1385 = vmatpush1.bf16.msra.mxu0 0
  %1386 = vmatprep.subr.bf16.mxu0 0
  %1387 = vmatpush1.bf16.msra.mxu0 0
  %1388 = vmatprep.subr.bf16.mxu0 0
  %1389 = vmatpush1.bf16.msra.mxu0 0
  %1390 = vmatprep.subr.bf16.mxu0 0
  %1391 = vmatpush1.bf16.msra.mxu0 0
  %1392 = vmatprep.subr.bf16.mxu0 0
  %1393 = vmatpush1.bf16.msra.mxu0 0
  %1394 = vmatprep.subr.bf16.mxu0 0
  %1395 = vmatpush1.bf16.msra.mxu0 0
  %1396 = vmatprep.subr.bf16.mxu0 0
  %1397 = vmatpush1.bf16.msra.mxu0 0
  %1398 = vmatprep.subr.bf16.mxu0 0
  %1399 = vmatpush1.bf16.msra.mxu0 0
  %1400 = vmatprep.mubr.bf16.mxu0 0
  %1401 = vmatmul.mubr.bf16.gmra.mrb[0].mxu0 %v1366
  %v1402 = vpop.f32.mrb[0].mxu0
  %v1403 = vadd.f32 %v1339, %v1402
  %v1404 = vpop.f32.mrb[0].mxu0
  %v1405 = vpop.f32.mrb[0].mxu0
  %v1406 = vadd.f32 %v1339, %v1405
  %v1407 = vpop.f32.mrb[0].mxu0
  %1408 = vdwg.mxu0
  %v1409 = vadd.f32 %v1240, %v1403
  %v1410 = vadd.f32 %v1241, %v1406
  %v1411 = vld [vmem:[%s14] sm:$0x1]
  %v1412 = vld [vmem:[%s15] sm:$0x1]
  %v1413 = vsel %vm74, %v1409, 0.0
  %1414 = vadd.xlane.f32.xlu0 %v1413
  %v1415 = vpop.xlane.xlu0 %1414
  %v1416 = vsel %vm74, %v1410, 0.0
  %1417 = vadd.xlane.f32.xlu0 %v1416
  %v1418 = vpop.xlane.xlu0 %1417
  %v1419 = vmul.f32 %v1415, %v81
  %v1420 = vmul.f32 %v1418, %v81
  %v1421 = vsub.f32 %v1409, %v1419
  %v1422 = vsub.f32 %v1410, %v1420
  %v1423 = vmul.f32 %v1421, %v1421
  %v1424 = vmul.f32 %v1422, %v1422
  %v1425 = vsel %vm74, %v1423, 0.0
  %1426 = vadd.xlane.f32.xlu0 %v1425
  %v1427 = vpop.xlane.xlu0 %1426
  %v1428 = vsel %vm74, %v1424, 0.0
  %1429 = vadd.xlane.f32.xlu0 %v1428
  %v1430 = vpop.xlane.xlu0 %1429
  %v1431 = vmul.f32 %v1427, %v81
  %v1432 = vmul.f32 %v1430, %v81
  %v1433 = vadd.f32 %v1431, 1e-12
  %v1434 = vadd.f32 %v1432, 1e-12
  %v1435 = vrsqrt.pop %v1433
  %v1436 = vrsqrt.pop %v1434
  %v1437 = vmul.f32 %v1421, %v1435
  %v1438 = vmul.f32 %v1422, %v1436
  %v1439 = vlaneseq
  %v1440 = vshrl.u32 %v1439, 7
  %v1441 = vsub.s32 0, %v1440
  %v1442 = vrot.slane %v1411, %v1441
  %v1443 = vmul.f32 %v1437, %v1442
  %v1444 = vmul.f32 %v1438, %v1442
  %v1445 = vlaneseq
  %v1446 = vshrl.u32 %v1445, 7
  %v1447 = vsub.s32 0, %v1446
  %v1448 = vrot.slane %v1412, %v1447
  %v1449 = vadd.f32 %v1443, %v1448
  %v1450 = vadd.f32 %v1444, %v1448
  %v1451 = vpack.c.bf16 %v1450, %v1449
  %s1452 = scalar_lea.vmem %s4, 16
  %v1453 = vld [vmem:[%s1452] sm:$0xf]
  %v1454 = vld [vmem:[%s1452 + $0x4] sm:$0xf]
  %v1455 = vld [vmem:[%s1452 + $0x8] sm:$0xf]
  %v1456 = vld [vmem:[%s1452 + $0xc] sm:$0xf]
  %v1457 = vld [vmem:[%s5 + $0x1] sm:$0x1]
  %v1458 = vlaneseq
  %v1459 = vshrl.u32 %v1458, 7
  %v1460 = vsub.s32 0, %v1459
  %v1461 = vrot.slane %v1457, %v1460
  %v1466 = vunpack.c.l.b16 %v1453
  %v1467 = vunpack.c.l.b16 %v1454
  %v1468 = vunpack.c.l.b16 %v1455
  %v1469 = vunpack.c.l.b16 %v1456
  %v1470 = vpack.c.b16 %v1467, %v1466
  %v1471 = vpack.c.b16 %v1469, %v1468
  %v1475 = vsel %vm74, %v1451, 0
  %1477 = vmatprep.subr.bf16.mxu0 0
  %1478 = vmatpush1.bf16.msra.mxu0 %v1470
  %1479 = vmatprep.subr.bf16.mxu0 0
  %1480 = vmatpush1.bf16.msra.mxu0 %v1471
  %1481 = vmatprep.subr.bf16.mxu0 0
  %1482 = vmatpush1.bf16.msra.mxu0 0
  %1483 = vmatprep.subr.bf16.mxu0 0
  %1484 = vmatpush1.bf16.msra.mxu0 0
  %1485 = vmatprep.subr.bf16.mxu0 0
  %1486 = vmatpush1.bf16.msra.mxu0 0
  %1487 = vmatprep.subr.bf16.mxu0 0
  %1488 = vmatpush1.bf16.msra.mxu0 0
  %1489 = vmatprep.subr.bf16.mxu0 0
  %1490 = vmatpush1.bf16.msra.mxu0 0
  %1491 = vmatprep.subr.bf16.mxu0 0
  %1492 = vmatpush1.bf16.msra.mxu0 0
  %1493 = vmatprep.subr.bf16.mxu0 0
  %1494 = vmatpush1.bf16.msra.mxu0 0
  %1495 = vmatprep.subr.bf16.mxu0 0
  %1496 = vmatpush1.bf16.msra.mxu0 0
  %1497 = vmatprep.subr.bf16.mxu0 0
  %1498 = vmatpush1.bf16.msra.mxu0 0
  %1499 = vmatprep.subr.bf16.mxu0 0
  %1500 = vmatpush1.bf16.msra.mxu0 0
  %1501 = vmatprep.subr.bf16.mxu0 0
  %1502 = vmatpush1.bf16.msra.mxu0 0
  %1503 = vmatprep.subr.bf16.mxu0 0
  %1504 = vmatpush1.bf16.msra.mxu0 0
  %1505 = vmatprep.subr.bf16.mxu0 0
  %1506 = vmatpush1.bf16.msra.mxu0 0
  %1507 = vmatprep.subr.bf16.mxu0 0
  %1508 = vmatpush1.bf16.msra.mxu0 0
  %1509 = vmatprep.mubr.bf16.mxu0 0
  %1510 = vmatmul.mubr.bf16.gmra.mrb[0].mxu0 %v1475
  %v1511 = vpop.f32.mrb[0].mxu0
  %v1512 = vadd.f32 %v1461, %v1511
  %v1513 = vpop.f32.mrb[0].mxu0
  %v1514 = vpop.f32.mrb[0].mxu0
  %v1515 = vadd.f32 %v1461, %v1514
  %v1516 = vpop.f32.mrb[0].mxu0
  %1517 = vdwg.mxu0
  %1520 = vrot.lane.b32.xlu0 %v1512, 120
  %v1521 = vpop.permute.xlu0 %1520
  %1522 = vrot.lane.b32.xlu0 %v1515, 120
  %v1523 = vpop.permute.xlu0 %1522
  %1526 = vrot.lane.b32.xlu0 %v1512, 112
  %v1527 = vpop.permute.xlu0 %1526
  %1528 = vrot.lane.b32.xlu0 %v1515, 112
  %v1529 = vpop.permute.xlu0 %1528
  %1532 = vrot.lane.b32.xlu0 %v1512, 104
  %v1533 = vpop.permute.xlu0 %1532
  %1534 = vrot.lane.b32.xlu0 %v1515, 104
  %v1535 = vpop.permute.xlu0 %1534
  %v1538 = vpack.c.bf16 %v1512, %v1512
  %v1539 = vpack.c.bf16 %v1515, %v1515
  %v1540 = vpack.c.bf16 %v1521, %v1521
  %v1541 = vpack.c.bf16 %v1523, %v1523
  %v1542 = vpack.c.bf16 %v1527, %v1527
  %v1543 = vpack.c.bf16 %v1529, %v1529
  %v1544 = vpack.c.bf16 %v1533, %v1533
  %v1545 = vpack.c.bf16 %v1535, %v1535
  %1547 = vrot.lane.b32.xlu0 %v1538, 96
  %v1548 = vpop.permute.xlu0 %1547
  %v1550 = vsel %vm215, %v1538, 0
  %v1553 = vsel %vm215, %v1548, 0
  %1555 = vmatprep.subr.bf16.mxu0 0
  %1556 = vmatpush1.bf16.xpose.msra.mxu0 %v1553
  %1557 = vmatprep.subr.bf16.mxu0 0
  %1558 = vmatpush1.bf16.xpose.msra.mxu0 0
  %1559 = vmatprep.subr.bf16.mxu0 0
  %1560 = vmatpush1.bf16.xpose.msra.mxu0 0
  %1561 = vmatprep.subr.bf16.mxu0 0
  %1562 = vmatpush1.bf16.xpose.msra.mxu0 0
  %1563 = vmatprep.subr.bf16.mxu0 0
  %1564 = vmatpush1.bf16.xpose.msra.mxu0 0
  %1565 = vmatprep.subr.bf16.mxu0 0
  %1566 = vmatpush1.bf16.xpose.msra.mxu0 0
  %1567 = vmatprep.subr.bf16.mxu0 0
  %1568 = vmatpush1.bf16.xpose.msra.mxu0 0
  %1569 = vmatprep.subr.bf16.mxu0 0
  %1570 = vmatpush1.bf16.xpose.msra.mxu0 0
  %1571 = vmatprep.subr.bf16.mxu0 0
  %1572 = vmatpush1.bf16.xpose.msra.mxu0 0
  %1573 = vmatprep.subr.bf16.mxu0 0
  %1574 = vmatpush1.bf16.xpose.msra.mxu0 0
  %1575 = vmatprep.subr.bf16.mxu0 0
  %1576 = vmatpush1.bf16.xpose.msra.mxu0 0
  %1577 = vmatprep.subr.bf16.mxu0 0
  %1578 = vmatpush1.bf16.xpose.msra.mxu0 0
  %1579 = vmatprep.subr.bf16.mxu0 0
  %1580 = vmatpush1.bf16.xpose.msra.mxu0 0
  %1581 = vmatprep.subr.bf16.mxu0 0
  %1582 = vmatpush1.bf16.xpose.msra.mxu0 0
  %1583 = vmatprep.subr.bf16.mxu0 0
  %1584 = vmatpush1.bf16.xpose.msra.mxu0 0
  %1585 = vmatprep.subr.bf16.mxu0 0
  %1586 = vmatpush1.bf16.xpose.msra.mxu0 0
  %1587 = vmatprep.mubr.bf16.mxu0 0
  %1588 = vmatmul.mubr.bf16.gmra.mrb[0].mxu0 %v1550
  %v1589 = vpop.f32.mrb[0].mxu0
  %v1590 = vadd.f32 0.0, %v1589
  %v1591 = vpop.f32.mrb[0].mxu0
  %v1592 = vpop.f32.mrb[0].mxu0
  %v1593 = vpop.f32.mrb[0].mxu0
  %1594 = vdwg.mxu0
  %1596 = vrot.lane.b32.xlu0 %v1539, 96
  %v1597 = vpop.permute.xlu0 %1596
  %v1599 = vsel %vm215, %v1539, 0
  %v1602 = vsel %vm215, %v1597, 0
  %1604 = vmatprep.subr.bf16.mxu0 0
  %1605 = vmatpush1.bf16.xpose.msra.mxu0 %v1602
  %1606 = vmatprep.subr.bf16.mxu0 0
  %1607 = vmatpush1.bf16.xpose.msra.mxu0 0
  %1608 = vmatprep.subr.bf16.mxu0 0
  %1609 = vmatpush1.bf16.xpose.msra.mxu0 0
  %1610 = vmatprep.subr.bf16.mxu0 0
  %1611 = vmatpush1.bf16.xpose.msra.mxu0 0
  %1612 = vmatprep.subr.bf16.mxu0 0
  %1613 = vmatpush1.bf16.xpose.msra.mxu0 0
  %1614 = vmatprep.subr.bf16.mxu0 0
  %1615 = vmatpush1.bf16.xpose.msra.mxu0 0
  %1616 = vmatprep.subr.bf16.mxu0 0
  %1617 = vmatpush1.bf16.xpose.msra.mxu0 0
  %1618 = vmatprep.subr.bf16.mxu0 0
  %1619 = vmatpush1.bf16.xpose.msra.mxu0 0
  %1620 = vmatprep.subr.bf16.mxu0 0
  %1621 = vmatpush1.bf16.xpose.msra.mxu0 0
  %1622 = vmatprep.subr.bf16.mxu0 0
  %1623 = vmatpush1.bf16.xpose.msra.mxu0 0
  %1624 = vmatprep.subr.bf16.mxu0 0
  %1625 = vmatpush1.bf16.xpose.msra.mxu0 0
  %1626 = vmatprep.subr.bf16.mxu0 0
  %1627 = vmatpush1.bf16.xpose.msra.mxu0 0
  %1628 = vmatprep.subr.bf16.mxu0 0
  %1629 = vmatpush1.bf16.xpose.msra.mxu0 0
  %1630 = vmatprep.subr.bf16.mxu0 0
  %1631 = vmatpush1.bf16.xpose.msra.mxu0 0
  %1632 = vmatprep.subr.bf16.mxu0 0
  %1633 = vmatpush1.bf16.xpose.msra.mxu0 0
  %1634 = vmatprep.subr.bf16.mxu0 0
  %1635 = vmatpush1.bf16.xpose.msra.mxu0 0
  %1636 = vmatprep.mubr.bf16.mxu0 0
  %1637 = vmatmul.mubr.bf16.gmra.mrb[0].mxu0 %v1599
  %v1638 = vpop.f32.mrb[0].mxu0
  %v1639 = vadd.f32 0.0, %v1638
  %v1640 = vpop.f32.mrb[0].mxu0
  %v1641 = vpop.f32.mrb[0].mxu0
  %v1642 = vpop.f32.mrb[0].mxu0
  %1643 = vdwg.mxu0
  %1645 = vrot.lane.b32.xlu0 %v1540, 96
  %v1646 = vpop.permute.xlu0 %1645
  %v1648 = vsel %vm215, %v1540, 0
  %v1651 = vsel %vm215, %v1646, 0
  %1653 = vmatprep.subr.bf16.mxu0 0
  %1654 = vmatpush1.bf16.xpose.msra.mxu0 %v1651
  %1655 = vmatprep.subr.bf16.mxu0 0
  %1656 = vmatpush1.bf16.xpose.msra.mxu0 0
  %1657 = vmatprep.subr.bf16.mxu0 0
  %1658 = vmatpush1.bf16.xpose.msra.mxu0 0
  %1659 = vmatprep.subr.bf16.mxu0 0
  %1660 = vmatpush1.bf16.xpose.msra.mxu0 0
  %1661 = vmatprep.subr.bf16.mxu0 0
  %1662 = vmatpush1.bf16.xpose.msra.mxu0 0
  %1663 = vmatprep.subr.bf16.mxu0 0
  %1664 = vmatpush1.bf16.xpose.msra.mxu0 0
  %1665 = vmatprep.subr.bf16.mxu0 0
  %1666 = vmatpush1.bf16.xpose.msra.mxu0 0
  %1667 = vmatprep.subr.bf16.mxu0 0
  %1668 = vmatpush1.bf16.xpose.msra.mxu0 0
  %1669 = vmatprep.subr.bf16.mxu0 0
  %1670 = vmatpush1.bf16.xpose.msra.mxu0 0
  %1671 = vmatprep.subr.bf16.mxu0 0
  %1672 = vmatpush1.bf16.xpose.msra.mxu0 0
  %1673 = vmatprep.subr.bf16.mxu0 0
  %1674 = vmatpush1.bf16.xpose.msra.mxu0 0
  %1675 = vmatprep.subr.bf16.mxu0 0
  %1676 = vmatpush1.bf16.xpose.msra.mxu0 0
  %1677 = vmatprep.subr.bf16.mxu0 0
  %1678 = vmatpush1.bf16.xpose.msra.mxu0 0
  %1679 = vmatprep.subr.bf16.mxu0 0
  %1680 = vmatpush1.bf16.xpose.msra.mxu0 0
  %1681 = vmatprep.subr.bf16.mxu0 0
  %1682 = vmatpush1.bf16.xpose.msra.mxu0 0
  %1683 = vmatprep.subr.bf16.mxu0 0
  %1684 = vmatpush1.bf16.xpose.msra.mxu0 0
  %1685 = vmatprep.mubr.bf16.mxu0 0
  %1686 = vmatmul.mubr.bf16.gmra.mrb[0].mxu0 %v1648
  %v1687 = vpop.f32.mrb[0].mxu0
  %v1688 = vadd.f32 0.0, %v1687
  %v1689 = vpop.f32.mrb[0].mxu0
  %v1690 = vpop.f32.mrb[0].mxu0
  %v1691 = vpop.f32.mrb[0].mxu0
  %1692 = vdwg.mxu0
  %1694 = vrot.lane.b32.xlu0 %v1541, 96
  %v1695 = vpop.permute.xlu0 %1694
  %v1697 = vsel %vm215, %v1541, 0
  %v1700 = vsel %vm215, %v1695, 0
  %1702 = vmatprep.subr.bf16.mxu0 0
  %1703 = vmatpush1.bf16.xpose.msra.mxu0 %v1700
  %1704 = vmatprep.subr.bf16.mxu0 0
  %1705 = vmatpush1.bf16.xpose.msra.mxu0 0
  %1706 = vmatprep.subr.bf16.mxu0 0
  %1707 = vmatpush1.bf16.xpose.msra.mxu0 0
  %1708 = vmatprep.subr.bf16.mxu0 0
  %1709 = vmatpush1.bf16.xpose.msra.mxu0 0
  %1710 = vmatprep.subr.bf16.mxu0 0
  %1711 = vmatpush1.bf16.xpose.msra.mxu0 0
  %1712 = vmatprep.subr.bf16.mxu0 0
  %1713 = vmatpush1.bf16.xpose.msra.mxu0 0
  %1714 = vmatprep.subr.bf16.mxu0 0
  %1715 = vmatpush1.bf16.xpose.msra.mxu0 0
  %1716 = vmatprep.subr.bf16.mxu0 0
  %1717 = vmatpush1.bf16.xpose.msra.mxu0 0
  %1718 = vmatprep.subr.bf16.mxu0 0
  %1719 = vmatpush1.bf16.xpose.msra.mxu0 0
  %1720 = vmatprep.subr.bf16.mxu0 0
  %1721 = vmatpush1.bf16.xpose.msra.mxu0 0
  %1722 = vmatprep.subr.bf16.mxu0 0
  %1723 = vmatpush1.bf16.xpose.msra.mxu0 0
  %1724 = vmatprep.subr.bf16.mxu0 0
  %1725 = vmatpush1.bf16.xpose.msra.mxu0 0
  %1726 = vmatprep.subr.bf16.mxu0 0
  %1727 = vmatpush1.bf16.xpose.msra.mxu0 0
  %1728 = vmatprep.subr.bf16.mxu0 0
  %1729 = vmatpush1.bf16.xpose.msra.mxu0 0
  %1730 = vmatprep.subr.bf16.mxu0 0
  %1731 = vmatpush1.bf16.xpose.msra.mxu0 0
  %1732 = vmatprep.subr.bf16.mxu0 0
  %1733 = vmatpush1.bf16.xpose.msra.mxu0 0
  %1734 = vmatprep.mubr.bf16.mxu0 0
  %1735 = vmatmul.mubr.bf16.gmra.mrb[0].mxu0 %v1697
  %v1736 = vpop.f32.mrb[0].mxu0
  %v1737 = vadd.f32 0.0, %v1736
  %v1738 = vpop.f32.mrb[0].mxu0
  %v1739 = vpop.f32.mrb[0].mxu0
  %v1740 = vpop.f32.mrb[0].mxu0
  %1741 = vdwg.mxu0
  %1743 = vrot.lane.b32.xlu0 %v1542, 96
  %v1744 = vpop.permute.xlu0 %1743
  %v1746 = vsel %vm215, %v1542, 0
  %v1749 = vsel %vm215, %v1744, 0
  %1751 = vmatprep.subr.bf16.mxu0 0
  %1752 = vmatpush1.bf16.xpose.msra.mxu0 %v1749
  %1753 = vmatprep.subr.bf16.mxu0 0
  %1754 = vmatpush1.bf16.xpose.msra.mxu0 0
  %1755 = vmatprep.subr.bf16.mxu0 0
  %1756 = vmatpush1.bf16.xpose.msra.mxu0 0
  %1757 = vmatprep.subr.bf16.mxu0 0
  %1758 = vmatpush1.bf16.xpose.msra.mxu0 0
  %1759 = vmatprep.subr.bf16.mxu0 0
  %1760 = vmatpush1.bf16.xpose.msra.mxu0 0
  %1761 = vmatprep.subr.bf16.mxu0 0
  %1762 = vmatpush1.bf16.xpose.msra.mxu0 0
  %1763 = vmatprep.subr.bf16.mxu0 0
  %1764 = vmatpush1.bf16.xpose.msra.mxu0 0
  %1765 = vmatprep.subr.bf16.mxu0 0
  %1766 = vmatpush1.bf16.xpose.msra.mxu0 0
  %1767 = vmatprep.subr.bf16.mxu0 0
  %1768 = vmatpush1.bf16.xpose.msra.mxu0 0
  %1769 = vmatprep.subr.bf16.mxu0 0
  %1770 = vmatpush1.bf16.xpose.msra.mxu0 0
  %1771 = vmatprep.subr.bf16.mxu0 0
  %1772 = vmatpush1.bf16.xpose.msra.mxu0 0
  %1773 = vmatprep.subr.bf16.mxu0 0
  %1774 = vmatpush1.bf16.xpose.msra.mxu0 0
  %1775 = vmatprep.subr.bf16.mxu0 0
  %1776 = vmatpush1.bf16.xpose.msra.mxu0 0
  %1777 = vmatprep.subr.bf16.mxu0 0
  %1778 = vmatpush1.bf16.xpose.msra.mxu0 0
  %1779 = vmatprep.subr.bf16.mxu0 0
  %1780 = vmatpush1.bf16.xpose.msra.mxu0 0
  %1781 = vmatprep.subr.bf16.mxu0 0
  %1782 = vmatpush1.bf16.xpose.msra.mxu0 0
  %1783 = vmatprep.mubr.bf16.mxu0 0
  %1784 = vmatmul.mubr.bf16.gmra.mrb[0].mxu0 %v1746
  %v1785 = vpop.f32.mrb[0].mxu0
  %v1786 = vadd.f32 0.0, %v1785
  %v1787 = vpop.f32.mrb[0].mxu0
  %v1788 = vpop.f32.mrb[0].mxu0
  %v1789 = vpop.f32.mrb[0].mxu0
  %1790 = vdwg.mxu0
  %1792 = vrot.lane.b32.xlu0 %v1543, 96
  %v1793 = vpop.permute.xlu0 %1792
  %v1795 = vsel %vm215, %v1543, 0
  %v1798 = vsel %vm215, %v1793, 0
  %1800 = vmatprep.subr.bf16.mxu0 0
  %1801 = vmatpush1.bf16.xpose.msra.mxu0 %v1798
  %1802 = vmatprep.subr.bf16.mxu0 0
  %1803 = vmatpush1.bf16.xpose.msra.mxu0 0
  %1804 = vmatprep.subr.bf16.mxu0 0
  %1805 = vmatpush1.bf16.xpose.msra.mxu0 0
  %1806 = vmatprep.subr.bf16.mxu0 0
  %1807 = vmatpush1.bf16.xpose.msra.mxu0 0
  %1808 = vmatprep.subr.bf16.mxu0 0
  %1809 = vmatpush1.bf16.xpose.msra.mxu0 0
  %1810 = vmatprep.subr.bf16.mxu0 0
  %1811 = vmatpush1.bf16.xpose.msra.mxu0 0
  %1812 = vmatprep.subr.bf16.mxu0 0
  %1813 = vmatpush1.bf16.xpose.msra.mxu0 0
  %1814 = vmatprep.subr.bf16.mxu0 0
  %1815 = vmatpush1.bf16.xpose.msra.mxu0 0
  %1816 = vmatprep.subr.bf16.mxu0 0
  %1817 = vmatpush1.bf16.xpose.msra.mxu0 0
  %1818 = vmatprep.subr.bf16.mxu0 0
  %1819 = vmatpush1.bf16.xpose.msra.mxu0 0
  %1820 = vmatprep.subr.bf16.mxu0 0
  %1821 = vmatpush1.bf16.xpose.msra.mxu0 0
  %1822 = vmatprep.subr.bf16.mxu0 0
  %1823 = vmatpush1.bf16.xpose.msra.mxu0 0
  %1824 = vmatprep.subr.bf16.mxu0 0
  %1825 = vmatpush1.bf16.xpose.msra.mxu0 0
  %1826 = vmatprep.subr.bf16.mxu0 0
  %1827 = vmatpush1.bf16.xpose.msra.mxu0 0
  %1828 = vmatprep.subr.bf16.mxu0 0
  %1829 = vmatpush1.bf16.xpose.msra.mxu0 0
  %1830 = vmatprep.subr.bf16.mxu0 0
  %1831 = vmatpush1.bf16.xpose.msra.mxu0 0
  %1832 = vmatprep.mubr.bf16.mxu0 0
  %1833 = vmatmul.mubr.bf16.gmra.mrb[0].mxu0 %v1795
  %v1834 = vpop.f32.mrb[0].mxu0
  %v1835 = vadd.f32 0.0, %v1834
  %v1836 = vpop.f32.mrb[0].mxu0
  %v1837 = vpop.f32.mrb[0].mxu0
  %v1838 = vpop.f32.mrb[0].mxu0
  %1839 = vdwg.mxu0
  %1841 = vrot.lane.b32.xlu0 %v1544, 96
  %v1842 = vpop.permute.xlu0 %1841
  %v1844 = vsel %vm215, %v1544, 0
  %v1847 = vsel %vm215, %v1842, 0
  %1849 = vmatprep.subr.bf16.mxu0 0
  %1850 = vmatpush1.bf16.xpose.msra.mxu0 %v1847
  %1851 = vmatprep.subr.bf16.mxu0 0
  %1852 = vmatpush1.bf16.xpose.msra.mxu0 0
  %1853 = vmatprep.subr.bf16.mxu0 0
  %1854 = vmatpush1.bf16.xpose.msra.mxu0 0
  %1855 = vmatprep.subr.bf16.mxu0 0
  %1856 = vmatpush1.bf16.xpose.msra.mxu0 0
  %1857 = vmatprep.subr.bf16.mxu0 0
  %1858 = vmatpush1.bf16.xpose.msra.mxu0 0
  %1859 = vmatprep.subr.bf16.mxu0 0
  %1860 = vmatpush1.bf16.xpose.msra.mxu0 0
  %1861 = vmatprep.subr.bf16.mxu0 0
  %1862 = vmatpush1.bf16.xpose.msra.mxu0 0
  %1863 = vmatprep.subr.bf16.mxu0 0
  %1864 = vmatpush1.bf16.xpose.msra.mxu0 0
  %1865 = vmatprep.subr.bf16.mxu0 0
  %1866 = vmatpush1.bf16.xpose.msra.mxu0 0
  %1867 = vmatprep.subr.bf16.mxu0 0
  %1868 = vmatpush1.bf16.xpose.msra.mxu0 0
  %1869 = vmatprep.subr.bf16.mxu0 0
  %1870 = vmatpush1.bf16.xpose.msra.mxu0 0
  %1871 = vmatprep.subr.bf16.mxu0 0
  %1872 = vmatpush1.bf16.xpose.msra.mxu0 0
  %1873 = vmatprep.subr.bf16.mxu0 0
  %1874 = vmatpush1.bf16.xpose.msra.mxu0 0
  %1875 = vmatprep.subr.bf16.mxu0 0
  %1876 = vmatpush1.bf16.xpose.msra.mxu0 0
  %1877 = vmatprep.subr.bf16.mxu0 0
  %1878 = vmatpush1.bf16.xpose.msra.mxu0 0
  %1879 = vmatprep.subr.bf16.mxu0 0
  %1880 = vmatpush1.bf16.xpose.msra.mxu0 0
  %1881 = vmatprep.mubr.bf16.mxu0 0
  %1882 = vmatmul.mubr.bf16.gmra.mrb[0].mxu0 %v1844
  %v1883 = vpop.f32.mrb[0].mxu0
  %v1884 = vadd.f32 0.0, %v1883
  %v1885 = vpop.f32.mrb[0].mxu0
  %v1886 = vpop.f32.mrb[0].mxu0
  %v1887 = vpop.f32.mrb[0].mxu0
  %1888 = vdwg.mxu0
  %1890 = vrot.lane.b32.xlu0 %v1545, 96
  %v1891 = vpop.permute.xlu0 %1890
  %v1893 = vsel %vm215, %v1545, 0
  %v1896 = vsel %vm215, %v1891, 0
  %1898 = vmatprep.subr.bf16.mxu0 0
  %1899 = vmatpush1.bf16.xpose.msra.mxu0 %v1896
  %1900 = vmatprep.subr.bf16.mxu0 0
  %1901 = vmatpush1.bf16.xpose.msra.mxu0 0
  %1902 = vmatprep.subr.bf16.mxu0 0
  %1903 = vmatpush1.bf16.xpose.msra.mxu0 0
  %1904 = vmatprep.subr.bf16.mxu0 0
  %1905 = vmatpush1.bf16.xpose.msra.mxu0 0
  %1906 = vmatprep.subr.bf16.mxu0 0
  %1907 = vmatpush1.bf16.xpose.msra.mxu0 0
  %1908 = vmatprep.subr.bf16.mxu0 0
  %1909 = vmatpush1.bf16.xpose.msra.mxu0 0
  %1910 = vmatprep.subr.bf16.mxu0 0
  %1911 = vmatpush1.bf16.xpose.msra.mxu0 0
  %1912 = vmatprep.subr.bf16.mxu0 0
  %1913 = vmatpush1.bf16.xpose.msra.mxu0 0
  %1914 = vmatprep.subr.bf16.mxu0 0
  %1915 = vmatpush1.bf16.xpose.msra.mxu0 0
  %1916 = vmatprep.subr.bf16.mxu0 0
  %1917 = vmatpush1.bf16.xpose.msra.mxu0 0
  %1918 = vmatprep.subr.bf16.mxu0 0
  %1919 = vmatpush1.bf16.xpose.msra.mxu0 0
  %1920 = vmatprep.subr.bf16.mxu0 0
  %1921 = vmatpush1.bf16.xpose.msra.mxu0 0
  %1922 = vmatprep.subr.bf16.mxu0 0
  %1923 = vmatpush1.bf16.xpose.msra.mxu0 0
  %1924 = vmatprep.subr.bf16.mxu0 0
  %1925 = vmatpush1.bf16.xpose.msra.mxu0 0
  %1926 = vmatprep.subr.bf16.mxu0 0
  %1927 = vmatpush1.bf16.xpose.msra.mxu0 0
  %1928 = vmatprep.subr.bf16.mxu0 0
  %1929 = vmatpush1.bf16.xpose.msra.mxu0 0
  %1930 = vmatprep.mubr.bf16.mxu0 0
  %1931 = vmatmul.mubr.bf16.gmra.mrb[0].mxu0 %v1893
  %v1932 = vpop.f32.mrb[0].mxu0
  %v1933 = vadd.f32 0.0, %v1932
  %v1934 = vpop.f32.mrb[0].mxu0
  %v1935 = vpop.f32.mrb[0].mxu0
  %v1936 = vpop.f32.mrb[0].mxu0
  %1937 = vdwg.mxu0
  %v1938 = vmul.f32 %v1590, 0.35355338
  %v1939 = vmul.f32 %v1639, 0.35355338
  %v1940 = vmul.f32 %v1688, 0.35355338
  %v1941 = vmul.f32 %v1737, 0.35355338
  %v1942 = vmul.f32 %v1786, 0.35355338
  %v1943 = vmul.f32 %v1835, 0.35355338
  %v1944 = vmul.f32 %v1884, 0.35355338
  %v1945 = vmul.f32 %v1933, 0.35355338
  %v1946 = vadd.f32 %v1938, %v62
  %v1947 = vadd.f32 %v1939, %v63
  %v1948 = vadd.f32 %v1940, %v64
  %v1949 = vadd.f32 %v1941, %v65
  %v1950 = vadd.f32 %v1942, %v66
  %v1951 = vadd.f32 %v1943, %v67
  %v1952 = vadd.f32 %v1944, %v68
  %v1953 = vadd.f32 %v1945, %v69
  %v1954 = vsel %vm215, %v1946, -inf
  %1955 = vmax.xlane.f32.xlu0 %v1954
  %v1956 = vpop.xlane.xlu0 %1955
  %v1957 = vsel %vm215, %v1947, -inf
  %1958 = vmax.xlane.f32.xlu0 %v1957
  %v1959 = vpop.xlane.xlu0 %1958
  %v1960 = vsel %vm215, %v1948, -inf
  %1961 = vmax.xlane.f32.xlu0 %v1960
  %v1962 = vpop.xlane.xlu0 %1961
  %v1963 = vsel %vm215, %v1949, -inf
  %1964 = vmax.xlane.f32.xlu0 %v1963
  %v1965 = vpop.xlane.xlu0 %1964
  %v1966 = vsel %vm215, %v1950, -inf
  %1967 = vmax.xlane.f32.xlu0 %v1966
  %v1968 = vpop.xlane.xlu0 %1967
  %v1969 = vsel %vm215, %v1951, -inf
  %1970 = vmax.xlane.f32.xlu0 %v1969
  %v1971 = vpop.xlane.xlu0 %1970
  %v1972 = vsel %vm215, %v1952, -inf
  %1973 = vmax.xlane.f32.xlu0 %v1972
  %v1974 = vpop.xlane.xlu0 %1973
  %v1975 = vsel %vm215, %v1953, -inf
  %1976 = vmax.xlane.f32.xlu0 %v1975
  %v1977 = vpop.xlane.xlu0 %1976
  %v1978 = vsub.f32 %v1946, %v1956
  %v1979 = vsub.f32 %v1947, %v1959
  %v1980 = vsub.f32 %v1948, %v1962
  %v1981 = vsub.f32 %v1949, %v1965
  %v1982 = vsub.f32 %v1950, %v1968
  %v1983 = vsub.f32 %v1951, %v1971
  %v1984 = vsub.f32 %v1952, %v1974
  %v1985 = vsub.f32 %v1953, %v1977
  %v1986 = vmul.f32 %v1978, 1.442695
  %v1987 = vpow.pop %v1986
  %v1988 = vmul.f32 %v1979, 1.442695
  %v1989 = vpow.pop %v1988
  %v1990 = vmul.f32 %v1980, 1.442695
  %v1991 = vpow.pop %v1990
  %v1992 = vmul.f32 %v1981, 1.442695
  %v1993 = vpow.pop %v1992
  %v1994 = vmul.f32 %v1982, 1.442695
  %v1995 = vpow.pop %v1994
  %v1996 = vmul.f32 %v1983, 1.442695
  %v1997 = vpow.pop %v1996
  %v1998 = vmul.f32 %v1984, 1.442695
  %v1999 = vpow.pop %v1998
  %v2000 = vmul.f32 %v1985, 1.442695
  %v2001 = vpow.pop %v2000
  %v2002 = vsel %vm215, %v1987, 0.0
  %2003 = vadd.xlane.f32.xlu0 %v2002
  %v2004 = vpop.xlane.xlu0 %2003
  %v2005 = vsel %vm215, %v1989, 0.0
  %2006 = vadd.xlane.f32.xlu0 %v2005
  %v2007 = vpop.xlane.xlu0 %2006
  %v2008 = vsel %vm215, %v1991, 0.0
  %2009 = vadd.xlane.f32.xlu0 %v2008
  %v2010 = vpop.xlane.xlu0 %2009
  %v2011 = vsel %vm215, %v1993, 0.0
  %2012 = vadd.xlane.f32.xlu0 %v2011
  %v2013 = vpop.xlane.xlu0 %2012
  %v2014 = vsel %vm215, %v1995, 0.0
  %2015 = vadd.xlane.f32.xlu0 %v2014
  %v2016 = vpop.xlane.xlu0 %2015
  %v2017 = vsel %vm215, %v1997, 0.0
  %2018 = vadd.xlane.f32.xlu0 %v2017
  %v2019 = vpop.xlane.xlu0 %2018
  %v2020 = vsel %vm215, %v1999, 0.0
  %2021 = vadd.xlane.f32.xlu0 %v2020
  %v2022 = vpop.xlane.xlu0 %2021
  %v2023 = vsel %vm215, %v2001, 0.0
  %2024 = vadd.xlane.f32.xlu0 %v2023
  %v2025 = vpop.xlane.xlu0 %2024
  %v2026 = vrcp.pop %v2004
  %v2027 = vrcp.pop %v2007
  %v2028 = vrcp.pop %v2010
  %v2029 = vrcp.pop %v2013
  %v2030 = vrcp.pop %v2016
  %v2031 = vrcp.pop %v2019
  %v2032 = vrcp.pop %v2022
  %v2033 = vrcp.pop %v2025
  %v2034 = vmul.f32 %v1987, %v2026
  %v2035 = vmul.f32 %v1989, %v2027
  %v2036 = vmul.f32 %v1991, %v2028
  %v2037 = vmul.f32 %v1993, %v2029
  %v2038 = vmul.f32 %v1995, %v2030
  %v2039 = vmul.f32 %v1997, %v2031
  %v2040 = vmul.f32 %v1999, %v2032
  %v2041 = vmul.f32 %v2001, %v2033
  %v2042 = vpack.c.bf16 %v2034, %v2034
  %v2043 = vpack.c.bf16 %v2035, %v2035
  %v2044 = vpack.c.bf16 %v2036, %v2036
  %v2045 = vpack.c.bf16 %v2037, %v2037
  %v2046 = vpack.c.bf16 %v2038, %v2038
  %v2047 = vpack.c.bf16 %v2039, %v2039
  %v2048 = vpack.c.bf16 %v2040, %v2040
  %v2049 = vpack.c.bf16 %v2041, %v2041
  %2050 = vrot.lane.b32.xlu0 %v1538, 64
  %v2051 = vpop.permute.xlu0 %2050
  %v2053 = vsel %vm215, %v2042, 0
  %v2056 = vsel %vm722, %v2051, 0
  %2058 = vmatprep.subr.bf16.mxu0 0
  %2059 = vmatpush1.bf16.msra.mxu0 %v2056
  %2060 = vmatprep.subr.bf16.mxu0 0
  %2061 = vmatpush1.bf16.msra.mxu0 0
  %2062 = vmatprep.subr.bf16.mxu0 0
  %2063 = vmatpush1.bf16.msra.mxu0 0
  %2064 = vmatprep.subr.bf16.mxu0 0
  %2065 = vmatpush1.bf16.msra.mxu0 0
  %2066 = vmatprep.subr.bf16.mxu0 0
  %2067 = vmatpush1.bf16.msra.mxu0 0
  %2068 = vmatprep.subr.bf16.mxu0 0
  %2069 = vmatpush1.bf16.msra.mxu0 0
  %2070 = vmatprep.subr.bf16.mxu0 0
  %2071 = vmatpush1.bf16.msra.mxu0 0
  %2072 = vmatprep.subr.bf16.mxu0 0
  %2073 = vmatpush1.bf16.msra.mxu0 0
  %2074 = vmatprep.subr.bf16.mxu0 0
  %2075 = vmatpush1.bf16.msra.mxu0 0
  %2076 = vmatprep.subr.bf16.mxu0 0
  %2077 = vmatpush1.bf16.msra.mxu0 0
  %2078 = vmatprep.subr.bf16.mxu0 0
  %2079 = vmatpush1.bf16.msra.mxu0 0
  %2080 = vmatprep.subr.bf16.mxu0 0
  %2081 = vmatpush1.bf16.msra.mxu0 0
  %2082 = vmatprep.subr.bf16.mxu0 0
  %2083 = vmatpush1.bf16.msra.mxu0 0
  %2084 = vmatprep.subr.bf16.mxu0 0
  %2085 = vmatpush1.bf16.msra.mxu0 0
  %2086 = vmatprep.subr.bf16.mxu0 0
  %2087 = vmatpush1.bf16.msra.mxu0 0
  %2088 = vmatprep.subr.bf16.mxu0 0
  %2089 = vmatpush1.bf16.msra.mxu0 0
  %2090 = vmatprep.mubr.bf16.mxu0 0
  %2091 = vmatmul.mubr.bf16.gmra.mrb[0].mxu0 %v2053
  %v2092 = vpop.f32.mrb[0].mxu0
  %v2093 = vadd.f32 0.0, %v2092
  %v2094 = vpop.f32.mrb[0].mxu0
  %v2095 = vpop.f32.mrb[0].mxu0
  %v2096 = vpop.f32.mrb[0].mxu0
  %2097 = vdwg.mxu0
  %2098 = vrot.lane.b32.xlu0 %v1539, 64
  %v2099 = vpop.permute.xlu0 %2098
  %v2101 = vsel %vm215, %v2043, 0
  %v2104 = vsel %vm722, %v2099, 0
  %2106 = vmatprep.subr.bf16.mxu0 0
  %2107 = vmatpush1.bf16.msra.mxu0 %v2104
  %2108 = vmatprep.subr.bf16.mxu0 0
  %2109 = vmatpush1.bf16.msra.mxu0 0
  %2110 = vmatprep.subr.bf16.mxu0 0
  %2111 = vmatpush1.bf16.msra.mxu0 0
  %2112 = vmatprep.subr.bf16.mxu0 0
  %2113 = vmatpush1.bf16.msra.mxu0 0
  %2114 = vmatprep.subr.bf16.mxu0 0
  %2115 = vmatpush1.bf16.msra.mxu0 0
  %2116 = vmatprep.subr.bf16.mxu0 0
  %2117 = vmatpush1.bf16.msra.mxu0 0
  %2118 = vmatprep.subr.bf16.mxu0 0
  %2119 = vmatpush1.bf16.msra.mxu0 0
  %2120 = vmatprep.subr.bf16.mxu0 0
  %2121 = vmatpush1.bf16.msra.mxu0 0
  %2122 = vmatprep.subr.bf16.mxu0 0
  %2123 = vmatpush1.bf16.msra.mxu0 0
  %2124 = vmatprep.subr.bf16.mxu0 0
  %2125 = vmatpush1.bf16.msra.mxu0 0
  %2126 = vmatprep.subr.bf16.mxu0 0
  %2127 = vmatpush1.bf16.msra.mxu0 0
  %2128 = vmatprep.subr.bf16.mxu0 0
  %2129 = vmatpush1.bf16.msra.mxu0 0
  %2130 = vmatprep.subr.bf16.mxu0 0
  %2131 = vmatpush1.bf16.msra.mxu0 0
  %2132 = vmatprep.subr.bf16.mxu0 0
  %2133 = vmatpush1.bf16.msra.mxu0 0
  %2134 = vmatprep.subr.bf16.mxu0 0
  %2135 = vmatpush1.bf16.msra.mxu0 0
  %2136 = vmatprep.subr.bf16.mxu0 0
  %2137 = vmatpush1.bf16.msra.mxu0 0
  %2138 = vmatprep.mubr.bf16.mxu0 0
  %2139 = vmatmul.mubr.bf16.gmra.mrb[0].mxu0 %v2101
  %v2140 = vpop.f32.mrb[0].mxu0
  %v2141 = vadd.f32 0.0, %v2140
  %v2142 = vpop.f32.mrb[0].mxu0
  %v2143 = vpop.f32.mrb[0].mxu0
  %v2144 = vpop.f32.mrb[0].mxu0
  %2145 = vdwg.mxu0
  %2146 = vrot.lane.b32.xlu0 %v1540, 64
  %v2147 = vpop.permute.xlu0 %2146
  %v2149 = vsel %vm215, %v2044, 0
  %v2152 = vsel %vm722, %v2147, 0
  %2154 = vmatprep.subr.bf16.mxu0 0
  %2155 = vmatpush1.bf16.msra.mxu0 %v2152
  %2156 = vmatprep.subr.bf16.mxu0 0
  %2157 = vmatpush1.bf16.msra.mxu0 0
  %2158 = vmatprep.subr.bf16.mxu0 0
  %2159 = vmatpush1.bf16.msra.mxu0 0
  %2160 = vmatprep.subr.bf16.mxu0 0
  %2161 = vmatpush1.bf16.msra.mxu0 0
  %2162 = vmatprep.subr.bf16.mxu0 0
  %2163 = vmatpush1.bf16.msra.mxu0 0
  %2164 = vmatprep.subr.bf16.mxu0 0
  %2165 = vmatpush1.bf16.msra.mxu0 0
  %2166 = vmatprep.subr.bf16.mxu0 0
  %2167 = vmatpush1.bf16.msra.mxu0 0
  %2168 = vmatprep.subr.bf16.mxu0 0
  %2169 = vmatpush1.bf16.msra.mxu0 0
  %2170 = vmatprep.subr.bf16.mxu0 0
  %2171 = vmatpush1.bf16.msra.mxu0 0
  %2172 = vmatprep.subr.bf16.mxu0 0
  %2173 = vmatpush1.bf16.msra.mxu0 0
  %2174 = vmatprep.subr.bf16.mxu0 0
  %2175 = vmatpush1.bf16.msra.mxu0 0
  %2176 = vmatprep.subr.bf16.mxu0 0
  %2177 = vmatpush1.bf16.msra.mxu0 0
  %2178 = vmatprep.subr.bf16.mxu0 0
  %2179 = vmatpush1.bf16.msra.mxu0 0
  %2180 = vmatprep.subr.bf16.mxu0 0
  %2181 = vmatpush1.bf16.msra.mxu0 0
  %2182 = vmatprep.subr.bf16.mxu0 0
  %2183 = vmatpush1.bf16.msra.mxu0 0
  %2184 = vmatprep.subr.bf16.mxu0 0
  %2185 = vmatpush1.bf16.msra.mxu0 0
  %2186 = vmatprep.mubr.bf16.mxu0 0
  %2187 = vmatmul.mubr.bf16.gmra.mrb[0].mxu0 %v2149
  %v2188 = vpop.f32.mrb[0].mxu0
  %v2189 = vadd.f32 0.0, %v2188
  %v2190 = vpop.f32.mrb[0].mxu0
  %v2191 = vpop.f32.mrb[0].mxu0
  %v2192 = vpop.f32.mrb[0].mxu0
  %2193 = vdwg.mxu0
  %2194 = vrot.lane.b32.xlu0 %v1541, 64
  %v2195 = vpop.permute.xlu0 %2194
  %v2197 = vsel %vm215, %v2045, 0
  %v2200 = vsel %vm722, %v2195, 0
  %2202 = vmatprep.subr.bf16.mxu0 0
  %2203 = vmatpush1.bf16.msra.mxu0 %v2200
  %2204 = vmatprep.subr.bf16.mxu0 0
  %2205 = vmatpush1.bf16.msra.mxu0 0
  %2206 = vmatprep.subr.bf16.mxu0 0
  %2207 = vmatpush1.bf16.msra.mxu0 0
  %2208 = vmatprep.subr.bf16.mxu0 0
  %2209 = vmatpush1.bf16.msra.mxu0 0
  %2210 = vmatprep.subr.bf16.mxu0 0
  %2211 = vmatpush1.bf16.msra.mxu0 0
  %2212 = vmatprep.subr.bf16.mxu0 0
  %2213 = vmatpush1.bf16.msra.mxu0 0
  %2214 = vmatprep.subr.bf16.mxu0 0
  %2215 = vmatpush1.bf16.msra.mxu0 0
  %2216 = vmatprep.subr.bf16.mxu0 0
  %2217 = vmatpush1.bf16.msra.mxu0 0
  %2218 = vmatprep.subr.bf16.mxu0 0
  %2219 = vmatpush1.bf16.msra.mxu0 0
  %2220 = vmatprep.subr.bf16.mxu0 0
  %2221 = vmatpush1.bf16.msra.mxu0 0
  %2222 = vmatprep.subr.bf16.mxu0 0
  %2223 = vmatpush1.bf16.msra.mxu0 0
  %2224 = vmatprep.subr.bf16.mxu0 0
  %2225 = vmatpush1.bf16.msra.mxu0 0
  %2226 = vmatprep.subr.bf16.mxu0 0
  %2227 = vmatpush1.bf16.msra.mxu0 0
  %2228 = vmatprep.subr.bf16.mxu0 0
  %2229 = vmatpush1.bf16.msra.mxu0 0
  %2230 = vmatprep.subr.bf16.mxu0 0
  %2231 = vmatpush1.bf16.msra.mxu0 0
  %2232 = vmatprep.subr.bf16.mxu0 0
  %2233 = vmatpush1.bf16.msra.mxu0 0
  %2234 = vmatprep.mubr.bf16.mxu0 0
  %2235 = vmatmul.mubr.bf16.gmra.mrb[0].mxu0 %v2197
  %v2236 = vpop.f32.mrb[0].mxu0
  %v2237 = vadd.f32 0.0, %v2236
  %v2238 = vpop.f32.mrb[0].mxu0
  %v2239 = vpop.f32.mrb[0].mxu0
  %v2240 = vpop.f32.mrb[0].mxu0
  %2241 = vdwg.mxu0
  %2242 = vrot.lane.b32.xlu0 %v1542, 64
  %v2243 = vpop.permute.xlu0 %2242
  %v2245 = vsel %vm215, %v2046, 0
  %v2248 = vsel %vm722, %v2243, 0
  %2250 = vmatprep.subr.bf16.mxu0 0
  %2251 = vmatpush1.bf16.msra.mxu0 %v2248
  %2252 = vmatprep.subr.bf16.mxu0 0
  %2253 = vmatpush1.bf16.msra.mxu0 0
  %2254 = vmatprep.subr.bf16.mxu0 0
  %2255 = vmatpush1.bf16.msra.mxu0 0
  %2256 = vmatprep.subr.bf16.mxu0 0
  %2257 = vmatpush1.bf16.msra.mxu0 0
  %2258 = vmatprep.subr.bf16.mxu0 0
  %2259 = vmatpush1.bf16.msra.mxu0 0
  %2260 = vmatprep.subr.bf16.mxu0 0
  %2261 = vmatpush1.bf16.msra.mxu0 0
  %2262 = vmatprep.subr.bf16.mxu0 0
  %2263 = vmatpush1.bf16.msra.mxu0 0
  %2264 = vmatprep.subr.bf16.mxu0 0
  %2265 = vmatpush1.bf16.msra.mxu0 0
  %2266 = vmatprep.subr.bf16.mxu0 0
  %2267 = vmatpush1.bf16.msra.mxu0 0
  %2268 = vmatprep.subr.bf16.mxu0 0
  %2269 = vmatpush1.bf16.msra.mxu0 0
  %2270 = vmatprep.subr.bf16.mxu0 0
  %2271 = vmatpush1.bf16.msra.mxu0 0
  %2272 = vmatprep.subr.bf16.mxu0 0
  %2273 = vmatpush1.bf16.msra.mxu0 0
  %2274 = vmatprep.subr.bf16.mxu0 0
  %2275 = vmatpush1.bf16.msra.mxu0 0
  %2276 = vmatprep.subr.bf16.mxu0 0
  %2277 = vmatpush1.bf16.msra.mxu0 0
  %2278 = vmatprep.subr.bf16.mxu0 0
  %2279 = vmatpush1.bf16.msra.mxu0 0
  %2280 = vmatprep.subr.bf16.mxu0 0
  %2281 = vmatpush1.bf16.msra.mxu0 0
  %2282 = vmatprep.mubr.bf16.mxu0 0
  %2283 = vmatmul.mubr.bf16.gmra.mrb[0].mxu0 %v2245
  %v2284 = vpop.f32.mrb[0].mxu0
  %v2285 = vadd.f32 0.0, %v2284
  %v2286 = vpop.f32.mrb[0].mxu0
  %v2287 = vpop.f32.mrb[0].mxu0
  %v2288 = vpop.f32.mrb[0].mxu0
  %2289 = vdwg.mxu0
  %2290 = vrot.lane.b32.xlu0 %v1543, 64
  %v2291 = vpop.permute.xlu0 %2290
  %v2293 = vsel %vm215, %v2047, 0
  %v2296 = vsel %vm722, %v2291, 0
  %2298 = vmatprep.subr.bf16.mxu0 0
  %2299 = vmatpush1.bf16.msra.mxu0 %v2296
  %2300 = vmatprep.subr.bf16.mxu0 0
  %2301 = vmatpush1.bf16.msra.mxu0 0
  %2302 = vmatprep.subr.bf16.mxu0 0
  %2303 = vmatpush1.bf16.msra.mxu0 0
  %2304 = vmatprep.subr.bf16.mxu0 0
  %2305 = vmatpush1.bf16.msra.mxu0 0
  %2306 = vmatprep.subr.bf16.mxu0 0
  %2307 = vmatpush1.bf16.msra.mxu0 0
  %2308 = vmatprep.subr.bf16.mxu0 0
  %2309 = vmatpush1.bf16.msra.mxu0 0
  %2310 = vmatprep.subr.bf16.mxu0 0
  %2311 = vmatpush1.bf16.msra.mxu0 0
  %2312 = vmatprep.subr.bf16.mxu0 0
  %2313 = vmatpush1.bf16.msra.mxu0 0
  %2314 = vmatprep.subr.bf16.mxu0 0
  %2315 = vmatpush1.bf16.msra.mxu0 0
  %2316 = vmatprep.subr.bf16.mxu0 0
  %2317 = vmatpush1.bf16.msra.mxu0 0
  %2318 = vmatprep.subr.bf16.mxu0 0
  %2319 = vmatpush1.bf16.msra.mxu0 0
  %2320 = vmatprep.subr.bf16.mxu0 0
  %2321 = vmatpush1.bf16.msra.mxu0 0
  %2322 = vmatprep.subr.bf16.mxu0 0
  %2323 = vmatpush1.bf16.msra.mxu0 0
  %2324 = vmatprep.subr.bf16.mxu0 0
  %2325 = vmatpush1.bf16.msra.mxu0 0
  %2326 = vmatprep.subr.bf16.mxu0 0
  %2327 = vmatpush1.bf16.msra.mxu0 0
  %2328 = vmatprep.subr.bf16.mxu0 0
  %2329 = vmatpush1.bf16.msra.mxu0 0
  %2330 = vmatprep.mubr.bf16.mxu0 0
  %2331 = vmatmul.mubr.bf16.gmra.mrb[0].mxu0 %v2293
  %v2332 = vpop.f32.mrb[0].mxu0
  %v2333 = vadd.f32 0.0, %v2332
  %v2334 = vpop.f32.mrb[0].mxu0
  %v2335 = vpop.f32.mrb[0].mxu0
  %v2336 = vpop.f32.mrb[0].mxu0
  %2337 = vdwg.mxu0
  %2338 = vrot.lane.b32.xlu0 %v1544, 64
  %v2339 = vpop.permute.xlu0 %2338
  %v2341 = vsel %vm215, %v2048, 0
  %v2344 = vsel %vm722, %v2339, 0
  %2346 = vmatprep.subr.bf16.mxu0 0
  %2347 = vmatpush1.bf16.msra.mxu0 %v2344
  %2348 = vmatprep.subr.bf16.mxu0 0
  %2349 = vmatpush1.bf16.msra.mxu0 0
  %2350 = vmatprep.subr.bf16.mxu0 0
  %2351 = vmatpush1.bf16.msra.mxu0 0
  %2352 = vmatprep.subr.bf16.mxu0 0
  %2353 = vmatpush1.bf16.msra.mxu0 0
  %2354 = vmatprep.subr.bf16.mxu0 0
  %2355 = vmatpush1.bf16.msra.mxu0 0
  %2356 = vmatprep.subr.bf16.mxu0 0
  %2357 = vmatpush1.bf16.msra.mxu0 0
  %2358 = vmatprep.subr.bf16.mxu0 0
  %2359 = vmatpush1.bf16.msra.mxu0 0
  %2360 = vmatprep.subr.bf16.mxu0 0
  %2361 = vmatpush1.bf16.msra.mxu0 0
  %2362 = vmatprep.subr.bf16.mxu0 0
  %2363 = vmatpush1.bf16.msra.mxu0 0
  %2364 = vmatprep.subr.bf16.mxu0 0
  %2365 = vmatpush1.bf16.msra.mxu0 0
  %2366 = vmatprep.subr.bf16.mxu0 0
  %2367 = vmatpush1.bf16.msra.mxu0 0
  %2368 = vmatprep.subr.bf16.mxu0 0
  %2369 = vmatpush1.bf16.msra.mxu0 0
  %2370 = vmatprep.subr.bf16.mxu0 0
  %2371 = vmatpush1.bf16.msra.mxu0 0
  %2372 = vmatprep.subr.bf16.mxu0 0
  %2373 = vmatpush1.bf16.msra.mxu0 0
  %2374 = vmatprep.subr.bf16.mxu0 0
  %2375 = vmatpush1.bf16.msra.mxu0 0
  %2376 = vmatprep.subr.bf16.mxu0 0
  %2377 = vmatpush1.bf16.msra.mxu0 0
  %2378 = vmatprep.mubr.bf16.mxu0 0
  %2379 = vmatmul.mubr.bf16.gmra.mrb[0].mxu0 %v2341
  %v2380 = vpop.f32.mrb[0].mxu0
  %v2381 = vadd.f32 0.0, %v2380
  %v2382 = vpop.f32.mrb[0].mxu0
  %v2383 = vpop.f32.mrb[0].mxu0
  %v2384 = vpop.f32.mrb[0].mxu0
  %2385 = vdwg.mxu0
  %2386 = vrot.lane.b32.xlu0 %v1545, 64
  %v2387 = vpop.permute.xlu0 %2386
  %v2389 = vsel %vm215, %v2049, 0
  %v2392 = vsel %vm722, %v2387, 0
  %2394 = vmatprep.subr.bf16.mxu0 0
  %2395 = vmatpush1.bf16.msra.mxu0 %v2392
  %2396 = vmatprep.subr.bf16.mxu0 0
  %2397 = vmatpush1.bf16.msra.mxu0 0
  %2398 = vmatprep.subr.bf16.mxu0 0
  %2399 = vmatpush1.bf16.msra.mxu0 0
  %2400 = vmatprep.subr.bf16.mxu0 0
  %2401 = vmatpush1.bf16.msra.mxu0 0
  %2402 = vmatprep.subr.bf16.mxu0 0
  %2403 = vmatpush1.bf16.msra.mxu0 0
  %2404 = vmatprep.subr.bf16.mxu0 0
  %2405 = vmatpush1.bf16.msra.mxu0 0
  %2406 = vmatprep.subr.bf16.mxu0 0
  %2407 = vmatpush1.bf16.msra.mxu0 0
  %2408 = vmatprep.subr.bf16.mxu0 0
  %2409 = vmatpush1.bf16.msra.mxu0 0
  %2410 = vmatprep.subr.bf16.mxu0 0
  %2411 = vmatpush1.bf16.msra.mxu0 0
  %2412 = vmatprep.subr.bf16.mxu0 0
  %2413 = vmatpush1.bf16.msra.mxu0 0
  %2414 = vmatprep.subr.bf16.mxu0 0
  %2415 = vmatpush1.bf16.msra.mxu0 0
  %2416 = vmatprep.subr.bf16.mxu0 0
  %2417 = vmatpush1.bf16.msra.mxu0 0
  %2418 = vmatprep.subr.bf16.mxu0 0
  %2419 = vmatpush1.bf16.msra.mxu0 0
  %2420 = vmatprep.subr.bf16.mxu0 0
  %2421 = vmatpush1.bf16.msra.mxu0 0
  %2422 = vmatprep.subr.bf16.mxu0 0
  %2423 = vmatpush1.bf16.msra.mxu0 0
  %2424 = vmatprep.subr.bf16.mxu0 0
  %2425 = vmatpush1.bf16.msra.mxu0 0
  %2426 = vmatprep.mubr.bf16.mxu0 0
  %2427 = vmatmul.mubr.bf16.gmra.mrb[0].mxu0 %v2389
  %v2428 = vpop.f32.mrb[0].mxu0
  %v2429 = vadd.f32 0.0, %v2428
  %v2430 = vpop.f32.mrb[0].mxu0
  %v2431 = vpop.f32.mrb[0].mxu0
  %v2432 = vpop.f32.mrb[0].mxu0
  %2433 = vdwg.mxu0
  %2436 = vrot.lane.b32.xlu0 %v2189, 8
  %v2437 = vpop.permute.xlu0 %2436
  %2438 = vrot.lane.b32.xlu0 %v2237, 8
  %v2439 = vpop.permute.xlu0 %2438
  %2444 = vrot.lane.b32.xlu0 %v2285, 16
  %v2445 = vpop.permute.xlu0 %2444
  %2446 = vrot.lane.b32.xlu0 %v2333, 16
  %v2447 = vpop.permute.xlu0 %2446
  %2452 = vrot.lane.b32.xlu0 %v2381, 24
  %v2453 = vpop.permute.xlu0 %2452
  %2454 = vrot.lane.b32.xlu0 %v2429, 24
  %v2455 = vpop.permute.xlu0 %2454
  %v2458 = vsel %vm215, %v2093, %v2437
  %v2459 = vsel %vm215, %v2141, %v2439
  %v2460 = vsel %vm1128, %v2458, %v2445
  %v2461 = vsel %vm1128, %v2459, %v2447
  %v2462 = vsel %vm1131, %v2460, %v2453
  %v2463 = vsel %vm1131, %v2461, %v2455
  %v2464 = vpack.c.bf16 %v2463, %v2462
  %s2465 = scalar_lea.vmem %s6, 16
  %v2466 = vld [vmem:[%s2465] sm:$0xf]
  %v2467 = vld [vmem:[%s2465 + $0x4] sm:$0xf]
  %v2468 = vld [vmem:[%s2465 + $0x8] sm:$0xf]
  %v2469 = vld [vmem:[%s2465 + $0xc] sm:$0xf]
  %v2470 = vld [vmem:[%s7 + $0x1] sm:$0x1]
  %v2471 = vlaneseq
  %v2472 = vshrl.u32 %v2471, 7
  %v2473 = vsub.s32 0, %v2472
  %v2474 = vrot.slane %v2470, %v2473
  %v2479 = vunpack.c.l.b16 %v2466
  %v2480 = vunpack.c.l.b16 %v2467
  %v2481 = vunpack.c.l.b16 %v2468
  %v2482 = vunpack.c.l.b16 %v2469
  %v2483 = vpack.c.b16 %v2480, %v2479
  %v2484 = vpack.c.b16 %v2482, %v2481
  %v2488 = vsel %vm74, %v2464, 0
  %2490 = vmatprep.subr.bf16.mxu0 0
  %2491 = vmatpush1.bf16.msra.mxu0 %v2483
  %2492 = vmatprep.subr.bf16.mxu0 0
  %2493 = vmatpush1.bf16.msra.mxu0 %v2484
  %2494 = vmatprep.subr.bf16.mxu0 0
  %2495 = vmatpush1.bf16.msra.mxu0 0
  %2496 = vmatprep.subr.bf16.mxu0 0
  %2497 = vmatpush1.bf16.msra.mxu0 0
  %2498 = vmatprep.subr.bf16.mxu0 0
  %2499 = vmatpush1.bf16.msra.mxu0 0
  %2500 = vmatprep.subr.bf16.mxu0 0
  %2501 = vmatpush1.bf16.msra.mxu0 0
  %2502 = vmatprep.subr.bf16.mxu0 0
  %2503 = vmatpush1.bf16.msra.mxu0 0
  %2504 = vmatprep.subr.bf16.mxu0 0
  %2505 = vmatpush1.bf16.msra.mxu0 0
  %2506 = vmatprep.subr.bf16.mxu0 0
  %2507 = vmatpush1.bf16.msra.mxu0 0
  %2508 = vmatprep.subr.bf16.mxu0 0
  %2509 = vmatpush1.bf16.msra.mxu0 0
  %2510 = vmatprep.subr.bf16.mxu0 0
  %2511 = vmatpush1.bf16.msra.mxu0 0
  %2512 = vmatprep.subr.bf16.mxu0 0
  %2513 = vmatpush1.bf16.msra.mxu0 0
  %2514 = vmatprep.subr.bf16.mxu0 0
  %2515 = vmatpush1.bf16.msra.mxu0 0
  %2516 = vmatprep.subr.bf16.mxu0 0
  %2517 = vmatpush1.bf16.msra.mxu0 0
  %2518 = vmatprep.subr.bf16.mxu0 0
  %2519 = vmatpush1.bf16.msra.mxu0 0
  %2520 = vmatprep.subr.bf16.mxu0 0
  %2521 = vmatpush1.bf16.msra.mxu0 0
  %2522 = vmatprep.mubr.bf16.mxu0 0
  %2523 = vmatmul.mubr.bf16.gmra.mrb[0].mxu0 %v2488
  %v2524 = vpop.f32.mrb[0].mxu0
  %v2525 = vadd.f32 %v2474, %v2524
  %v2526 = vpop.f32.mrb[0].mxu0
  %v2527 = vpop.f32.mrb[0].mxu0
  %v2528 = vadd.f32 %v2474, %v2527
  %v2529 = vpop.f32.mrb[0].mxu0
  %2530 = vdwg.mxu0
  %v2531 = vadd.f32 %v1449, %v2525
  %v2532 = vadd.f32 %v1450, %v2528
  %v2533 = vld [vmem:[%s8 + $0x1] sm:$0x1]
  %v2534 = vld [vmem:[%s9 + $0x1] sm:$0x1]
  %v2535 = vsel %vm74, %v2531, 0.0
  %2536 = vadd.xlane.f32.xlu0 %v2535
  %v2537 = vpop.xlane.xlu0 %2536
  %v2538 = vsel %vm74, %v2532, 0.0
  %2539 = vadd.xlane.f32.xlu0 %v2538
  %v2540 = vpop.xlane.xlu0 %2539
  %v2541 = vmul.f32 %v2537, %v81
  %v2542 = vmul.f32 %v2540, %v81
  %v2543 = vsub.f32 %v2531, %v2541
  %v2544 = vsub.f32 %v2532, %v2542
  %v2545 = vmul.f32 %v2543, %v2543
  %v2546 = vmul.f32 %v2544, %v2544
  %v2547 = vsel %vm74, %v2545, 0.0
  %2548 = vadd.xlane.f32.xlu0 %v2547
  %v2549 = vpop.xlane.xlu0 %2548
  %v2550 = vsel %vm74, %v2546, 0.0
  %2551 = vadd.xlane.f32.xlu0 %v2550
  %v2552 = vpop.xlane.xlu0 %2551
  %v2553 = vmul.f32 %v2549, %v81
  %v2554 = vmul.f32 %v2552, %v81
  %v2555 = vadd.f32 %v2553, 1e-12
  %v2556 = vadd.f32 %v2554, 1e-12
  %v2557 = vrsqrt.pop %v2555
  %v2558 = vrsqrt.pop %v2556
  %v2559 = vmul.f32 %v2543, %v2557
  %v2560 = vmul.f32 %v2544, %v2558
  %v2561 = vlaneseq
  %v2562 = vshrl.u32 %v2561, 7
  %v2563 = vsub.s32 0, %v2562
  %v2564 = vrot.slane %v2533, %v2563
  %v2565 = vmul.f32 %v2559, %v2564
  %v2566 = vmul.f32 %v2560, %v2564
  %v2567 = vlaneseq
  %v2568 = vshrl.u32 %v2567, 7
  %v2569 = vsub.s32 0, %v2568
  %v2570 = vrot.slane %v2534, %v2569
  %v2571 = vadd.f32 %v2565, %v2570
  %v2572 = vadd.f32 %v2566, %v2570
  %v2573 = vpack.c.bf16 %v2572, %v2571
  %s2574 = scalar_lea.vmem %s10, 16
  %v2575 = vld [vmem:[%s2574] sm:$0xf]
  %v2576 = vld [vmem:[%s2574 + $0x4] sm:$0xf]
  %v2577 = vld [vmem:[%s2574 + $0x8] sm:$0xf]
  %v2578 = vld [vmem:[%s2574 + $0xc] sm:$0xf]
  %v2579 = vld [vmem:[%s11 + $0x1] sm:$0x1]
  %v2580 = vlaneseq
  %v2581 = vshrl.u32 %v2580, 7
  %v2582 = vsub.s32 0, %v2581
  %v2583 = vrot.slane %v2579, %v2582
  %v2588 = vunpack.c.l.b16 %v2575
  %v2589 = vunpack.c.l.b16 %v2576
  %v2590 = vunpack.c.l.b16 %v2577
  %v2591 = vunpack.c.l.b16 %v2578
  %v2592 = vpack.c.b16 %v2589, %v2588
  %v2593 = vpack.c.b16 %v2591, %v2590
  %v2597 = vsel %vm74, %v2573, 0
  %2599 = vmatprep.subr.bf16.mxu0 0
  %2600 = vmatpush1.bf16.msra.mxu0 %v2592
  %2601 = vmatprep.subr.bf16.mxu0 0
  %2602 = vmatpush1.bf16.msra.mxu0 %v2593
  %2603 = vmatprep.subr.bf16.mxu0 0
  %2604 = vmatpush1.bf16.msra.mxu0 0
  %2605 = vmatprep.subr.bf16.mxu0 0
  %2606 = vmatpush1.bf16.msra.mxu0 0
  %2607 = vmatprep.subr.bf16.mxu0 0
  %2608 = vmatpush1.bf16.msra.mxu0 0
  %2609 = vmatprep.subr.bf16.mxu0 0
  %2610 = vmatpush1.bf16.msra.mxu0 0
  %2611 = vmatprep.subr.bf16.mxu0 0
  %2612 = vmatpush1.bf16.msra.mxu0 0
  %2613 = vmatprep.subr.bf16.mxu0 0
  %2614 = vmatpush1.bf16.msra.mxu0 0
  %2615 = vmatprep.subr.bf16.mxu0 0
  %2616 = vmatpush1.bf16.msra.mxu0 0
  %2617 = vmatprep.subr.bf16.mxu0 0
  %2618 = vmatpush1.bf16.msra.mxu0 0
  %2619 = vmatprep.subr.bf16.mxu0 0
  %2620 = vmatpush1.bf16.msra.mxu0 0
  %2621 = vmatprep.subr.bf16.mxu0 0
  %2622 = vmatpush1.bf16.msra.mxu0 0
  %2623 = vmatprep.subr.bf16.mxu0 0
  %2624 = vmatpush1.bf16.msra.mxu0 0
  %2625 = vmatprep.subr.bf16.mxu0 0
  %2626 = vmatpush1.bf16.msra.mxu0 0
  %2627 = vmatprep.subr.bf16.mxu0 0
  %2628 = vmatpush1.bf16.msra.mxu0 0
  %2629 = vmatprep.subr.bf16.mxu0 0
  %2630 = vmatpush1.bf16.msra.mxu0 0
  %2631 = vmatprep.mubr.bf16.mxu0 0
  %2632 = vmatmul.mubr.bf16.gmra.mrb[0].mxu0 %v2597
  %v2633 = vpop.f32.mrb[0].mxu0
  %v2634 = vadd.f32 %v2583, %v2633
  %v2635 = vpop.f32.mrb[0].mxu0
  %v2636 = vpop.f32.mrb[0].mxu0
  %v2637 = vadd.f32 %v2583, %v2636
  %v2638 = vpop.f32.mrb[0].mxu0
  %2639 = vdwg.mxu0
  %v2640 = vmul.f32 %v2634, 0.5
  %v2641 = vmul.f32 %v2637, 0.5
  %v2642 = vmul.f32 %v2634, 0.044715
  %v2643 = vmul.f32 %v2637, 0.044715
  %v2644 = vmul.f32 %v2642, %v2634
  %v2645 = vmul.f32 %v2643, %v2637
  %v2646 = vmul.f32 %v2644, %v2634
  %v2647 = vmul.f32 %v2645, %v2637
  %v2648 = vadd.f32 %v2634, %v2646
  %v2649 = vadd.f32 %v2637, %v2647
  %v2650 = vmul.f32 %v2648, 0.7978846
  %v2651 = vmul.f32 %v2649, 0.7978846
  %v2652 = vtanh.pop %v2650
  %v2653 = vtanh.pop %v2651
  %v2654 = vadd.f32 %v2652, 1.0
  %v2655 = vadd.f32 %v2653, 1.0
  %v2656 = vmul.f32 %v2640, %v2654
  %v2657 = vmul.f32 %v2641, %v2655
  %v2658 = vpack.c.bf16 %v2657, %v2656
  %s2659 = scalar_lea.vmem %s12, 32
  %v2660 = vld [vmem:[%s2659] sm:$0xf]
  %v2661 = vld [vmem:[%s2659 + $0x4] sm:$0xf]
  %v2662 = vld [vmem:[%s2659 + $0x8] sm:$0xf]
  %v2663 = vld [vmem:[%s2659 + $0xc] sm:$0xf]
  %v2664 = vld [vmem:[%s2659 + $0x10] sm:$0xf]
  %v2665 = vld [vmem:[%s2659 + $0x14] sm:$0xf]
  %v2666 = vld [vmem:[%s2659 + $0x18] sm:$0xf]
  %v2667 = vld [vmem:[%s2659 + $0x1c] sm:$0xf]
  %v2668 = vld [vmem:[%s13 + $0x1] sm:$0x1]
  %v2669 = vlaneseq
  %v2670 = vshrl.u32 %v2669, 7
  %v2671 = vsub.s32 0, %v2670
  %v2672 = vrot.slane %v2668, %v2671
  %v2681 = vunpack.c.l.b16 %v2660
  %v2682 = vunpack.c.l.b16 %v2661
  %v2683 = vunpack.c.l.b16 %v2662
  %v2684 = vunpack.c.l.b16 %v2663
  %v2685 = vunpack.c.l.b16 %v2664
  %v2686 = vunpack.c.l.b16 %v2665
  %v2687 = vunpack.c.l.b16 %v2666
  %v2688 = vunpack.c.l.b16 %v2667
  %v2689 = vpack.c.b16 %v2682, %v2681
  %v2690 = vpack.c.b16 %v2684, %v2683
  %v2691 = vpack.c.b16 %v2686, %v2685
  %v2692 = vpack.c.b16 %v2688, %v2687
  %v2698 = vsel %vm1364, %v2658, 0
  %2700 = vmatprep.subr.bf16.mxu0 0
  %2701 = vmatpush1.bf16.msra.mxu0 %v2689
  %2702 = vmatprep.subr.bf16.mxu0 0
  %2703 = vmatpush1.bf16.msra.mxu0 %v2690
  %2704 = vmatprep.subr.bf16.mxu0 0
  %2705 = vmatpush1.bf16.msra.mxu0 %v2691
  %2706 = vmatprep.subr.bf16.mxu0 0
  %2707 = vmatpush1.bf16.msra.mxu0 %v2692
  %2708 = vmatprep.subr.bf16.mxu0 0
  %2709 = vmatpush1.bf16.msra.mxu0 0
  %2710 = vmatprep.subr.bf16.mxu0 0
  %2711 = vmatpush1.bf16.msra.mxu0 0
  %2712 = vmatprep.subr.bf16.mxu0 0
  %2713 = vmatpush1.bf16.msra.mxu0 0
  %2714 = vmatprep.subr.bf16.mxu0 0
  %2715 = vmatpush1.bf16.msra.mxu0 0
  %2716 = vmatprep.subr.bf16.mxu0 0
  %2717 = vmatpush1.bf16.msra.mxu0 0
  %2718 = vmatprep.subr.bf16.mxu0 0
  %2719 = vmatpush1.bf16.msra.mxu0 0
  %2720 = vmatprep.subr.bf16.mxu0 0
  %2721 = vmatpush1.bf16.msra.mxu0 0
  %2722 = vmatprep.subr.bf16.mxu0 0
  %2723 = vmatpush1.bf16.msra.mxu0 0
  %2724 = vmatprep.subr.bf16.mxu0 0
  %2725 = vmatpush1.bf16.msra.mxu0 0
  %2726 = vmatprep.subr.bf16.mxu0 0
  %2727 = vmatpush1.bf16.msra.mxu0 0
  %2728 = vmatprep.subr.bf16.mxu0 0
  %2729 = vmatpush1.bf16.msra.mxu0 0
  %2730 = vmatprep.subr.bf16.mxu0 0
  %2731 = vmatpush1.bf16.msra.mxu0 0
  %2732 = vmatprep.mubr.bf16.mxu0 0
  %2733 = vmatmul.mubr.bf16.gmra.mrb[0].mxu0 %v2698
  %v2734 = vpop.f32.mrb[0].mxu0
  %v2735 = vadd.f32 %v2672, %v2734
  %v2736 = vpop.f32.mrb[0].mxu0
  %v2737 = vpop.f32.mrb[0].mxu0
  %v2738 = vadd.f32 %v2672, %v2737
  %v2739 = vpop.f32.mrb[0].mxu0
  %2740 = vdwg.mxu0
  %v2741 = vadd.f32 %v2571, %v2735
  %v2742 = vadd.f32 %v2572, %v2738
  %v2743 = vld [vmem:[%s14 + $0x1] sm:$0x1]
  %v2744 = vld [vmem:[%s15 + $0x1] sm:$0x1]
  %v2745 = vsel %vm74, %v2741, 0.0
  %2746 = vadd.xlane.f32.xlu0 %v2745
  %v2747 = vpop.xlane.xlu0 %2746
  %v2748 = vsel %vm74, %v2742, 0.0
  %2749 = vadd.xlane.f32.xlu0 %v2748
  %v2750 = vpop.xlane.xlu0 %2749
  %v2751 = vmul.f32 %v2747, %v81
  %v2752 = vmul.f32 %v2750, %v81
  %v2753 = vsub.f32 %v2741, %v2751
  %v2754 = vsub.f32 %v2742, %v2752
  %v2755 = vmul.f32 %v2753, %v2753
  %v2756 = vmul.f32 %v2754, %v2754
  %v2757 = vsel %vm74, %v2755, 0.0
  %2758 = vadd.xlane.f32.xlu0 %v2757
  %v2759 = vpop.xlane.xlu0 %2758
  %v2760 = vsel %vm74, %v2756, 0.0
  %2761 = vadd.xlane.f32.xlu0 %v2760
  %v2762 = vpop.xlane.xlu0 %2761
  %v2763 = vmul.f32 %v2759, %v81
  %v2764 = vmul.f32 %v2762, %v81
  %v2765 = vadd.f32 %v2763, 1e-12
  %v2766 = vadd.f32 %v2764, 1e-12
  %v2767 = vrsqrt.pop %v2765
  %v2768 = vrsqrt.pop %v2766
  %v2769 = vmul.f32 %v2753, %v2767
  %v2770 = vmul.f32 %v2754, %v2768
  %v2771 = vlaneseq
  %v2772 = vshrl.u32 %v2771, 7
  %v2773 = vsub.s32 0, %v2772
  %v2774 = vrot.slane %v2743, %v2773
  %v2775 = vmul.f32 %v2769, %v2774
  %v2776 = vmul.f32 %v2770, %v2774
  %v2777 = vlaneseq
  %v2778 = vshrl.u32 %v2777, 7
  %v2779 = vsub.s32 0, %v2778
  %v2780 = vrot.slane %v2744, %v2779
  %v2781 = vadd.f32 %v2775, %v2780
  %v2782 = vadd.f32 %v2776, %v2780
  %v2783 = vpack.c.bf16 %v2782, %v2781
  %s2784 = scalar_lea.vmem %s4, 32
  %v2785 = vld [vmem:[%s2784] sm:$0xf]
  %v2786 = vld [vmem:[%s2784 + $0x4] sm:$0xf]
  %v2787 = vld [vmem:[%s2784 + $0x8] sm:$0xf]
  %v2788 = vld [vmem:[%s2784 + $0xc] sm:$0xf]
  %v2789 = vld [vmem:[%s5 + $0x2] sm:$0x1]
  %v2790 = vlaneseq
  %v2791 = vshrl.u32 %v2790, 7
  %v2792 = vsub.s32 0, %v2791
  %v2793 = vrot.slane %v2789, %v2792
  %v2798 = vunpack.c.l.b16 %v2785
  %v2799 = vunpack.c.l.b16 %v2786
  %v2800 = vunpack.c.l.b16 %v2787
  %v2801 = vunpack.c.l.b16 %v2788
  %v2802 = vpack.c.b16 %v2799, %v2798
  %v2803 = vpack.c.b16 %v2801, %v2800
  %v2807 = vsel %vm74, %v2783, 0
  %2809 = vmatprep.subr.bf16.mxu0 0
  %2810 = vmatpush1.bf16.msra.mxu0 %v2802
  %2811 = vmatprep.subr.bf16.mxu0 0
  %2812 = vmatpush1.bf16.msra.mxu0 %v2803
  %2813 = vmatprep.subr.bf16.mxu0 0
  %2814 = vmatpush1.bf16.msra.mxu0 0
  %2815 = vmatprep.subr.bf16.mxu0 0
  %2816 = vmatpush1.bf16.msra.mxu0 0
  %2817 = vmatprep.subr.bf16.mxu0 0
  %2818 = vmatpush1.bf16.msra.mxu0 0
  %2819 = vmatprep.subr.bf16.mxu0 0
  %2820 = vmatpush1.bf16.msra.mxu0 0
  %2821 = vmatprep.subr.bf16.mxu0 0
  %2822 = vmatpush1.bf16.msra.mxu0 0
  %2823 = vmatprep.subr.bf16.mxu0 0
  %2824 = vmatpush1.bf16.msra.mxu0 0
  %2825 = vmatprep.subr.bf16.mxu0 0
  %2826 = vmatpush1.bf16.msra.mxu0 0
  %2827 = vmatprep.subr.bf16.mxu0 0
  %2828 = vmatpush1.bf16.msra.mxu0 0
  %2829 = vmatprep.subr.bf16.mxu0 0
  %2830 = vmatpush1.bf16.msra.mxu0 0
  %2831 = vmatprep.subr.bf16.mxu0 0
  %2832 = vmatpush1.bf16.msra.mxu0 0
  %2833 = vmatprep.subr.bf16.mxu0 0
  %2834 = vmatpush1.bf16.msra.mxu0 0
  %2835 = vmatprep.subr.bf16.mxu0 0
  %2836 = vmatpush1.bf16.msra.mxu0 0
  %2837 = vmatprep.subr.bf16.mxu0 0
  %2838 = vmatpush1.bf16.msra.mxu0 0
  %2839 = vmatprep.subr.bf16.mxu0 0
  %2840 = vmatpush1.bf16.msra.mxu0 0
  %2841 = vmatprep.mubr.bf16.mxu0 0
  %2842 = vmatmul.mubr.bf16.gmra.mrb[0].mxu0 %v2807
  %v2843 = vpop.f32.mrb[0].mxu0
  %v2844 = vadd.f32 %v2793, %v2843
  %v2845 = vpop.f32.mrb[0].mxu0
  %v2846 = vpop.f32.mrb[0].mxu0
  %v2847 = vadd.f32 %v2793, %v2846
  %v2848 = vpop.f32.mrb[0].mxu0
  %2849 = vdwg.mxu0
  %2852 = vrot.lane.b32.xlu0 %v2844, 120
  %v2853 = vpop.permute.xlu0 %2852
  %2854 = vrot.lane.b32.xlu0 %v2847, 120
  %v2855 = vpop.permute.xlu0 %2854
  %2858 = vrot.lane.b32.xlu0 %v2844, 112
  %v2859 = vpop.permute.xlu0 %2858
  %2860 = vrot.lane.b32.xlu0 %v2847, 112
  %v2861 = vpop.permute.xlu0 %2860
  %2864 = vrot.lane.b32.xlu0 %v2844, 104
  %v2865 = vpop.permute.xlu0 %2864
  %2866 = vrot.lane.b32.xlu0 %v2847, 104
  %v2867 = vpop.permute.xlu0 %2866
  %v2870 = vpack.c.bf16 %v2844, %v2844
  %v2871 = vpack.c.bf16 %v2847, %v2847
  %v2872 = vpack.c.bf16 %v2853, %v2853
  %v2873 = vpack.c.bf16 %v2855, %v2855
  %v2874 = vpack.c.bf16 %v2859, %v2859
  %v2875 = vpack.c.bf16 %v2861, %v2861
  %v2876 = vpack.c.bf16 %v2865, %v2865
  %v2877 = vpack.c.bf16 %v2867, %v2867
  %2879 = vrot.lane.b32.xlu0 %v2870, 96
  %v2880 = vpop.permute.xlu0 %2879
  %v2882 = vsel %vm215, %v2870, 0
  %v2885 = vsel %vm215, %v2880, 0
  %2887 = vmatprep.subr.bf16.mxu0 0
  %2888 = vmatpush1.bf16.xpose.msra.mxu0 %v2885
  %2889 = vmatprep.subr.bf16.mxu0 0
  %2890 = vmatpush1.bf16.xpose.msra.mxu0 0
  %2891 = vmatprep.subr.bf16.mxu0 0
  %2892 = vmatpush1.bf16.xpose.msra.mxu0 0
  %2893 = vmatprep.subr.bf16.mxu0 0
  %2894 = vmatpush1.bf16.xpose.msra.mxu0 0
  %2895 = vmatprep.subr.bf16.mxu0 0
  %2896 = vmatpush1.bf16.xpose.msra.mxu0 0
  %2897 = vmatprep.subr.bf16.mxu0 0
  %2898 = vmatpush1.bf16.xpose.msra.mxu0 0
  %2899 = vmatprep.subr.bf16.mxu0 0
  %2900 = vmatpush1.bf16.xpose.msra.mxu0 0
  %2901 = vmatprep.subr.bf16.mxu0 0
  %2902 = vmatpush1.bf16.xpose.msra.mxu0 0
  %2903 = vmatprep.subr.bf16.mxu0 0
  %2904 = vmatpush1.bf16.xpose.msra.mxu0 0
  %2905 = vmatprep.subr.bf16.mxu0 0
  %2906 = vmatpush1.bf16.xpose.msra.mxu0 0
  %2907 = vmatprep.subr.bf16.mxu0 0
  %2908 = vmatpush1.bf16.xpose.msra.mxu0 0
  %2909 = vmatprep.subr.bf16.mxu0 0
  %2910 = vmatpush1.bf16.xpose.msra.mxu0 0
  %2911 = vmatprep.subr.bf16.mxu0 0
  %2912 = vmatpush1.bf16.xpose.msra.mxu0 0
  %2913 = vmatprep.subr.bf16.mxu0 0
  %2914 = vmatpush1.bf16.xpose.msra.mxu0 0
  %2915 = vmatprep.subr.bf16.mxu0 0
  %2916 = vmatpush1.bf16.xpose.msra.mxu0 0
  %2917 = vmatprep.subr.bf16.mxu0 0
  %2918 = vmatpush1.bf16.xpose.msra.mxu0 0
  %2919 = vmatprep.mubr.bf16.mxu0 0
  %2920 = vmatmul.mubr.bf16.gmra.mrb[0].mxu0 %v2882
  %v2921 = vpop.f32.mrb[0].mxu0
  %v2922 = vadd.f32 0.0, %v2921
  %v2923 = vpop.f32.mrb[0].mxu0
  %v2924 = vpop.f32.mrb[0].mxu0
  %v2925 = vpop.f32.mrb[0].mxu0
  %2926 = vdwg.mxu0
  %2928 = vrot.lane.b32.xlu0 %v2871, 96
  %v2929 = vpop.permute.xlu0 %2928
  %v2931 = vsel %vm215, %v2871, 0
  %v2934 = vsel %vm215, %v2929, 0
  %2936 = vmatprep.subr.bf16.mxu0 0
  %2937 = vmatpush1.bf16.xpose.msra.mxu0 %v2934
  %2938 = vmatprep.subr.bf16.mxu0 0
  %2939 = vmatpush1.bf16.xpose.msra.mxu0 0
  %2940 = vmatprep.subr.bf16.mxu0 0
  %2941 = vmatpush1.bf16.xpose.msra.mxu0 0
  %2942 = vmatprep.subr.bf16.mxu0 0
  %2943 = vmatpush1.bf16.xpose.msra.mxu0 0
  %2944 = vmatprep.subr.bf16.mxu0 0
  %2945 = vmatpush1.bf16.xpose.msra.mxu0 0
  %2946 = vmatprep.subr.bf16.mxu0 0
  %2947 = vmatpush1.bf16.xpose.msra.mxu0 0
  %2948 = vmatprep.subr.bf16.mxu0 0
  %2949 = vmatpush1.bf16.xpose.msra.mxu0 0
  %2950 = vmatprep.subr.bf16.mxu0 0
  %2951 = vmatpush1.bf16.xpose.msra.mxu0 0
  %2952 = vmatprep.subr.bf16.mxu0 0
  %2953 = vmatpush1.bf16.xpose.msra.mxu0 0
  %2954 = vmatprep.subr.bf16.mxu0 0
  %2955 = vmatpush1.bf16.xpose.msra.mxu0 0
  %2956 = vmatprep.subr.bf16.mxu0 0
  %2957 = vmatpush1.bf16.xpose.msra.mxu0 0
  %2958 = vmatprep.subr.bf16.mxu0 0
  %2959 = vmatpush1.bf16.xpose.msra.mxu0 0
  %2960 = vmatprep.subr.bf16.mxu0 0
  %2961 = vmatpush1.bf16.xpose.msra.mxu0 0
  %2962 = vmatprep.subr.bf16.mxu0 0
  %2963 = vmatpush1.bf16.xpose.msra.mxu0 0
  %2964 = vmatprep.subr.bf16.mxu0 0
  %2965 = vmatpush1.bf16.xpose.msra.mxu0 0
  %2966 = vmatprep.subr.bf16.mxu0 0
  %2967 = vmatpush1.bf16.xpose.msra.mxu0 0
  %2968 = vmatprep.mubr.bf16.mxu0 0
  %2969 = vmatmul.mubr.bf16.gmra.mrb[0].mxu0 %v2931
  %v2970 = vpop.f32.mrb[0].mxu0
  %v2971 = vadd.f32 0.0, %v2970
  %v2972 = vpop.f32.mrb[0].mxu0
  %v2973 = vpop.f32.mrb[0].mxu0
  %v2974 = vpop.f32.mrb[0].mxu0
  %2975 = vdwg.mxu0
  %2977 = vrot.lane.b32.xlu0 %v2872, 96
  %v2978 = vpop.permute.xlu0 %2977
  %v2980 = vsel %vm215, %v2872, 0
  %v2983 = vsel %vm215, %v2978, 0
  %2985 = vmatprep.subr.bf16.mxu0 0
  %2986 = vmatpush1.bf16.xpose.msra.mxu0 %v2983
  %2987 = vmatprep.subr.bf16.mxu0 0
  %2988 = vmatpush1.bf16.xpose.msra.mxu0 0
  %2989 = vmatprep.subr.bf16.mxu0 0
  %2990 = vmatpush1.bf16.xpose.msra.mxu0 0
  %2991 = vmatprep.subr.bf16.mxu0 0
  %2992 = vmatpush1.bf16.xpose.msra.mxu0 0
  %2993 = vmatprep.subr.bf16.mxu0 0
  %2994 = vmatpush1.bf16.xpose.msra.mxu0 0
  %2995 = vmatprep.subr.bf16.mxu0 0
  %2996 = vmatpush1.bf16.xpose.msra.mxu0 0
  %2997 = vmatprep.subr.bf16.mxu0 0
  %2998 = vmatpush1.bf16.xpose.msra.mxu0 0
  %2999 = vmatprep.subr.bf16.mxu0 0
  %3000 = vmatpush1.bf16.xpose.msra.mxu0 0
  %3001 = vmatprep.subr.bf16.mxu0 0
  %3002 = vmatpush1.bf16.xpose.msra.mxu0 0
  %3003 = vmatprep.subr.bf16.mxu0 0
  %3004 = vmatpush1.bf16.xpose.msra.mxu0 0
  %3005 = vmatprep.subr.bf16.mxu0 0
  %3006 = vmatpush1.bf16.xpose.msra.mxu0 0
  %3007 = vmatprep.subr.bf16.mxu0 0
  %3008 = vmatpush1.bf16.xpose.msra.mxu0 0
  %3009 = vmatprep.subr.bf16.mxu0 0
  %3010 = vmatpush1.bf16.xpose.msra.mxu0 0
  %3011 = vmatprep.subr.bf16.mxu0 0
  %3012 = vmatpush1.bf16.xpose.msra.mxu0 0
  %3013 = vmatprep.subr.bf16.mxu0 0
  %3014 = vmatpush1.bf16.xpose.msra.mxu0 0
  %3015 = vmatprep.subr.bf16.mxu0 0
  %3016 = vmatpush1.bf16.xpose.msra.mxu0 0
  %3017 = vmatprep.mubr.bf16.mxu0 0
  %3018 = vmatmul.mubr.bf16.gmra.mrb[0].mxu0 %v2980
  %v3019 = vpop.f32.mrb[0].mxu0
  %v3020 = vadd.f32 0.0, %v3019
  %v3021 = vpop.f32.mrb[0].mxu0
  %v3022 = vpop.f32.mrb[0].mxu0
  %v3023 = vpop.f32.mrb[0].mxu0
  %3024 = vdwg.mxu0
  %3026 = vrot.lane.b32.xlu0 %v2873, 96
  %v3027 = vpop.permute.xlu0 %3026
  %v3029 = vsel %vm215, %v2873, 0
  %v3032 = vsel %vm215, %v3027, 0
  %3034 = vmatprep.subr.bf16.mxu0 0
  %3035 = vmatpush1.bf16.xpose.msra.mxu0 %v3032
  %3036 = vmatprep.subr.bf16.mxu0 0
  %3037 = vmatpush1.bf16.xpose.msra.mxu0 0
  %3038 = vmatprep.subr.bf16.mxu0 0
  %3039 = vmatpush1.bf16.xpose.msra.mxu0 0
  %3040 = vmatprep.subr.bf16.mxu0 0
  %3041 = vmatpush1.bf16.xpose.msra.mxu0 0
  %3042 = vmatprep.subr.bf16.mxu0 0
  %3043 = vmatpush1.bf16.xpose.msra.mxu0 0
  %3044 = vmatprep.subr.bf16.mxu0 0
  %3045 = vmatpush1.bf16.xpose.msra.mxu0 0
  %3046 = vmatprep.subr.bf16.mxu0 0
  %3047 = vmatpush1.bf16.xpose.msra.mxu0 0
  %3048 = vmatprep.subr.bf16.mxu0 0
  %3049 = vmatpush1.bf16.xpose.msra.mxu0 0
  %3050 = vmatprep.subr.bf16.mxu0 0
  %3051 = vmatpush1.bf16.xpose.msra.mxu0 0
  %3052 = vmatprep.subr.bf16.mxu0 0
  %3053 = vmatpush1.bf16.xpose.msra.mxu0 0
  %3054 = vmatprep.subr.bf16.mxu0 0
  %3055 = vmatpush1.bf16.xpose.msra.mxu0 0
  %3056 = vmatprep.subr.bf16.mxu0 0
  %3057 = vmatpush1.bf16.xpose.msra.mxu0 0
  %3058 = vmatprep.subr.bf16.mxu0 0
  %3059 = vmatpush1.bf16.xpose.msra.mxu0 0
  %3060 = vmatprep.subr.bf16.mxu0 0
  %3061 = vmatpush1.bf16.xpose.msra.mxu0 0
  %3062 = vmatprep.subr.bf16.mxu0 0
  %3063 = vmatpush1.bf16.xpose.msra.mxu0 0
  %3064 = vmatprep.subr.bf16.mxu0 0
  %3065 = vmatpush1.bf16.xpose.msra.mxu0 0
  %3066 = vmatprep.mubr.bf16.mxu0 0
  %3067 = vmatmul.mubr.bf16.gmra.mrb[0].mxu0 %v3029
  %v3068 = vpop.f32.mrb[0].mxu0
  %v3069 = vadd.f32 0.0, %v3068
  %v3070 = vpop.f32.mrb[0].mxu0
  %v3071 = vpop.f32.mrb[0].mxu0
  %v3072 = vpop.f32.mrb[0].mxu0
  %3073 = vdwg.mxu0
  %3075 = vrot.lane.b32.xlu0 %v2874, 96
  %v3076 = vpop.permute.xlu0 %3075
  %v3078 = vsel %vm215, %v2874, 0
  %v3081 = vsel %vm215, %v3076, 0
  %3083 = vmatprep.subr.bf16.mxu0 0
  %3084 = vmatpush1.bf16.xpose.msra.mxu0 %v3081
  %3085 = vmatprep.subr.bf16.mxu0 0
  %3086 = vmatpush1.bf16.xpose.msra.mxu0 0
  %3087 = vmatprep.subr.bf16.mxu0 0
  %3088 = vmatpush1.bf16.xpose.msra.mxu0 0
  %3089 = vmatprep.subr.bf16.mxu0 0
  %3090 = vmatpush1.bf16.xpose.msra.mxu0 0
  %3091 = vmatprep.subr.bf16.mxu0 0
  %3092 = vmatpush1.bf16.xpose.msra.mxu0 0
  %3093 = vmatprep.subr.bf16.mxu0 0
  %3094 = vmatpush1.bf16.xpose.msra.mxu0 0
  %3095 = vmatprep.subr.bf16.mxu0 0
  %3096 = vmatpush1.bf16.xpose.msra.mxu0 0
  %3097 = vmatprep.subr.bf16.mxu0 0
  %3098 = vmatpush1.bf16.xpose.msra.mxu0 0
  %3099 = vmatprep.subr.bf16.mxu0 0
  %3100 = vmatpush1.bf16.xpose.msra.mxu0 0
  %3101 = vmatprep.subr.bf16.mxu0 0
  %3102 = vmatpush1.bf16.xpose.msra.mxu0 0
  %3103 = vmatprep.subr.bf16.mxu0 0
  %3104 = vmatpush1.bf16.xpose.msra.mxu0 0
  %3105 = vmatprep.subr.bf16.mxu0 0
  %3106 = vmatpush1.bf16.xpose.msra.mxu0 0
  %3107 = vmatprep.subr.bf16.mxu0 0
  %3108 = vmatpush1.bf16.xpose.msra.mxu0 0
  %3109 = vmatprep.subr.bf16.mxu0 0
  %3110 = vmatpush1.bf16.xpose.msra.mxu0 0
  %3111 = vmatprep.subr.bf16.mxu0 0
  %3112 = vmatpush1.bf16.xpose.msra.mxu0 0
  %3113 = vmatprep.subr.bf16.mxu0 0
  %3114 = vmatpush1.bf16.xpose.msra.mxu0 0
  %3115 = vmatprep.mubr.bf16.mxu0 0
  %3116 = vmatmul.mubr.bf16.gmra.mrb[0].mxu0 %v3078
  %v3117 = vpop.f32.mrb[0].mxu0
  %v3118 = vadd.f32 0.0, %v3117
  %v3119 = vpop.f32.mrb[0].mxu0
  %v3120 = vpop.f32.mrb[0].mxu0
  %v3121 = vpop.f32.mrb[0].mxu0
  %3122 = vdwg.mxu0
  %3124 = vrot.lane.b32.xlu0 %v2875, 96
  %v3125 = vpop.permute.xlu0 %3124
  %v3127 = vsel %vm215, %v2875, 0
  %v3130 = vsel %vm215, %v3125, 0
  %3132 = vmatprep.subr.bf16.mxu0 0
  %3133 = vmatpush1.bf16.xpose.msra.mxu0 %v3130
  %3134 = vmatprep.subr.bf16.mxu0 0
  %3135 = vmatpush1.bf16.xpose.msra.mxu0 0
  %3136 = vmatprep.subr.bf16.mxu0 0
  %3137 = vmatpush1.bf16.xpose.msra.mxu0 0
  %3138 = vmatprep.subr.bf16.mxu0 0
  %3139 = vmatpush1.bf16.xpose.msra.mxu0 0
  %3140 = vmatprep.subr.bf16.mxu0 0
  %3141 = vmatpush1.bf16.xpose.msra.mxu0 0
  %3142 = vmatprep.subr.bf16.mxu0 0
  %3143 = vmatpush1.bf16.xpose.msra.mxu0 0
  %3144 = vmatprep.subr.bf16.mxu0 0
  %3145 = vmatpush1.bf16.xpose.msra.mxu0 0
  %3146 = vmatprep.subr.bf16.mxu0 0
  %3147 = vmatpush1.bf16.xpose.msra.mxu0 0
  %3148 = vmatprep.subr.bf16.mxu0 0
  %3149 = vmatpush1.bf16.xpose.msra.mxu0 0
  %3150 = vmatprep.subr.bf16.mxu0 0
  %3151 = vmatpush1.bf16.xpose.msra.mxu0 0
  %3152 = vmatprep.subr.bf16.mxu0 0
  %3153 = vmatpush1.bf16.xpose.msra.mxu0 0
  %3154 = vmatprep.subr.bf16.mxu0 0
  %3155 = vmatpush1.bf16.xpose.msra.mxu0 0
  %3156 = vmatprep.subr.bf16.mxu0 0
  %3157 = vmatpush1.bf16.xpose.msra.mxu0 0
  %3158 = vmatprep.subr.bf16.mxu0 0
  %3159 = vmatpush1.bf16.xpose.msra.mxu0 0
  %3160 = vmatprep.subr.bf16.mxu0 0
  %3161 = vmatpush1.bf16.xpose.msra.mxu0 0
  %3162 = vmatprep.subr.bf16.mxu0 0
  %3163 = vmatpush1.bf16.xpose.msra.mxu0 0
  %3164 = vmatprep.mubr.bf16.mxu0 0
  %3165 = vmatmul.mubr.bf16.gmra.mrb[0].mxu0 %v3127
  %v3166 = vpop.f32.mrb[0].mxu0
  %v3167 = vadd.f32 0.0, %v3166
  %v3168 = vpop.f32.mrb[0].mxu0
  %v3169 = vpop.f32.mrb[0].mxu0
  %v3170 = vpop.f32.mrb[0].mxu0
  %3171 = vdwg.mxu0
  %3173 = vrot.lane.b32.xlu0 %v2876, 96
  %v3174 = vpop.permute.xlu0 %3173
  %v3176 = vsel %vm215, %v2876, 0
  %v3179 = vsel %vm215, %v3174, 0
  %3181 = vmatprep.subr.bf16.mxu0 0
  %3182 = vmatpush1.bf16.xpose.msra.mxu0 %v3179
  %3183 = vmatprep.subr.bf16.mxu0 0
  %3184 = vmatpush1.bf16.xpose.msra.mxu0 0
  %3185 = vmatprep.subr.bf16.mxu0 0
  %3186 = vmatpush1.bf16.xpose.msra.mxu0 0
  %3187 = vmatprep.subr.bf16.mxu0 0
  %3188 = vmatpush1.bf16.xpose.msra.mxu0 0
  %3189 = vmatprep.subr.bf16.mxu0 0
  %3190 = vmatpush1.bf16.xpose.msra.mxu0 0
  %3191 = vmatprep.subr.bf16.mxu0 0
  %3192 = vmatpush1.bf16.xpose.msra.mxu0 0
  %3193 = vmatprep.subr.bf16.mxu0 0
  %3194 = vmatpush1.bf16.xpose.msra.mxu0 0
  %3195 = vmatprep.subr.bf16.mxu0 0
  %3196 = vmatpush1.bf16.xpose.msra.mxu0 0
  %3197 = vmatprep.subr.bf16.mxu0 0
  %3198 = vmatpush1.bf16.xpose.msra.mxu0 0
  %3199 = vmatprep.subr.bf16.mxu0 0
  %3200 = vmatpush1.bf16.xpose.msra.mxu0 0
  %3201 = vmatprep.subr.bf16.mxu0 0
  %3202 = vmatpush1.bf16.xpose.msra.mxu0 0
  %3203 = vmatprep.subr.bf16.mxu0 0
  %3204 = vmatpush1.bf16.xpose.msra.mxu0 0
  %3205 = vmatprep.subr.bf16.mxu0 0
  %3206 = vmatpush1.bf16.xpose.msra.mxu0 0
  %3207 = vmatprep.subr.bf16.mxu0 0
  %3208 = vmatpush1.bf16.xpose.msra.mxu0 0
  %3209 = vmatprep.subr.bf16.mxu0 0
  %3210 = vmatpush1.bf16.xpose.msra.mxu0 0
  %3211 = vmatprep.subr.bf16.mxu0 0
  %3212 = vmatpush1.bf16.xpose.msra.mxu0 0
  %3213 = vmatprep.mubr.bf16.mxu0 0
  %3214 = vmatmul.mubr.bf16.gmra.mrb[0].mxu0 %v3176
  %v3215 = vpop.f32.mrb[0].mxu0
  %v3216 = vadd.f32 0.0, %v3215
  %v3217 = vpop.f32.mrb[0].mxu0
  %v3218 = vpop.f32.mrb[0].mxu0
  %v3219 = vpop.f32.mrb[0].mxu0
  %3220 = vdwg.mxu0
  %3222 = vrot.lane.b32.xlu0 %v2877, 96
  %v3223 = vpop.permute.xlu0 %3222
  %v3225 = vsel %vm215, %v2877, 0
  %v3228 = vsel %vm215, %v3223, 0
  %3230 = vmatprep.subr.bf16.mxu0 0
  %3231 = vmatpush1.bf16.xpose.msra.mxu0 %v3228
  %3232 = vmatprep.subr.bf16.mxu0 0
  %3233 = vmatpush1.bf16.xpose.msra.mxu0 0
  %3234 = vmatprep.subr.bf16.mxu0 0
  %3235 = vmatpush1.bf16.xpose.msra.mxu0 0
  %3236 = vmatprep.subr.bf16.mxu0 0
  %3237 = vmatpush1.bf16.xpose.msra.mxu0 0
  %3238 = vmatprep.subr.bf16.mxu0 0
  %3239 = vmatpush1.bf16.xpose.msra.mxu0 0
  %3240 = vmatprep.subr.bf16.mxu0 0
  %3241 = vmatpush1.bf16.xpose.msra.mxu0 0
  %3242 = vmatprep.subr.bf16.mxu0 0
  %3243 = vmatpush1.bf16.xpose.msra.mxu0 0
  %3244 = vmatprep.subr.bf16.mxu0 0
  %3245 = vmatpush1.bf16.xpose.msra.mxu0 0
  %3246 = vmatprep.subr.bf16.mxu0 0
  %3247 = vmatpush1.bf16.xpose.msra.mxu0 0
  %3248 = vmatprep.subr.bf16.mxu0 0
  %3249 = vmatpush1.bf16.xpose.msra.mxu0 0
  %3250 = vmatprep.subr.bf16.mxu0 0
  %3251 = vmatpush1.bf16.xpose.msra.mxu0 0
  %3252 = vmatprep.subr.bf16.mxu0 0
  %3253 = vmatpush1.bf16.xpose.msra.mxu0 0
  %3254 = vmatprep.subr.bf16.mxu0 0
  %3255 = vmatpush1.bf16.xpose.msra.mxu0 0
  %3256 = vmatprep.subr.bf16.mxu0 0
  %3257 = vmatpush1.bf16.xpose.msra.mxu0 0
  %3258 = vmatprep.subr.bf16.mxu0 0
  %3259 = vmatpush1.bf16.xpose.msra.mxu0 0
  %3260 = vmatprep.subr.bf16.mxu0 0
  %3261 = vmatpush1.bf16.xpose.msra.mxu0 0
  %3262 = vmatprep.mubr.bf16.mxu0 0
  %3263 = vmatmul.mubr.bf16.gmra.mrb[0].mxu0 %v3225
  %v3264 = vpop.f32.mrb[0].mxu0
  %v3265 = vadd.f32 0.0, %v3264
  %v3266 = vpop.f32.mrb[0].mxu0
  %v3267 = vpop.f32.mrb[0].mxu0
  %v3268 = vpop.f32.mrb[0].mxu0
  %3269 = vdwg.mxu0
  %v3270 = vmul.f32 %v2922, 0.35355338
  %v3271 = vmul.f32 %v2971, 0.35355338
  %v3272 = vmul.f32 %v3020, 0.35355338
  %v3273 = vmul.f32 %v3069, 0.35355338
  %v3274 = vmul.f32 %v3118, 0.35355338
  %v3275 = vmul.f32 %v3167, 0.35355338
  %v3276 = vmul.f32 %v3216, 0.35355338
  %v3277 = vmul.f32 %v3265, 0.35355338
  %v3278 = vadd.f32 %v3270, %v62
  %v3279 = vadd.f32 %v3271, %v63
  %v3280 = vadd.f32 %v3272, %v64
  %v3281 = vadd.f32 %v3273, %v65
  %v3282 = vadd.f32 %v3274, %v66
  %v3283 = vadd.f32 %v3275, %v67
  %v3284 = vadd.f32 %v3276, %v68
  %v3285 = vadd.f32 %v3277, %v69
  %v3286 = vsel %vm215, %v3278, -inf
  %3287 = vmax.xlane.f32.xlu0 %v3286
  %v3288 = vpop.xlane.xlu0 %3287
  %v3289 = vsel %vm215, %v3279, -inf
  %3290 = vmax.xlane.f32.xlu0 %v3289
  %v3291 = vpop.xlane.xlu0 %3290
  %v3292 = vsel %vm215, %v3280, -inf
  %3293 = vmax.xlane.f32.xlu0 %v3292
  %v3294 = vpop.xlane.xlu0 %3293
  %v3295 = vsel %vm215, %v3281, -inf
  %3296 = vmax.xlane.f32.xlu0 %v3295
  %v3297 = vpop.xlane.xlu0 %3296
  %v3298 = vsel %vm215, %v3282, -inf
  %3299 = vmax.xlane.f32.xlu0 %v3298
  %v3300 = vpop.xlane.xlu0 %3299
  %v3301 = vsel %vm215, %v3283, -inf
  %3302 = vmax.xlane.f32.xlu0 %v3301
  %v3303 = vpop.xlane.xlu0 %3302
  %v3304 = vsel %vm215, %v3284, -inf
  %3305 = vmax.xlane.f32.xlu0 %v3304
  %v3306 = vpop.xlane.xlu0 %3305
  %v3307 = vsel %vm215, %v3285, -inf
  %3308 = vmax.xlane.f32.xlu0 %v3307
  %v3309 = vpop.xlane.xlu0 %3308
  %v3310 = vsub.f32 %v3278, %v3288
  %v3311 = vsub.f32 %v3279, %v3291
  %v3312 = vsub.f32 %v3280, %v3294
  %v3313 = vsub.f32 %v3281, %v3297
  %v3314 = vsub.f32 %v3282, %v3300
  %v3315 = vsub.f32 %v3283, %v3303
  %v3316 = vsub.f32 %v3284, %v3306
  %v3317 = vsub.f32 %v3285, %v3309
  %v3318 = vmul.f32 %v3310, 1.442695
  %v3319 = vpow.pop %v3318
  %v3320 = vmul.f32 %v3311, 1.442695
  %v3321 = vpow.pop %v3320
  %v3322 = vmul.f32 %v3312, 1.442695
  %v3323 = vpow.pop %v3322
  %v3324 = vmul.f32 %v3313, 1.442695
  %v3325 = vpow.pop %v3324
  %v3326 = vmul.f32 %v3314, 1.442695
  %v3327 = vpow.pop %v3326
  %v3328 = vmul.f32 %v3315, 1.442695
  %v3329 = vpow.pop %v3328
  %v3330 = vmul.f32 %v3316, 1.442695
  %v3331 = vpow.pop %v3330
  %v3332 = vmul.f32 %v3317, 1.442695
  %v3333 = vpow.pop %v3332
  %v3334 = vsel %vm215, %v3319, 0.0
  %3335 = vadd.xlane.f32.xlu0 %v3334
  %v3336 = vpop.xlane.xlu0 %3335
  %v3337 = vsel %vm215, %v3321, 0.0
  %3338 = vadd.xlane.f32.xlu0 %v3337
  %v3339 = vpop.xlane.xlu0 %3338
  %v3340 = vsel %vm215, %v3323, 0.0
  %3341 = vadd.xlane.f32.xlu0 %v3340
  %v3342 = vpop.xlane.xlu0 %3341
  %v3343 = vsel %vm215, %v3325, 0.0
  %3344 = vadd.xlane.f32.xlu0 %v3343
  %v3345 = vpop.xlane.xlu0 %3344
  %v3346 = vsel %vm215, %v3327, 0.0
  %3347 = vadd.xlane.f32.xlu0 %v3346
  %v3348 = vpop.xlane.xlu0 %3347
  %v3349 = vsel %vm215, %v3329, 0.0
  %3350 = vadd.xlane.f32.xlu0 %v3349
  %v3351 = vpop.xlane.xlu0 %3350
  %v3352 = vsel %vm215, %v3331, 0.0
  %3353 = vadd.xlane.f32.xlu0 %v3352
  %v3354 = vpop.xlane.xlu0 %3353
  %v3355 = vsel %vm215, %v3333, 0.0
  %3356 = vadd.xlane.f32.xlu0 %v3355
  %v3357 = vpop.xlane.xlu0 %3356
  %v3358 = vrcp.pop %v3336
  %v3359 = vrcp.pop %v3339
  %v3360 = vrcp.pop %v3342
  %v3361 = vrcp.pop %v3345
  %v3362 = vrcp.pop %v3348
  %v3363 = vrcp.pop %v3351
  %v3364 = vrcp.pop %v3354
  %v3365 = vrcp.pop %v3357
  %v3366 = vmul.f32 %v3319, %v3358
  %v3367 = vmul.f32 %v3321, %v3359
  %v3368 = vmul.f32 %v3323, %v3360
  %v3369 = vmul.f32 %v3325, %v3361
  %v3370 = vmul.f32 %v3327, %v3362
  %v3371 = vmul.f32 %v3329, %v3363
  %v3372 = vmul.f32 %v3331, %v3364
  %v3373 = vmul.f32 %v3333, %v3365
  %v3374 = vpack.c.bf16 %v3366, %v3366
  %v3375 = vpack.c.bf16 %v3367, %v3367
  %v3376 = vpack.c.bf16 %v3368, %v3368
  %v3377 = vpack.c.bf16 %v3369, %v3369
  %v3378 = vpack.c.bf16 %v3370, %v3370
  %v3379 = vpack.c.bf16 %v3371, %v3371
  %v3380 = vpack.c.bf16 %v3372, %v3372
  %v3381 = vpack.c.bf16 %v3373, %v3373
  %3382 = vrot.lane.b32.xlu0 %v2870, 64
  %v3383 = vpop.permute.xlu0 %3382
  %v3385 = vsel %vm215, %v3374, 0
  %v3388 = vsel %vm722, %v3383, 0
  %3390 = vmatprep.subr.bf16.mxu0 0
  %3391 = vmatpush1.bf16.msra.mxu0 %v3388
  %3392 = vmatprep.subr.bf16.mxu0 0
  %3393 = vmatpush1.bf16.msra.mxu0 0
  %3394 = vmatprep.subr.bf16.mxu0 0
  %3395 = vmatpush1.bf16.msra.mxu0 0
  %3396 = vmatprep.subr.bf16.mxu0 0
  %3397 = vmatpush1.bf16.msra.mxu0 0
  %3398 = vmatprep.subr.bf16.mxu0 0
  %3399 = vmatpush1.bf16.msra.mxu0 0
  %3400 = vmatprep.subr.bf16.mxu0 0
  %3401 = vmatpush1.bf16.msra.mxu0 0
  %3402 = vmatprep.subr.bf16.mxu0 0
  %3403 = vmatpush1.bf16.msra.mxu0 0
  %3404 = vmatprep.subr.bf16.mxu0 0
  %3405 = vmatpush1.bf16.msra.mxu0 0
  %3406 = vmatprep.subr.bf16.mxu0 0
  %3407 = vmatpush1.bf16.msra.mxu0 0
  %3408 = vmatprep.subr.bf16.mxu0 0
  %3409 = vmatpush1.bf16.msra.mxu0 0
  %3410 = vmatprep.subr.bf16.mxu0 0
  %3411 = vmatpush1.bf16.msra.mxu0 0
  %3412 = vmatprep.subr.bf16.mxu0 0
  %3413 = vmatpush1.bf16.msra.mxu0 0
  %3414 = vmatprep.subr.bf16.mxu0 0
  %3415 = vmatpush1.bf16.msra.mxu0 0
  %3416 = vmatprep.subr.bf16.mxu0 0
  %3417 = vmatpush1.bf16.msra.mxu0 0
  %3418 = vmatprep.subr.bf16.mxu0 0
  %3419 = vmatpush1.bf16.msra.mxu0 0
  %3420 = vmatprep.subr.bf16.mxu0 0
  %3421 = vmatpush1.bf16.msra.mxu0 0
  %3422 = vmatprep.mubr.bf16.mxu0 0
  %3423 = vmatmul.mubr.bf16.gmra.mrb[0].mxu0 %v3385
  %v3424 = vpop.f32.mrb[0].mxu0
  %v3425 = vadd.f32 0.0, %v3424
  %v3426 = vpop.f32.mrb[0].mxu0
  %v3427 = vpop.f32.mrb[0].mxu0
  %v3428 = vpop.f32.mrb[0].mxu0
  %3429 = vdwg.mxu0
  %3430 = vrot.lane.b32.xlu0 %v2871, 64
  %v3431 = vpop.permute.xlu0 %3430
  %v3433 = vsel %vm215, %v3375, 0
  %v3436 = vsel %vm722, %v3431, 0
  %3438 = vmatprep.subr.bf16.mxu0 0
  %3439 = vmatpush1.bf16.msra.mxu0 %v3436
  %3440 = vmatprep.subr.bf16.mxu0 0
  %3441 = vmatpush1.bf16.msra.mxu0 0
  %3442 = vmatprep.subr.bf16.mxu0 0
  %3443 = vmatpush1.bf16.msra.mxu0 0
  %3444 = vmatprep.subr.bf16.mxu0 0
  %3445 = vmatpush1.bf16.msra.mxu0 0
  %3446 = vmatprep.subr.bf16.mxu0 0
  %3447 = vmatpush1.bf16.msra.mxu0 0
  %3448 = vmatprep.subr.bf16.mxu0 0
  %3449 = vmatpush1.bf16.msra.mxu0 0
  %3450 = vmatprep.subr.bf16.mxu0 0
  %3451 = vmatpush1.bf16.msra.mxu0 0
  %3452 = vmatprep.subr.bf16.mxu0 0
  %3453 = vmatpush1.bf16.msra.mxu0 0
  %3454 = vmatprep.subr.bf16.mxu0 0
  %3455 = vmatpush1.bf16.msra.mxu0 0
  %3456 = vmatprep.subr.bf16.mxu0 0
  %3457 = vmatpush1.bf16.msra.mxu0 0
  %3458 = vmatprep.subr.bf16.mxu0 0
  %3459 = vmatpush1.bf16.msra.mxu0 0
  %3460 = vmatprep.subr.bf16.mxu0 0
  %3461 = vmatpush1.bf16.msra.mxu0 0
  %3462 = vmatprep.subr.bf16.mxu0 0
  %3463 = vmatpush1.bf16.msra.mxu0 0
  %3464 = vmatprep.subr.bf16.mxu0 0
  %3465 = vmatpush1.bf16.msra.mxu0 0
  %3466 = vmatprep.subr.bf16.mxu0 0
  %3467 = vmatpush1.bf16.msra.mxu0 0
  %3468 = vmatprep.subr.bf16.mxu0 0
  %3469 = vmatpush1.bf16.msra.mxu0 0
  %3470 = vmatprep.mubr.bf16.mxu0 0
  %3471 = vmatmul.mubr.bf16.gmra.mrb[0].mxu0 %v3433
  %v3472 = vpop.f32.mrb[0].mxu0
  %v3473 = vadd.f32 0.0, %v3472
  %v3474 = vpop.f32.mrb[0].mxu0
  %v3475 = vpop.f32.mrb[0].mxu0
  %v3476 = vpop.f32.mrb[0].mxu0
  %3477 = vdwg.mxu0
  %3478 = vrot.lane.b32.xlu0 %v2872, 64
  %v3479 = vpop.permute.xlu0 %3478
  %v3481 = vsel %vm215, %v3376, 0
  %v3484 = vsel %vm722, %v3479, 0
  %3486 = vmatprep.subr.bf16.mxu0 0
  %3487 = vmatpush1.bf16.msra.mxu0 %v3484
  %3488 = vmatprep.subr.bf16.mxu0 0
  %3489 = vmatpush1.bf16.msra.mxu0 0
  %3490 = vmatprep.subr.bf16.mxu0 0
  %3491 = vmatpush1.bf16.msra.mxu0 0
  %3492 = vmatprep.subr.bf16.mxu0 0
  %3493 = vmatpush1.bf16.msra.mxu0 0
  %3494 = vmatprep.subr.bf16.mxu0 0
  %3495 = vmatpush1.bf16.msra.mxu0 0
  %3496 = vmatprep.subr.bf16.mxu0 0
  %3497 = vmatpush1.bf16.msra.mxu0 0
  %3498 = vmatprep.subr.bf16.mxu0 0
  %3499 = vmatpush1.bf16.msra.mxu0 0
  %3500 = vmatprep.subr.bf16.mxu0 0
  %3501 = vmatpush1.bf16.msra.mxu0 0
  %3502 = vmatprep.subr.bf16.mxu0 0
  %3503 = vmatpush1.bf16.msra.mxu0 0
  %3504 = vmatprep.subr.bf16.mxu0 0
  %3505 = vmatpush1.bf16.msra.mxu0 0
  %3506 = vmatprep.subr.bf16.mxu0 0
  %3507 = vmatpush1.bf16.msra.mxu0 0
  %3508 = vmatprep.subr.bf16.mxu0 0
  %3509 = vmatpush1.bf16.msra.mxu0 0
  %3510 = vmatprep.subr.bf16.mxu0 0
  %3511 = vmatpush1.bf16.msra.mxu0 0
  %3512 = vmatprep.subr.bf16.mxu0 0
  %3513 = vmatpush1.bf16.msra.mxu0 0
  %3514 = vmatprep.subr.bf16.mxu0 0
  %3515 = vmatpush1.bf16.msra.mxu0 0
  %3516 = vmatprep.subr.bf16.mxu0 0
  %3517 = vmatpush1.bf16.msra.mxu0 0
  %3518 = vmatprep.mubr.bf16.mxu0 0
  %3519 = vmatmul.mubr.bf16.gmra.mrb[0].mxu0 %v3481
  %v3520 = vpop.f32.mrb[0].mxu0
  %v3521 = vadd.f32 0.0, %v3520
  %v3522 = vpop.f32.mrb[0].mxu0
  %v3523 = vpop.f32.mrb[0].mxu0
  %v3524 = vpop.f32.mrb[0].mxu0
  %3525 = vdwg.mxu0
  %3526 = vrot.lane.b32.xlu0 %v2873, 64
  %v3527 = vpop.permute.xlu0 %3526
  %v3529 = vsel %vm215, %v3377, 0
  %v3532 = vsel %vm722, %v3527, 0
  %3534 = vmatprep.subr.bf16.mxu0 0
  %3535 = vmatpush1.bf16.msra.mxu0 %v3532
  %3536 = vmatprep.subr.bf16.mxu0 0
  %3537 = vmatpush1.bf16.msra.mxu0 0
  %3538 = vmatprep.subr.bf16.mxu0 0
  %3539 = vmatpush1.bf16.msra.mxu0 0
  %3540 = vmatprep.subr.bf16.mxu0 0
  %3541 = vmatpush1.bf16.msra.mxu0 0
  %3542 = vmatprep.subr.bf16.mxu0 0
  %3543 = vmatpush1.bf16.msra.mxu0 0
  %3544 = vmatprep.subr.bf16.mxu0 0
  %3545 = vmatpush1.bf16.msra.mxu0 0
  %3546 = vmatprep.subr.bf16.mxu0 0
  %3547 = vmatpush1.bf16.msra.mxu0 0
  %3548 = vmatprep.subr.bf16.mxu0 0
  %3549 = vmatpush1.bf16.msra.mxu0 0
  %3550 = vmatprep.subr.bf16.mxu0 0
  %3551 = vmatpush1.bf16.msra.mxu0 0
  %3552 = vmatprep.subr.bf16.mxu0 0
  %3553 = vmatpush1.bf16.msra.mxu0 0
  %3554 = vmatprep.subr.bf16.mxu0 0
  %3555 = vmatpush1.bf16.msra.mxu0 0
  %3556 = vmatprep.subr.bf16.mxu0 0
  %3557 = vmatpush1.bf16.msra.mxu0 0
  %3558 = vmatprep.subr.bf16.mxu0 0
  %3559 = vmatpush1.bf16.msra.mxu0 0
  %3560 = vmatprep.subr.bf16.mxu0 0
  %3561 = vmatpush1.bf16.msra.mxu0 0
  %3562 = vmatprep.subr.bf16.mxu0 0
  %3563 = vmatpush1.bf16.msra.mxu0 0
  %3564 = vmatprep.subr.bf16.mxu0 0
  %3565 = vmatpush1.bf16.msra.mxu0 0
  %3566 = vmatprep.mubr.bf16.mxu0 0
  %3567 = vmatmul.mubr.bf16.gmra.mrb[0].mxu0 %v3529
  %v3568 = vpop.f32.mrb[0].mxu0
  %v3569 = vadd.f32 0.0, %v3568
  %v3570 = vpop.f32.mrb[0].mxu0
  %v3571 = vpop.f32.mrb[0].mxu0
  %v3572 = vpop.f32.mrb[0].mxu0
  %3573 = vdwg.mxu0
  %3574 = vrot.lane.b32.xlu0 %v2874, 64
  %v3575 = vpop.permute.xlu0 %3574
  %v3577 = vsel %vm215, %v3378, 0
  %v3580 = vsel %vm722, %v3575, 0
  %3582 = vmatprep.subr.bf16.mxu0 0
  %3583 = vmatpush1.bf16.msra.mxu0 %v3580
  %3584 = vmatprep.subr.bf16.mxu0 0
  %3585 = vmatpush1.bf16.msra.mxu0 0
  %3586 = vmatprep.subr.bf16.mxu0 0
  %3587 = vmatpush1.bf16.msra.mxu0 0
  %3588 = vmatprep.subr.bf16.mxu0 0
  %3589 = vmatpush1.bf16.msra.mxu0 0
  %3590 = vmatprep.subr.bf16.mxu0 0
  %3591 = vmatpush1.bf16.msra.mxu0 0
  %3592 = vmatprep.subr.bf16.mxu0 0
  %3593 = vmatpush1.bf16.msra.mxu0 0
  %3594 = vmatprep.subr.bf16.mxu0 0
  %3595 = vmatpush1.bf16.msra.mxu0 0
  %3596 = vmatprep.subr.bf16.mxu0 0
  %3597 = vmatpush1.bf16.msra.mxu0 0
  %3598 = vmatprep.subr.bf16.mxu0 0
  %3599 = vmatpush1.bf16.msra.mxu0 0
  %3600 = vmatprep.subr.bf16.mxu0 0
  %3601 = vmatpush1.bf16.msra.mxu0 0
  %3602 = vmatprep.subr.bf16.mxu0 0
  %3603 = vmatpush1.bf16.msra.mxu0 0
  %3604 = vmatprep.subr.bf16.mxu0 0
  %3605 = vmatpush1.bf16.msra.mxu0 0
  %3606 = vmatprep.subr.bf16.mxu0 0
  %3607 = vmatpush1.bf16.msra.mxu0 0
  %3608 = vmatprep.subr.bf16.mxu0 0
  %3609 = vmatpush1.bf16.msra.mxu0 0
  %3610 = vmatprep.subr.bf16.mxu0 0
  %3611 = vmatpush1.bf16.msra.mxu0 0
  %3612 = vmatprep.subr.bf16.mxu0 0
  %3613 = vmatpush1.bf16.msra.mxu0 0
  %3614 = vmatprep.mubr.bf16.mxu0 0
  %3615 = vmatmul.mubr.bf16.gmra.mrb[0].mxu0 %v3577
  %v3616 = vpop.f32.mrb[0].mxu0
  %v3617 = vadd.f32 0.0, %v3616
  %v3618 = vpop.f32.mrb[0].mxu0
  %v3619 = vpop.f32.mrb[0].mxu0
  %v3620 = vpop.f32.mrb[0].mxu0
  %3621 = vdwg.mxu0
  %3622 = vrot.lane.b32.xlu0 %v2875, 64
  %v3623 = vpop.permute.xlu0 %3622
  %v3625 = vsel %vm215, %v3379, 0
  %v3628 = vsel %vm722, %v3623, 0
  %3630 = vmatprep.subr.bf16.mxu0 0
  %3631 = vmatpush1.bf16.msra.mxu0 %v3628
  %3632 = vmatprep.subr.bf16.mxu0 0
  %3633 = vmatpush1.bf16.msra.mxu0 0
  %3634 = vmatprep.subr.bf16.mxu0 0
  %3635 = vmatpush1.bf16.msra.mxu0 0
  %3636 = vmatprep.subr.bf16.mxu0 0
  %3637 = vmatpush1.bf16.msra.mxu0 0
  %3638 = vmatprep.subr.bf16.mxu0 0
  %3639 = vmatpush1.bf16.msra.mxu0 0
  %3640 = vmatprep.subr.bf16.mxu0 0
  %3641 = vmatpush1.bf16.msra.mxu0 0
  %3642 = vmatprep.subr.bf16.mxu0 0
  %3643 = vmatpush1.bf16.msra.mxu0 0
  %3644 = vmatprep.subr.bf16.mxu0 0
  %3645 = vmatpush1.bf16.msra.mxu0 0
  %3646 = vmatprep.subr.bf16.mxu0 0
  %3647 = vmatpush1.bf16.msra.mxu0 0
  %3648 = vmatprep.subr.bf16.mxu0 0
  %3649 = vmatpush1.bf16.msra.mxu0 0
  %3650 = vmatprep.subr.bf16.mxu0 0
  %3651 = vmatpush1.bf16.msra.mxu0 0
  %3652 = vmatprep.subr.bf16.mxu0 0
  %3653 = vmatpush1.bf16.msra.mxu0 0
  %3654 = vmatprep.subr.bf16.mxu0 0
  %3655 = vmatpush1.bf16.msra.mxu0 0
  %3656 = vmatprep.subr.bf16.mxu0 0
  %3657 = vmatpush1.bf16.msra.mxu0 0
  %3658 = vmatprep.subr.bf16.mxu0 0
  %3659 = vmatpush1.bf16.msra.mxu0 0
  %3660 = vmatprep.subr.bf16.mxu0 0
  %3661 = vmatpush1.bf16.msra.mxu0 0
  %3662 = vmatprep.mubr.bf16.mxu0 0
  %3663 = vmatmul.mubr.bf16.gmra.mrb[0].mxu0 %v3625
  %v3664 = vpop.f32.mrb[0].mxu0
  %v3665 = vadd.f32 0.0, %v3664
  %v3666 = vpop.f32.mrb[0].mxu0
  %v3667 = vpop.f32.mrb[0].mxu0
  %v3668 = vpop.f32.mrb[0].mxu0
  %3669 = vdwg.mxu0
  %3670 = vrot.lane.b32.xlu0 %v2876, 64
  %v3671 = vpop.permute.xlu0 %3670
  %v3673 = vsel %vm215, %v3380, 0
  %v3676 = vsel %vm722, %v3671, 0
  %3678 = vmatprep.subr.bf16.mxu0 0
  %3679 = vmatpush1.bf16.msra.mxu0 %v3676
  %3680 = vmatprep.subr.bf16.mxu0 0
  %3681 = vmatpush1.bf16.msra.mxu0 0
  %3682 = vmatprep.subr.bf16.mxu0 0
  %3683 = vmatpush1.bf16.msra.mxu0 0
  %3684 = vmatprep.subr.bf16.mxu0 0
  %3685 = vmatpush1.bf16.msra.mxu0 0
  %3686 = vmatprep.subr.bf16.mxu0 0
  %3687 = vmatpush1.bf16.msra.mxu0 0
  %3688 = vmatprep.subr.bf16.mxu0 0
  %3689 = vmatpush1.bf16.msra.mxu0 0
  %3690 = vmatprep.subr.bf16.mxu0 0
  %3691 = vmatpush1.bf16.msra.mxu0 0
  %3692 = vmatprep.subr.bf16.mxu0 0
  %3693 = vmatpush1.bf16.msra.mxu0 0
  %3694 = vmatprep.subr.bf16.mxu0 0
  %3695 = vmatpush1.bf16.msra.mxu0 0
  %3696 = vmatprep.subr.bf16.mxu0 0
  %3697 = vmatpush1.bf16.msra.mxu0 0
  %3698 = vmatprep.subr.bf16.mxu0 0
  %3699 = vmatpush1.bf16.msra.mxu0 0
  %3700 = vmatprep.subr.bf16.mxu0 0
  %3701 = vmatpush1.bf16.msra.mxu0 0
  %3702 = vmatprep.subr.bf16.mxu0 0
  %3703 = vmatpush1.bf16.msra.mxu0 0
  %3704 = vmatprep.subr.bf16.mxu0 0
  %3705 = vmatpush1.bf16.msra.mxu0 0
  %3706 = vmatprep.subr.bf16.mxu0 0
  %3707 = vmatpush1.bf16.msra.mxu0 0
  %3708 = vmatprep.subr.bf16.mxu0 0
  %3709 = vmatpush1.bf16.msra.mxu0 0
  %3710 = vmatprep.mubr.bf16.mxu0 0
  %3711 = vmatmul.mubr.bf16.gmra.mrb[0].mxu0 %v3673
  %v3712 = vpop.f32.mrb[0].mxu0
  %v3713 = vadd.f32 0.0, %v3712
  %v3714 = vpop.f32.mrb[0].mxu0
  %v3715 = vpop.f32.mrb[0].mxu0
  %v3716 = vpop.f32.mrb[0].mxu0
  %3717 = vdwg.mxu0
  %3718 = vrot.lane.b32.xlu0 %v2877, 64
  %v3719 = vpop.permute.xlu0 %3718
  %v3721 = vsel %vm215, %v3381, 0
  %v3724 = vsel %vm722, %v3719, 0
  %3726 = vmatprep.subr.bf16.mxu0 0
  %3727 = vmatpush1.bf16.msra.mxu0 %v3724
  %3728 = vmatprep.subr.bf16.mxu0 0
  %3729 = vmatpush1.bf16.msra.mxu0 0
  %3730 = vmatprep.subr.bf16.mxu0 0
  %3731 = vmatpush1.bf16.msra.mxu0 0
  %3732 = vmatprep.subr.bf16.mxu0 0
  %3733 = vmatpush1.bf16.msra.mxu0 0
  %3734 = vmatprep.subr.bf16.mxu0 0
  %3735 = vmatpush1.bf16.msra.mxu0 0
  %3736 = vmatprep.subr.bf16.mxu0 0
  %3737 = vmatpush1.bf16.msra.mxu0 0
  %3738 = vmatprep.subr.bf16.mxu0 0
  %3739 = vmatpush1.bf16.msra.mxu0 0
  %3740 = vmatprep.subr.bf16.mxu0 0
  %3741 = vmatpush1.bf16.msra.mxu0 0
  %3742 = vmatprep.subr.bf16.mxu0 0
  %3743 = vmatpush1.bf16.msra.mxu0 0
  %3744 = vmatprep.subr.bf16.mxu0 0
  %3745 = vmatpush1.bf16.msra.mxu0 0
  %3746 = vmatprep.subr.bf16.mxu0 0
  %3747 = vmatpush1.bf16.msra.mxu0 0
  %3748 = vmatprep.subr.bf16.mxu0 0
  %3749 = vmatpush1.bf16.msra.mxu0 0
  %3750 = vmatprep.subr.bf16.mxu0 0
  %3751 = vmatpush1.bf16.msra.mxu0 0
  %3752 = vmatprep.subr.bf16.mxu0 0
  %3753 = vmatpush1.bf16.msra.mxu0 0
  %3754 = vmatprep.subr.bf16.mxu0 0
  %3755 = vmatpush1.bf16.msra.mxu0 0
  %3756 = vmatprep.subr.bf16.mxu0 0
  %3757 = vmatpush1.bf16.msra.mxu0 0
  %3758 = vmatprep.mubr.bf16.mxu0 0
  %3759 = vmatmul.mubr.bf16.gmra.mrb[0].mxu0 %v3721
  %v3760 = vpop.f32.mrb[0].mxu0
  %v3761 = vadd.f32 0.0, %v3760
  %v3762 = vpop.f32.mrb[0].mxu0
  %v3763 = vpop.f32.mrb[0].mxu0
  %v3764 = vpop.f32.mrb[0].mxu0
  %3765 = vdwg.mxu0
  %3768 = vrot.lane.b32.xlu0 %v3521, 8
  %v3769 = vpop.permute.xlu0 %3768
  %3770 = vrot.lane.b32.xlu0 %v3569, 8
  %v3771 = vpop.permute.xlu0 %3770
  %3776 = vrot.lane.b32.xlu0 %v3617, 16
  %v3777 = vpop.permute.xlu0 %3776
  %3778 = vrot.lane.b32.xlu0 %v3665, 16
  %v3779 = vpop.permute.xlu0 %3778
  %3784 = vrot.lane.b32.xlu0 %v3713, 24
  %v3785 = vpop.permute.xlu0 %3784
  %3786 = vrot.lane.b32.xlu0 %v3761, 24
  %v3787 = vpop.permute.xlu0 %3786
  %v3790 = vsel %vm215, %v3425, %v3769
  %v3791 = vsel %vm215, %v3473, %v3771
  %v3792 = vsel %vm1128, %v3790, %v3777
  %v3793 = vsel %vm1128, %v3791, %v3779
  %v3794 = vsel %vm1131, %v3792, %v3785
  %v3795 = vsel %vm1131, %v3793, %v3787
  %v3796 = vpack.c.bf16 %v3795, %v3794
  %s3797 = scalar_lea.vmem %s6, 32
  %v3798 = vld [vmem:[%s3797] sm:$0xf]
  %v3799 = vld [vmem:[%s3797 + $0x4] sm:$0xf]
  %v3800 = vld [vmem:[%s3797 + $0x8] sm:$0xf]
  %v3801 = vld [vmem:[%s3797 + $0xc] sm:$0xf]
  %v3802 = vld [vmem:[%s7 + $0x2] sm:$0x1]
  %v3803 = vlaneseq
  %v3804 = vshrl.u32 %v3803, 7
  %v3805 = vsub.s32 0, %v3804
  %v3806 = vrot.slane %v3802, %v3805
  %v3811 = vunpack.c.l.b16 %v3798
  %v3812 = vunpack.c.l.b16 %v3799
  %v3813 = vunpack.c.l.b16 %v3800
  %v3814 = vunpack.c.l.b16 %v3801
  %v3815 = vpack.c.b16 %v3812, %v3811
  %v3816 = vpack.c.b16 %v3814, %v3813
  %v3820 = vsel %vm74, %v3796, 0
  %3822 = vmatprep.subr.bf16.mxu0 0
  %3823 = vmatpush1.bf16.msra.mxu0 %v3815
  %3824 = vmatprep.subr.bf16.mxu0 0
  %3825 = vmatpush1.bf16.msra.mxu0 %v3816
  %3826 = vmatprep.subr.bf16.mxu0 0
  %3827 = vmatpush1.bf16.msra.mxu0 0
  %3828 = vmatprep.subr.bf16.mxu0 0
  %3829 = vmatpush1.bf16.msra.mxu0 0
  %3830 = vmatprep.subr.bf16.mxu0 0
  %3831 = vmatpush1.bf16.msra.mxu0 0
  %3832 = vmatprep.subr.bf16.mxu0 0
  %3833 = vmatpush1.bf16.msra.mxu0 0
  %3834 = vmatprep.subr.bf16.mxu0 0
  %3835 = vmatpush1.bf16.msra.mxu0 0
  %3836 = vmatprep.subr.bf16.mxu0 0
  %3837 = vmatpush1.bf16.msra.mxu0 0
  %3838 = vmatprep.subr.bf16.mxu0 0
  %3839 = vmatpush1.bf16.msra.mxu0 0
  %3840 = vmatprep.subr.bf16.mxu0 0
  %3841 = vmatpush1.bf16.msra.mxu0 0
  %3842 = vmatprep.subr.bf16.mxu0 0
  %3843 = vmatpush1.bf16.msra.mxu0 0
  %3844 = vmatprep.subr.bf16.mxu0 0
  %3845 = vmatpush1.bf16.msra.mxu0 0
  %3846 = vmatprep.subr.bf16.mxu0 0
  %3847 = vmatpush1.bf16.msra.mxu0 0
  %3848 = vmatprep.subr.bf16.mxu0 0
  %3849 = vmatpush1.bf16.msra.mxu0 0
  %3850 = vmatprep.subr.bf16.mxu0 0
  %3851 = vmatpush1.bf16.msra.mxu0 0
  %3852 = vmatprep.subr.bf16.mxu0 0
  %3853 = vmatpush1.bf16.msra.mxu0 0
  %3854 = vmatprep.mubr.bf16.mxu0 0
  %3855 = vmatmul.mubr.bf16.gmra.mrb[0].mxu0 %v3820
  %v3856 = vpop.f32.mrb[0].mxu0
  %v3857 = vadd.f32 %v3806, %v3856
  %v3858 = vpop.f32.mrb[0].mxu0
  %v3859 = vpop.f32.mrb[0].mxu0
  %v3860 = vadd.f32 %v3806, %v3859
  %v3861 = vpop.f32.mrb[0].mxu0
  %3862 = vdwg.mxu0
  %v3863 = vadd.f32 %v2781, %v3857
  %v3864 = vadd.f32 %v2782, %v3860
  %v3865 = vld [vmem:[%s8 + $0x2] sm:$0x1]
  %v3866 = vld [vmem:[%s9 + $0x2] sm:$0x1]
  %v3867 = vsel %vm74, %v3863, 0.0
  %3868 = vadd.xlane.f32.xlu0 %v3867
  %v3869 = vpop.xlane.xlu0 %3868
  %v3870 = vsel %vm74, %v3864, 0.0
  %3871 = vadd.xlane.f32.xlu0 %v3870
  %v3872 = vpop.xlane.xlu0 %3871
  %v3873 = vmul.f32 %v3869, %v81
  %v3874 = vmul.f32 %v3872, %v81
  %v3875 = vsub.f32 %v3863, %v3873
  %v3876 = vsub.f32 %v3864, %v3874
  %v3877 = vmul.f32 %v3875, %v3875
  %v3878 = vmul.f32 %v3876, %v3876
  %v3879 = vsel %vm74, %v3877, 0.0
  %3880 = vadd.xlane.f32.xlu0 %v3879
  %v3881 = vpop.xlane.xlu0 %3880
  %v3882 = vsel %vm74, %v3878, 0.0
  %3883 = vadd.xlane.f32.xlu0 %v3882
  %v3884 = vpop.xlane.xlu0 %3883
  %v3885 = vmul.f32 %v3881, %v81
  %v3886 = vmul.f32 %v3884, %v81
  %v3887 = vadd.f32 %v3885, 1e-12
  %v3888 = vadd.f32 %v3886, 1e-12
  %v3889 = vrsqrt.pop %v3887
  %v3890 = vrsqrt.pop %v3888
  %v3891 = vmul.f32 %v3875, %v3889
  %v3892 = vmul.f32 %v3876, %v3890
  %v3893 = vlaneseq
  %v3894 = vshrl.u32 %v3893, 7
  %v3895 = vsub.s32 0, %v3894
  %v3896 = vrot.slane %v3865, %v3895
  %v3897 = vmul.f32 %v3891, %v3896
  %v3898 = vmul.f32 %v3892, %v3896
  %v3899 = vlaneseq
  %v3900 = vshrl.u32 %v3899, 7
  %v3901 = vsub.s32 0, %v3900
  %v3902 = vrot.slane %v3866, %v3901
  %v3903 = vadd.f32 %v3897, %v3902
  %v3904 = vadd.f32 %v3898, %v3902
  %v3905 = vpack.c.bf16 %v3904, %v3903
  %s3906 = scalar_lea.vmem %s10, 32
  %v3907 = vld [vmem:[%s3906] sm:$0xf]
  %v3908 = vld [vmem:[%s3906 + $0x4] sm:$0xf]
  %v3909 = vld [vmem:[%s3906 + $0x8] sm:$0xf]
  %v3910 = vld [vmem:[%s3906 + $0xc] sm:$0xf]
  %v3911 = vld [vmem:[%s11 + $0x2] sm:$0x1]
  %v3912 = vlaneseq
  %v3913 = vshrl.u32 %v3912, 7
  %v3914 = vsub.s32 0, %v3913
  %v3915 = vrot.slane %v3911, %v3914
  %v3920 = vunpack.c.l.b16 %v3907
  %v3921 = vunpack.c.l.b16 %v3908
  %v3922 = vunpack.c.l.b16 %v3909
  %v3923 = vunpack.c.l.b16 %v3910
  %v3924 = vpack.c.b16 %v3921, %v3920
  %v3925 = vpack.c.b16 %v3923, %v3922
  %v3929 = vsel %vm74, %v3905, 0
  %3931 = vmatprep.subr.bf16.mxu0 0
  %3932 = vmatpush1.bf16.msra.mxu0 %v3924
  %3933 = vmatprep.subr.bf16.mxu0 0
  %3934 = vmatpush1.bf16.msra.mxu0 %v3925
  %3935 = vmatprep.subr.bf16.mxu0 0
  %3936 = vmatpush1.bf16.msra.mxu0 0
  %3937 = vmatprep.subr.bf16.mxu0 0
  %3938 = vmatpush1.bf16.msra.mxu0 0
  %3939 = vmatprep.subr.bf16.mxu0 0
  %3940 = vmatpush1.bf16.msra.mxu0 0
  %3941 = vmatprep.subr.bf16.mxu0 0
  %3942 = vmatpush1.bf16.msra.mxu0 0
  %3943 = vmatprep.subr.bf16.mxu0 0
  %3944 = vmatpush1.bf16.msra.mxu0 0
  %3945 = vmatprep.subr.bf16.mxu0 0
  %3946 = vmatpush1.bf16.msra.mxu0 0
  %3947 = vmatprep.subr.bf16.mxu0 0
  %3948 = vmatpush1.bf16.msra.mxu0 0
  %3949 = vmatprep.subr.bf16.mxu0 0
  %3950 = vmatpush1.bf16.msra.mxu0 0
  %3951 = vmatprep.subr.bf16.mxu0 0
  %3952 = vmatpush1.bf16.msra.mxu0 0
  %3953 = vmatprep.subr.bf16.mxu0 0
  %3954 = vmatpush1.bf16.msra.mxu0 0
  %3955 = vmatprep.subr.bf16.mxu0 0
  %3956 = vmatpush1.bf16.msra.mxu0 0
  %3957 = vmatprep.subr.bf16.mxu0 0
  %3958 = vmatpush1.bf16.msra.mxu0 0
  %3959 = vmatprep.subr.bf16.mxu0 0
  %3960 = vmatpush1.bf16.msra.mxu0 0
  %3961 = vmatprep.subr.bf16.mxu0 0
  %3962 = vmatpush1.bf16.msra.mxu0 0
  %3963 = vmatprep.mubr.bf16.mxu0 0
  %3964 = vmatmul.mubr.bf16.gmra.mrb[0].mxu0 %v3929
  %v3965 = vpop.f32.mrb[0].mxu0
  %v3966 = vadd.f32 %v3915, %v3965
  %v3967 = vpop.f32.mrb[0].mxu0
  %v3968 = vpop.f32.mrb[0].mxu0
  %v3969 = vadd.f32 %v3915, %v3968
  %v3970 = vpop.f32.mrb[0].mxu0
  %3971 = vdwg.mxu0
  %v3972 = vmul.f32 %v3966, 0.5
  %v3973 = vmul.f32 %v3969, 0.5
  %v3974 = vmul.f32 %v3966, 0.044715
  %v3975 = vmul.f32 %v3969, 0.044715
  %v3976 = vmul.f32 %v3974, %v3966
  %v3977 = vmul.f32 %v3975, %v3969
  %v3978 = vmul.f32 %v3976, %v3966
  %v3979 = vmul.f32 %v3977, %v3969
  %v3980 = vadd.f32 %v3966, %v3978
  %v3981 = vadd.f32 %v3969, %v3979
  %v3982 = vmul.f32 %v3980, 0.7978846
  %v3983 = vmul.f32 %v3981, 0.7978846
  %v3984 = vtanh.pop %v3982
  %v3985 = vtanh.pop %v3983
  %v3986 = vadd.f32 %v3984, 1.0
  %v3987 = vadd.f32 %v3985, 1.0
  %v3988 = vmul.f32 %v3972, %v3986
  %v3989 = vmul.f32 %v3973, %v3987
  %v3990 = vpack.c.bf16 %v3989, %v3988
  %s3991 = scalar_lea.vmem %s12, 64
  %v3992 = vld [vmem:[%s3991] sm:$0xf]
  %v3993 = vld [vmem:[%s3991 + $0x4] sm:$0xf]
  %v3994 = vld [vmem:[%s3991 + $0x8] sm:$0xf]
  %v3995 = vld [vmem:[%s3991 + $0xc] sm:$0xf]
  %v3996 = vld [vmem:[%s3991 + $0x10] sm:$0xf]
  %v3997 = vld [vmem:[%s3991 + $0x14] sm:$0xf]
  %v3998 = vld [vmem:[%s3991 + $0x18] sm:$0xf]
  %v3999 = vld [vmem:[%s3991 + $0x1c] sm:$0xf]
  %v4000 = vld [vmem:[%s13 + $0x2] sm:$0x1]
  %v4001 = vlaneseq
  %v4002 = vshrl.u32 %v4001, 7
  %v4003 = vsub.s32 0, %v4002
  %v4004 = vrot.slane %v4000, %v4003
  %v4013 = vunpack.c.l.b16 %v3992
  %v4014 = vunpack.c.l.b16 %v3993
  %v4015 = vunpack.c.l.b16 %v3994
  %v4016 = vunpack.c.l.b16 %v3995
  %v4017 = vunpack.c.l.b16 %v3996
  %v4018 = vunpack.c.l.b16 %v3997
  %v4019 = vunpack.c.l.b16 %v3998
  %v4020 = vunpack.c.l.b16 %v3999
  %v4021 = vpack.c.b16 %v4014, %v4013
  %v4022 = vpack.c.b16 %v4016, %v4015
  %v4023 = vpack.c.b16 %v4018, %v4017
  %v4024 = vpack.c.b16 %v4020, %v4019
  %v4030 = vsel %vm1364, %v3990, 0
  %4032 = vmatprep.subr.bf16.mxu0 0
  %4033 = vmatpush1.bf16.msra.mxu0 %v4021
  %4034 = vmatprep.subr.bf16.mxu0 0
  %4035 = vmatpush1.bf16.msra.mxu0 %v4022
  %4036 = vmatprep.subr.bf16.mxu0 0
  %4037 = vmatpush1.bf16.msra.mxu0 %v4023
  %4038 = vmatprep.subr.bf16.mxu0 0
  %4039 = vmatpush1.bf16.msra.mxu0 %v4024
  %4040 = vmatprep.subr.bf16.mxu0 0
  %4041 = vmatpush1.bf16.msra.mxu0 0
  %4042 = vmatprep.subr.bf16.mxu0 0
  %4043 = vmatpush1.bf16.msra.mxu0 0
  %4044 = vmatprep.subr.bf16.mxu0 0
  %4045 = vmatpush1.bf16.msra.mxu0 0
  %4046 = vmatprep.subr.bf16.mxu0 0
  %4047 = vmatpush1.bf16.msra.mxu0 0
  %4048 = vmatprep.subr.bf16.mxu0 0
  %4049 = vmatpush1.bf16.msra.mxu0 0
  %4050 = vmatprep.subr.bf16.mxu0 0
  %4051 = vmatpush1.bf16.msra.mxu0 0
  %4052 = vmatprep.subr.bf16.mxu0 0
  %4053 = vmatpush1.bf16.msra.mxu0 0
  %4054 = vmatprep.subr.bf16.mxu0 0
  %4055 = vmatpush1.bf16.msra.mxu0 0
  %4056 = vmatprep.subr.bf16.mxu0 0
  %4057 = vmatpush1.bf16.msra.mxu0 0
  %4058 = vmatprep.subr.bf16.mxu0 0
  %4059 = vmatpush1.bf16.msra.mxu0 0
  %4060 = vmatprep.subr.bf16.mxu0 0
  %4061 = vmatpush1.bf16.msra.mxu0 0
  %4062 = vmatprep.subr.bf16.mxu0 0
  %4063 = vmatpush1.bf16.msra.mxu0 0
  %4064 = vmatprep.mubr.bf16.mxu0 0
  %4065 = vmatmul.mubr.bf16.gmra.mrb[0].mxu0 %v4030
  %v4066 = vpop.f32.mrb[0].mxu0
  %v4067 = vadd.f32 %v4004, %v4066
  %v4068 = vpop.f32.mrb[0].mxu0
  %v4069 = vpop.f32.mrb[0].mxu0
  %v4070 = vadd.f32 %v4004, %v4069
  %v4071 = vpop.f32.mrb[0].mxu0
  %4072 = vdwg.mxu0
  %v4073 = vadd.f32 %v3903, %v4067
  %v4074 = vadd.f32 %v3904, %v4070
  %v4075 = vld [vmem:[%s14 + $0x2] sm:$0x1]
  %v4076 = vld [vmem:[%s15 + $0x2] sm:$0x1]
  %v4077 = vsel %vm74, %v4073, 0.0
  %4078 = vadd.xlane.f32.xlu0 %v4077
  %v4079 = vpop.xlane.xlu0 %4078
  %v4080 = vsel %vm74, %v4074, 0.0
  %4081 = vadd.xlane.f32.xlu0 %v4080
  %v4082 = vpop.xlane.xlu0 %4081
  %v4083 = vmul.f32 %v4079, %v81
  %v4084 = vmul.f32 %v4082, %v81
  %v4085 = vsub.f32 %v4073, %v4083
  %v4086 = vsub.f32 %v4074, %v4084
  %v4087 = vmul.f32 %v4085, %v4085
  %v4088 = vmul.f32 %v4086, %v4086
  %v4089 = vsel %vm74, %v4087, 0.0
  %4090 = vadd.xlane.f32.xlu0 %v4089
  %v4091 = vpop.xlane.xlu0 %4090
  %v4092 = vsel %vm74, %v4088, 0.0
  %4093 = vadd.xlane.f32.xlu0 %v4092
  %v4094 = vpop.xlane.xlu0 %4093
  %v4095 = vmul.f32 %v4091, %v81
  %v4096 = vmul.f32 %v4094, %v81
  %v4097 = vadd.f32 %v4095, 1e-12
  %v4098 = vadd.f32 %v4096, 1e-12
  %v4099 = vrsqrt.pop %v4097
  %v4100 = vrsqrt.pop %v4098
  %v4101 = vmul.f32 %v4085, %v4099
  %v4102 = vmul.f32 %v4086, %v4100
  %v4103 = vlaneseq
  %v4104 = vshrl.u32 %v4103, 7
  %v4105 = vsub.s32 0, %v4104
  %v4106 = vrot.slane %v4075, %v4105
  %v4107 = vmul.f32 %v4101, %v4106
  %v4108 = vmul.f32 %v4102, %v4106
  %v4109 = vlaneseq
  %v4110 = vshrl.u32 %v4109, 7
  %v4111 = vsub.s32 0, %v4110
  %v4112 = vrot.slane %v4076, %v4111
  %v4113 = vadd.f32 %v4107, %v4112
  %v4114 = vadd.f32 %v4108, %v4112
  %v4115 = vld [vmem:[%s16] sm:$0x1]
  %v4117 = vlaneseq
  %v4118 = vshrl.u32 %v4117, 7
  %v4119 = vsub.s32 0, %v4118
  %v4120 = vrot.slane %v4115, %v4119
  %v4122 = vmul.f32 %v4113, %v4120
  %v4123 = vmul.f32 %v4114, %v4120
  %v4124 = vsel %vm74, %v4122, 0.0
  %4125 = vadd.xlane.f32.xlu0 %v4124
  %v4126 = vpop.xlane.xlu0 %4125
  %v4127 = vsel %vm74, %v4123, 0.0
  %4128 = vadd.xlane.f32.xlu0 %v4127
  %v4129 = vpop.xlane.xlu0 %4128
  %v4130 = vld [vmem:[#allocation2] sm:$0x1]
  %v4132 = vlaneseq
  %v4133 = vshrl.u32 %v4132, 7
  %v4134 = vsub.s32 0, %v4133
  %v4135 = vrot.slane %v4130, %v4134
  %v4137 = vadd.f32 %v4126, %v4135
  %v4138 = vadd.f32 %v4129, %v4135
  %v4139 = vxor.u32 %v4137, 2147483648
  %v4140 = vxor.u32 %v4138, 2147483648
  %v4141 = vmul.f32 %v4139, 1.442695
  %v4142 = vpow.pop %v4141
  %v4143 = vmul.f32 %v4140, 1.442695
  %v4144 = vpow.pop %v4143
  %v4145 = vadd.f32 %v4142, 1.0
  %v4146 = vadd.f32 %v4144, 1.0
  %v4147 = vrcp.pop %v4145
  %v4148 = vmul.f32 1.0, %v4147
  %v4149 = vrcp.pop %v4146
  %v4150 = vmul.f32 1.0, %v4149
  %4152 = vset.pattern.permute.xlu0 0
  %4153 = vperm.xlu0 %4152, %v4148
  %v4154 = vpop.permute.xlu0 %4153
  %4157 = vset.pattern.permute.xlu0 0
  %4158 = vperm.xlu0 %4157, %v4150
  %v4159 = vpop.permute.xlu0 %4158
  %4161 = vst [vmem:[%s18] sm:$0xff] %v4154
  %4162 = vst [vmem:[%s18 + $0x8] sm:$0xff] %v4159
  // Predicated region
  $region74: #{bert_sentiment_forward.1} parent=0 // pred_check
    _
  $region75: #{bert_sentiment_forward.1} parent=0 // pred_check_branch
    %4164 = sbr.rel (0) target = $region77
  $region76: #{bert_sentiment_forward.1} parent=0 // pred_region
    _
  $region77: #{bert_sentiment_forward.1} parent=0 // pred_fallthru
    _
  // Predicated region
  $region78: #{bert_sentiment_forward.1} parent=0 // pred_check
    _
  $region79: #{bert_sentiment_forward.1} parent=0 // pred_check_branch
    %4166 = sbr.rel (0) target = $region81
  $region80: #{bert_sentiment_forward.1} parent=0 // pred_region
    _
  $region81: #{bert_sentiment_forward.1} parent=0 // pred_fallthru
    _

</llo_original>
